<compile_context>
chip_gen: v7x
topology: tpu7x:2x2x1
jax: 0.10.0
libtpu: 0.0.40
codegen_flags: <defaults>
</compile_context>

<pallas_src>
from functools import partial

import jax
import jax.numpy as jnp
from jax.experimental import pallas as pl
from jax.experimental.pallas import tpu as pltpu

EPS = 1e-6  # LayerNormalization eps

PREP_ORDER = ["wqkv_s", "bqkv_s", "wo_s", "bo_s",
              "wq_c", "bq_c", "wkv_c", "bkv_c", "wo_c", "bo_c",
              "w1", "b1", "w2", "b2", "ln_a", "ln_b", "fin_a", "fin_b"]
_CONST_KEYS = ("fin_a", "fin_b")   # not indexed by the layer axis


# ---------------------------------------------------------------------------
# in-kernel math helpers
# ---------------------------------------------------------------------------
def _ln(x, alpha, bias):
    # matches torch LayerNormalization: unbiased std (ddof=1), (std + eps) denom.
    # exact reciprocal here (applied 3L+1 times to the residual stream).
    d = x.shape[-1]
    mean = jnp.mean(x, axis=-1, keepdims=True)
    var = jnp.sum((x - mean) ** 2, axis=-1, keepdims=True) * (1.0 / (d - 1))
    std = jnp.sqrt(var)
    return alpha * (x - mean) / (std + EPS) + bias


def _attention(q, k, v, bias_ref, *, n_heads, batch, s_q, s_kv):
    """Head-batched attention on already-projected q/k/v.

    q: (B*Sq, D) f32 (scale already folded in), k/v: (B*Skv, D) f32.
    bias_ref: (B, Sq, Skv) additive mask bias (0 / -1e9), f32.
    Returns the concatenated per-head context, (B*Sq, D) f32.
    """
    d = q.shape[-1]
    dk = d // n_heads
    ctx_rows = []
    for b in range(batch):                       # static, small B
        qb = q[b * s_q:(b + 1) * s_q, :].astype(jnp.bfloat16)
        kb = k[b * s_kv:(b + 1) * s_kv, :].astype(jnp.bfloat16)
        vb = v[b * s_kv:(b + 1) * s_kv, :].astype(jnp.bfloat16)
        # head-major (H, S, dk) via static lane slices; all heads batched in one
        # leading-batch-dim einsum per matmul (no per-head matmul loop).
        qh = jnp.stack([qb[:, h * dk:(h + 1) * dk] for h in range(n_heads)], axis=0)
        kh = jnp.stack([kb[:, h * dk:(h + 1) * dk] for h in range(n_heads)], axis=0)
        vh = jnp.stack([vb[:, h * dk:(h + 1) * dk] for h in range(n_heads)], axis=0)

        sc = jnp.einsum('hqd,hkd->hqk', qh, kh,
                        preferred_element_type=jnp.float32)
        sc = sc + bias_ref[b][None, :, :]        # precomputed additive mask bias
        m = jnp.max(sc, axis=-1, keepdims=True)
        e = jnp.exp(sc - m)
        p = e * pl.reciprocal(jnp.sum(e, axis=-1, keepdims=True), approx=True)

        o = jnp.einsum('hqk,hkd->hqd', p.astype(jnp.bfloat16), vh,
                       preferred_element_type=jnp.float32)       # (H, Sq, dk)
        ctx_rows.append(jnp.concatenate([o[h] for h in range(n_heads)], axis=-1))
    return ctx_rows[0] if batch == 1 else jnp.concatenate(ctx_rows, axis=0)


# ---------------------------------------------------------------------------
# Pallas kernel: grid = (n_layers,); residual carried in VMEM scratch
# ---------------------------------------------------------------------------
def decoder_kernel(x_ref, enc_ref, tbias_ref, sbias_ref,
                   wqkv_s_ref, bqkv_s_ref, wo_s_ref, bo_s_ref,
                   wq_c_ref, bq_c_ref, wkv_c_ref, bkv_c_ref,
                   wo_c_ref, bo_c_ref,
                   w1_ref, b1_ref, w2_ref, b2_ref,
                   ln_a_ref, ln_b_ref, fin_a_ref, fin_b_ref,
                   out_ref, x_acc, *, n_heads, batch):
    l = pl.program_id(0)
    last = pl.num_programs(0) - 1

    rows, d_model = x_acc.shape
    s_len = rows // batch
    dk = d_model // n_heads
    scale = 1.0 / float(dk) ** 0.5

    # load the embedded target once; residual stream stays f32 in VMEM
    @pl.when(l == 0)
    def _():
        x_acc[...] = x_ref[...].astype(jnp.float32)

    x = x_acc[...]                               # (B*S, D) f32
    enc_b = enc_ref[...]                         # (B*S, D) bf16 (pre-cast once)

    lna = ln_a_ref[0]                            # (3, D)
    lnb = ln_b_ref[0]

    # --- self attention residual (fused QKV projection) ---------------------
    xn = _ln(x, lna[0:1], lnb[0:1])
    qkv = jnp.dot(xn.astype(jnp.bfloat16), wqkv_s_ref[0],
                  preferred_element_type=jnp.float32) + bqkv_s_ref[0]
    q = qkv[:, :d_model] * scale                 # fold 1/sqrt(dk) into q
    k = qkv[:, d_model:2 * d_model]
    v = qkv[:, 2 * d_model:]
    ctx = _attention(q, k, v, tbias_ref,
                     n_heads=n_heads, batch=batch, s_q=s_len, s_kv=s_len)
    x = x + jnp.dot(ctx.astype(jnp.bfloat16), wo_s_ref[0],
                    preferred_element_type=jnp.float32) + bo_s_ref[0]

    # --- cross attention residual (fused KV projection of enc) --------------
    xn = _ln(x, lna[1:2], lnb[1:2])
    q = (jnp.dot(xn.astype(jnp.bfloat16), wq_c_ref[0],
                 preferred_element_type=jnp.float32) + bq_c_ref[0]) * scale
    kv = jnp.dot(enc_b, wkv_c_ref[0],
                 preferred_element_type=jnp.float32) + bkv_c_ref[0]
    k = kv[:, :d_model]
    v = kv[:, d_model:]
    ctx = _attention(q, k, v, sbias_ref,
                     n_heads=n_heads, batch=batch, s_q=s_len, s_kv=s_len)
    x = x + jnp.dot(ctx.astype(jnp.bfloat16), wo_c_ref[0],
                    preferred_element_type=jnp.float32) + bo_c_ref[0]

    # --- feed-forward residual (h kept bf16 after ReLU) ----------------------
    xn = _ln(x, lna[2:3], lnb[2:3])
    h = jnp.maximum(
        jnp.dot(xn.astype(jnp.bfloat16), w1_ref[0],
                preferred_element_type=jnp.float32) + b1_ref[0],
        0.0).astype(jnp.bfloat16)
    x = x + (jnp.dot(h, w2_ref[0],
                     preferred_element_type=jnp.float32) + b2_ref[0])

    x_acc[...] = x

    # final LayerNorm + single lane-dense output store on the last layer step
    @pl.when(l == last)
    def _():
        out_ref[...] = _ln(x, fin_a_ref[...], fin_b_ref[...]).astype(out_ref.dtype)


# ---------------------------------------------------------------------------
# wrapper
# ---------------------------------------------------------------------------
def decoder_forward(x, enc, src_mask, tgt_mask, prepared, *, n_heads,
                    vmem_limit_bytes=None):
    """x/enc: (B, S, D) f32; masks: (B, S, S); prepared = prepare_params(params)."""
    B, S, D = x.shape
    L = prepared["wqkv_s"].shape[0]
    rows = B * S

    # fold batch into the row dimension (one layer step processes all batches)
    x2 = x.reshape(rows, D).astype(jnp.float32)
    enc2 = enc.reshape(rows, D).astype(jnp.bfloat16)     # cast once, not per layer

    # precompute additive mask biases once (replaces per-layer compare+select)
    neg = jnp.float32(-1e9)
    tbias = jnp.where(tgt_mask == 0, neg, jnp.float32(0.0)).astype(jnp.float32)
    sbias = jnp.where(src_mask == 0, neg, jnp.float32(0.0)).astype(jnp.float32)

    kernel = partial(decoder_kernel, n_heads=n_heads, batch=B)

    def layer_spec(arr):         # streamed per layer step (index by l)
        nd = arr.ndim
        return pl.BlockSpec((1,) + arr.shape[1:],
                            lambda l, _nd=nd: (l,) + (0,) * (_nd - 1))

    def const_spec(arr):         # whole array, constant index -> fetched once
        nd = arr.ndim
        return pl.BlockSpec(arr.shape, lambda l, _nd=nd: (0,) * _nd)

    in_specs = [const_spec(x2), const_spec(enc2), const_spec(tbias), const_spec(sbias)]
    in_specs += [const_spec(prepared[k]) if k in _CONST_KEYS else layer_spec(prepared[k])
                 for k in PREP_ORDER]

    out = pl.pallas_call(
        kernel,
        out_shape=jax.ShapeDtypeStruct((rows, D), x.dtype),
        grid=(L,),
        in_specs=in_specs,
        out_specs=pl.BlockSpec((rows, D), lambda l: (0, 0)),
        scratch_shapes=[pltpu.VMEM((rows, D), jnp.float32)],   # residual stream
        compiler_params=pltpu.CompilerParams(
            dimension_semantics=("arbitrary",),
            # per-chip guidance: raise toward ~96-110 MiB on v5e/v6e, keep
            # <= ~56 MiB on v7x (64 MiB physical VMEM); demo shapes are tiny,
            # so the compiler default is used unless overridden.
            vmem_limit_bytes=vmem_limit_bytes),
    )(x2, enc2, tbias, sbias, *[prepared[k] for k in PREP_ORDER])
    return out.reshape(B, S, D)


# ---------------------------------------------------------------------------
# parameters: torch-module-style layout + one-time fuse/cast for the kernel
# ---------------------------------------------------------------------------
def make_params(key, n_layers, d_model, d_ff):
    ks = jax.random.split(key, 16)
    s = 0.05
    return {
        # attention params: axis 1 = {0: self-attn, 1: cross-attn}
        "wq": s * jax.random.normal(ks[0], (n_layers, 2, d_model, d_model), jnp.float32),
        "bq": s * jax.random.normal(ks[1], (n_layers, 2, d_model), jnp.float32),
        "wk": s * jax.random.normal(ks[2], (n_layers, 2, d_model, d_model), jnp.float32),
        "bk": s * jax.random.normal(ks[3], (n_layers, 2, d_model), jnp.float32),
        "wv": s * jax.random.normal(ks[4], (n_layers, 2, d_model, d_model), jnp.float32),
        "bv": s * jax.random.normal(ks[5], (n_layers, 2, d_model), jnp.float32),
        "wo": s * jax.random.normal(ks[6], (n_layers, 2, d_model, d_model), jnp.float32),
        "bo": s * jax.random.normal(ks[7], (n_layers, 2, d_model), jnp.float32),
        # feed-forward
        "w1": s * jax.random.normal(ks[8], (n_layers, d_model, d_ff), jnp.float32),
        "b1": s * jax.random.normal(ks[9], (n_layers, 1, d_ff), jnp.float32),
        "w2": s * jax.random.normal(ks[10], (n_layers, d_ff, d_model), jnp.float32),
        "b2": s * jax.random.normal(ks[11], (n_layers, 1, d_model), jnp.float32),
        # residual-connection layer norms: axis 1 = {self, cross, ffn}
        "ln_a": 1.0 + 0.1 * jax.random.normal(ks[12], (n_layers, 3, d_model), jnp.float32),
        "ln_b": 0.1 * jax.random.normal(ks[13], (n_layers, 3, d_model), jnp.float32),
        # final decoder norm
        "fin_a": 1.0 + 0.1 * jax.random.normal(ks[14], (1, d_model), jnp.float32),
        "fin_b": 0.1 * jax.random.normal(ks[15], (1, d_model), jnp.float32),
    }


def prepare_params(p):
    """One-time fuse (QKV / KV) and bf16 cast of the weight matrices."""
    bf = jnp.bfloat16
    prepared = {
        # self-attention: fused QKV
        "wqkv_s": jnp.concatenate([p["wq"][:, 0], p["wk"][:, 0], p["wv"][:, 0]],
                                  axis=-1).astype(bf),                   # (L, D, 3D)
        "bqkv_s": jnp.concatenate([p["bq"][:, 0], p["bk"][:, 0], p["bv"][:, 0]],
                                  axis=-1)[:, None, :].astype(jnp.float32),
        "wo_s": p["wo"][:, 0].astype(bf),
        "bo_s": p["bo"][:, 0][:, None, :].astype(jnp.float32),
        # cross-attention: Q separate, fused KV (applied to encoder output)
        "wq_c": p["wq"][:, 1].astype(bf),
        "bq_c": p["bq"][:, 1][:, None, :].astype(jnp.float32),
        "wkv_c": jnp.concatenate([p["wk"][:, 1], p["wv"][:, 1]], axis=-1).astype(bf),
        "bkv_c": jnp.concatenate([p["bk"][:, 1], p["bv"][:, 1]],
                                 axis=-1)[:, None, :].astype(jnp.float32),
        "wo_c": p["wo"][:, 1].astype(bf),
        "bo_c": p["bo"][:, 1][:, None, :].astype(jnp.float32),
        # feed-forward
        "w1": p["w1"].astype(bf), "b1": p["b1"].astype(jnp.float32),
        "w2": p["w2"].astype(bf), "b2": p["b2"].astype(jnp.float32),
        # layer norms (f32)
        "ln_a": p["ln_a"].astype(jnp.float32), "ln_b": p["ln_b"].astype(jnp.float32),
        "fin_a": p["fin_a"].astype(jnp.float32), "fin_b": p["fin_b"].astype(jnp.float32),
    }
    return jax.tree_util.tree_map(jnp.asarray, prepared)


# ---------------------------------------------------------------------------
# pure-f32 reference (torch semantics); dropout is identity at inference
# ---------------------------------------------------------------------------
def _layer_norm_ref(x, alpha, bias):
    d = x.shape[-1]
    mean = jnp.mean(x, axis=-1, keepdims=True)
    var = jnp.sum((x - mean) ** 2, axis=-1, keepdims=True) / (d - 1)
    std = jnp.sqrt(var)
    return alpha * (x - mean) / (std + EPS) + bias


def _mha_ref(q_in, kv_in, mask, wq, bq, wk, bk, wv, bv, wo, bo, n_heads):
    sq, d = q_in.shape
    skv = kv_in.shape[0]
    dk = d // n_heads
    q = q_in @ wq + bq
    k = kv_in @ wk + bk
    v = kv_in @ wv + bv
    qh = q.reshape(sq, n_heads, dk)
    kh = k.reshape(skv, n_heads, dk)
    vh = v.reshape(skv, n_heads, dk)
    sc = jnp.einsum('qhd,khd->hqk', qh, kh) / jnp.sqrt(jnp.float32(dk))
    sc = jnp.where(mask[None, :, :] == 0, -1e9, sc)
    p = jax.nn.softmax(sc, axis=-1)
    o = jnp.einsum('hqk,khd->qhd', p, vh).reshape(sq, d)
    return o @ wo + bo


def reference(x, enc, src_mask, tgt_mask, p, n_layers, n_heads):
    outs = []
    for b in range(x.shape[0]):
        xb, eb, sm, tm = x[b], enc[b], src_mask[b], tgt_mask[b]
        for l in range(n_layers):
            xn = _layer_norm_ref(xb, p["ln_a"][l, 0], p["ln_b"][l, 0])
            xb = xb + _mha_ref(xn, xn, tm,
                               p["wq"][l, 0], p["bq"][l, 0], p["wk"][l, 0], p["bk"][l, 0],
                               p["wv"][l, 0], p["bv"][l, 0], p["wo"][l, 0], p["bo"][l, 0],
                               n_heads)
            xn = _layer_norm_ref(xb, p["ln_a"][l, 1], p["ln_b"][l, 1])
            xb = xb + _mha_ref(xn, eb, sm,
                               p["wq"][l, 1], p["bq"][l, 1], p["wk"][l, 1], p["bk"][l, 1],
                               p["wv"][l, 1], p["bv"][l, 1], p["wo"][l, 1], p["bo"][l, 1],
                               n_heads)
            xn = _layer_norm_ref(xb, p["ln_a"][l, 2], p["ln_b"][l, 2])
            h = jnp.maximum(xn @ p["w1"][l] + p["b1"][l, 0], 0.0)
            xb = xb + (h @ p["w2"][l] + p["b2"][l, 0])
        outs.append(_layer_norm_ref(xb, p["fin_a"][0], p["fin_b"][0]))
    return jnp.stack(outs, axis=0)


if __name__ == "__main__":
    # small but lane-dense demo shapes: d_model multiple of 128, seq multiple of 8
    B, S, D, DFF, H, L = 2, 8, 128, 256, 4, 2

    key = jax.random.PRNGKey(0)
    kx, ke, kp = jax.random.split(key, 3)
    x = jax.random.normal(kx, (B, S, D), jnp.float32)
    enc = jax.random.normal(ke, (B, S, D), jnp.float32)
    params = make_params(kp, L, D, DFF)
    prepared = prepare_params(params)          # one-time fuse + bf16 cast

    # tgt_mask: causal; src_mask: full for batch 0, last 2 source keys padded for batch 1
    causal = jnp.tril(jnp.ones((S, S), jnp.float32))
    tgt_mask = jnp.broadcast_to(causal, (B, S, S))
    src_full = jnp.ones((S, S), jnp.float32)
    src_pad = jnp.ones((S, S), jnp.float32).at[:, S - 2:].set(0.0)
    src_mask = jnp.stack([src_full, src_pad], axis=0)

    out = decoder_forward(x, enc, src_mask, tgt_mask, prepared, n_heads=H)
    out = jax.block_until_ready(out)

    ref = reference(x, enc, src_mask, tgt_mask, params, L, H)
    assert out.shape == (B, S, D)
    assert bool(jnp.all(jnp.isfinite(out)))
    # kernel runs bf16 matmuls + an approx softmax reciprocal vs. the f32 reference
    err = float(jnp.max(jnp.abs(out - ref)))
    assert bool(jnp.allclose(out, ref, atol=5e-2, rtol=5e-2)), f"max abs diff = {err}"

    print("KERNEL_OK")
</pallas_src>

<mosaic_0001>
module attributes {stable_mosaic.version = 11 : i64} {
  func.func @decoder_kernel(%arg0: i32, %arg1: memref<16x128xf32, #tpu.memory_space<vmem>>, %arg2: memref<16x128xbf16, #tpu.memory_space<vmem>>, %arg3: memref<2x8x8xf32, #tpu.memory_space<vmem>>, %arg4: memref<2x8x8xf32, #tpu.memory_space<vmem>>, %arg5: memref<1x128x384xbf16, #tpu.memory_space<vmem>>, %arg6: memref<1x1x384xf32, #tpu.memory_space<vmem>>, %arg7: memref<1x128x128xbf16, #tpu.memory_space<vmem>>, %arg8: memref<1x1x128xf32, #tpu.memory_space<vmem>>, %arg9: memref<1x128x128xbf16, #tpu.memory_space<vmem>>, %arg10: memref<1x1x128xf32, #tpu.memory_space<vmem>>, %arg11: memref<1x128x256xbf16, #tpu.memory_space<vmem>>, %arg12: memref<1x1x256xf32, #tpu.memory_space<vmem>>, %arg13: memref<1x128x128xbf16, #tpu.memory_space<vmem>>, %arg14: memref<1x1x128xf32, #tpu.memory_space<vmem>>, %arg15: memref<1x128x256xbf16, #tpu.memory_space<vmem>>, %arg16: memref<1x1x256xf32, #tpu.memory_space<vmem>>, %arg17: memref<1x256x128xbf16, #tpu.memory_space<vmem>>, %arg18: memref<1x1x128xf32, #tpu.memory_space<vmem>>, %arg19: memref<1x3x128xf32, #tpu.memory_space<vmem>>, %arg20: memref<1x3x128xf32, #tpu.memory_space<vmem>>, %arg21: memref<1x128xf32, #tpu.memory_space<vmem>>, %arg22: memref<1x128xf32, #tpu.memory_space<vmem>>, %arg23: memref<16x128xf32, #tpu.memory_space<vmem>>, %arg24: memref<16x128xf32, #tpu.memory_space<vmem>>) attributes {dimension_semantics = [#tpu.dimension_semantics<arbitrary>], iteration_bounds = array<i64: 2>, scalar_prefetch = 0 : i64, scratch_operands = 1 : i64, tpu.core_type = #tpu.core_type<tc>, window_params = [{pipeline_mode = #tpu.pipeline_mode<synchronous>, transform_indices = @transform_0, window_bounds = array<i64: 16, 128>}, {pipeline_mode = #tpu.pipeline_mode<synchronous>, transform_indices = @transform_1, window_bounds = array<i64: 16, 128>}, {pipeline_mode = #tpu.pipeline_mode<synchronous>, transform_indices = @transform_2, window_bounds = array<i64: 2, 8, 8>}, {pipeline_mode = #tpu.pipeline_mode<synchronous>, transform_indices = @transform_3, window_bounds = array<i64: 2, 8, 8>}, {transform_indices = @transform_4, window_bounds = array<i64: 1, 128, 384>}, {transform_indices = @transform_5, window_bounds = array<i64: 1, 1, 384>}, {transform_indices = @transform_6, window_bounds = array<i64: 1, 128, 128>}, {transform_indices = @transform_7, window_bounds = array<i64: 1, 1, 128>}, {transform_indices = @transform_8, window_bounds = array<i64: 1, 128, 128>}, {transform_indices = @transform_9, window_bounds = array<i64: 1, 1, 128>}, {transform_indices = @transform_10, window_bounds = array<i64: 1, 128, 256>}, {transform_indices = @transform_11, window_bounds = array<i64: 1, 1, 256>}, {transform_indices = @transform_12, window_bounds = array<i64: 1, 128, 128>}, {transform_indices = @transform_13, window_bounds = array<i64: 1, 1, 128>}, {transform_indices = @transform_14, window_bounds = array<i64: 1, 128, 256>}, {transform_indices = @transform_15, window_bounds = array<i64: 1, 1, 256>}, {transform_indices = @transform_16, window_bounds = array<i64: 1, 256, 128>}, {transform_indices = @transform_17, window_bounds = array<i64: 1, 1, 128>}, {transform_indices = @transform_18, window_bounds = array<i64: 1, 3, 128>}, {transform_indices = @transform_19, window_bounds = array<i64: 1, 3, 128>}, {pipeline_mode = #tpu.pipeline_mode<synchronous>, transform_indices = @transform_20, window_bounds = array<i64: 1, 128>}, {pipeline_mode = #tpu.pipeline_mode<synchronous>, transform_indices = @transform_21, window_bounds = array<i64: 1, 128>}, {pipeline_mode = #tpu.pipeline_mode<synchronous>, transform_indices = @transform_22, window_bounds = array<i64: 16, 128>}]} {
    %c0_i32 = arith.constant 0 : i32
    %0 = arith.cmpi eq, %arg0, %c0_i32 : i32
    %1 = arith.extui %0 : i1 to i32
    %c0_i32_0 = arith.constant 0 : i32
    %2 = arith.cmpi ne, %1, %c0_i32_0 : i32
    scf.if %2 {
      %c0_106 = arith.constant 0 : index
      %c0_107 = arith.constant 0 : index
      %396 = vector.load %arg1[%c0_106, %c0_107] : memref<16x128xf32, #tpu.memory_space<vmem>>, vector<16x128xf32>
      %c0_108 = arith.constant 0 : index
      %c0_109 = arith.constant 0 : index
      %397 = vector.load %arg24[%c0_108, %c0_109] : memref<16x128xf32, #tpu.memory_space<vmem>>, vector<16x128xf32>
      tpu.vector_store %arg24[%c0_108, %c0_109], %396 {strides = array<i32>} : memref<16x128xf32, #tpu.memory_space<vmem>>, vector<16x128xf32>,
    } else {
    }
    %c0 = arith.constant 0 : index
    %c0_1 = arith.constant 0 : index
    %3 = vector.load %arg24[%c0, %c0_1] : memref<16x128xf32, #tpu.memory_space<vmem>>, vector<16x128xf32>
    %c0_2 = arith.constant 0 : index
    %c0_3 = arith.constant 0 : index
    %4 = vector.load %arg2[%c0_2, %c0_3] : memref<16x128xbf16, #tpu.memory_space<vmem>>, vector<16x128xbf16>
    %c0_4 = arith.constant 0 : index
    %c0_5 = arith.constant 0 : index
    %c0_6 = arith.constant 0 : index
    %5 = vector.load %arg19[%c0_4, %c0_5, %c0_6] : memref<1x3x128xf32, #tpu.memory_space<vmem>>, vector<1x3x128xf32>
    %6 = vector.shape_cast %5 : vector<1x3x128xf32> to vector<3x128xf32>
    %c0_7 = arith.constant 0 : index
    %c0_8 = arith.constant 0 : index
    %c0_9 = arith.constant 0 : index
    %7 = vector.load %arg20[%c0_7, %c0_8, %c0_9] : memref<1x3x128xf32, #tpu.memory_space<vmem>>, vector<1x3x128xf32>
    %8 = vector.shape_cast %7 : vector<1x3x128xf32> to vector<3x128xf32>
    %9 = vector.extract_strided_slice %6 {offsets = [0, 0], sizes = [1, 128], strides = [1, 1]} : vector<3x128xf32> to vector<1x128xf32>
    %10 = vector.extract_strided_slice %8 {offsets = [0, 0], sizes = [1, 128], strides = [1, 1]} : vector<3x128xf32> to vector<1x128xf32>
    %cst = arith.constant dense<0.000000e+00> : vector<16xf32>
    %11 = vector.multi_reduction <add>, %3, %cst [1] : vector<16x128xf32> to vector<16xf32>
    %12 = vector.shape_cast %11 : vector<16xf32> to vector<16x1xf32>
    %cst_10 = arith.constant 1.280000e+02 : f32
    %13 = vector.broadcast %cst_10 : f32 to vector<16x1xf32>
    %14 = arith.divf %12, %13 : vector<16x1xf32>
    %15 = vector.broadcast %14 : vector<16x1xf32> to vector<16x128xf32>
    %16 = arith.subf %3, %15 : vector<16x128xf32>
    %17 = arith.mulf %16, %16 : vector<16x128xf32>
    %cst_11 = arith.constant dense<0.000000e+00> : vector<16xf32>
    %18 = vector.multi_reduction <add>, %17, %cst_11 [1] : vector<16x128xf32> to vector<16xf32>
    %19 = vector.shape_cast %18 : vector<16xf32> to vector<16x1xf32>
    %cst_12 = arith.constant 0.00787401571 : f32
    %20 = vector.broadcast %cst_12 : f32 to vector<16x1xf32>
    %21 = arith.mulf %19, %20 : vector<16x1xf32>
    %22 = math.sqrt %21 : vector<16x1xf32>
    %23 = vector.broadcast %14 : vector<16x1xf32> to vector<16x128xf32>
    %24 = arith.subf %3, %23 : vector<16x128xf32>
    %25 = vector.broadcast %9 : vector<1x128xf32> to vector<16x128xf32>
    %26 = arith.mulf %25, %24 : vector<16x128xf32>
    %cst_13 = arith.constant 9.99999997E-7 : f32
    %27 = vector.broadcast %cst_13 : f32 to vector<16x1xf32>
    %28 = arith.addf %22, %27 : vector<16x1xf32>
    %29 = vector.broadcast %28 : vector<16x1xf32> to vector<16x128xf32>
    %30 = arith.divf %26, %29 : vector<16x128xf32>
    %31 = vector.broadcast %10 : vector<1x128xf32> to vector<16x128xf32>
    %32 = arith.addf %30, %31 : vector<16x128xf32>
    %33 = arith.truncf %32 : vector<16x128xf32> to vector<16x128xbf16>
    %c0_14 = arith.constant 0 : index
    %c0_15 = arith.constant 0 : index
    %c0_16 = arith.constant 0 : index
    %34 = vector.load %arg5[%c0_14, %c0_15, %c0_16] : memref<1x128x384xbf16, #tpu.memory_space<vmem>>, vector<1x128x384xbf16>
    %35 = vector.shape_cast %34 : vector<1x128x384xbf16> to vector<128x384xbf16>
    %cst_17 = arith.constant dense<0.000000e+00> : vector<16x384xf32>
    %36 = tpu.matmul %33, %35, %cst_17 {dimension_numbers = #tpu.dot_dimension_numbers<[1], [0], [0], [1], [0, 0, 1, 1], [], []>} : vector<16x128xbf16>, vector<128x384xbf16>, vector<16x384xf32> -> vector<16x384xf32>
    %c0_18 = arith.constant 0 : index
    %c0_19 = arith.constant 0 : index
    %c0_20 = arith.constant 0 : index
    %37 = vector.load %arg6[%c0_18, %c0_19, %c0_20] : memref<1x1x384xf32, #tpu.memory_space<vmem>>, vector<1x1x384xf32>
    %38 = vector.shape_cast %37 : vector<1x1x384xf32> to vector<1x384xf32>
    %39 = vector.broadcast %38 : vector<1x384xf32> to vector<16x384xf32>
    %40 = arith.addf %36, %39 : vector<16x384xf32>
    %41 = vector.extract_strided_slice %40 {offsets = [0, 0], sizes = [16, 128], strides = [1, 1]} : vector<16x384xf32> to vector<16x128xf32>
    %cst_21 = arith.constant 0.176776692 : f32
    %42 = vector.broadcast %cst_21 : f32 to vector<16x128xf32>
    %43 = arith.mulf %41, %42 : vector<16x128xf32>
    %44 = vector.extract_strided_slice %40 {offsets = [0, 128], sizes = [16, 128], strides = [1, 1]} : vector<16x384xf32> to vector<16x128xf32>
    %45 = vector.extract_strided_slice %40 {offsets = [0, 256], sizes = [16, 128], strides = [1, 1]} : vector<16x384xf32> to vector<16x128xf32>
    %46 = vector.extract_strided_slice %43 {offsets = [0, 0], sizes = [8, 128], strides = [1, 1]} : vector<16x128xf32> to vector<8x128xf32>
    %47 = arith.truncf %46 : vector<8x128xf32> to vector<8x128xbf16>
    %48 = vector.extract_strided_slice %44 {offsets = [0, 0], sizes = [8, 128], strides = [1, 1]} : vector<16x128xf32> to vector<8x128xf32>
    %49 = arith.truncf %48 : vector<8x128xf32> to vector<8x128xbf16>
    %50 = vector.extract_strided_slice %45 {offsets = [0, 0], sizes = [8, 128], strides = [1, 1]} : vector<16x128xf32> to vector<8x128xf32>
    %51 = arith.truncf %50 : vector<8x128xf32> to vector<8x128xbf16>
    %52 = vector.extract_strided_slice %47 {offsets = [0, 0], sizes = [8, 32], strides = [1, 1]} : vector<8x128xbf16> to vector<8x32xbf16>
    %53 = vector.extract_strided_slice %47 {offsets = [0, 32], sizes = [8, 32], strides = [1, 1]} : vector<8x128xbf16> to vector<8x32xbf16>
    %54 = vector.extract_strided_slice %47 {offsets = [0, 64], sizes = [8, 32], strides = [1, 1]} : vector<8x128xbf16> to vector<8x32xbf16>
    %55 = vector.extract_strided_slice %47 {offsets = [0, 96], sizes = [8, 32], strides = [1, 1]} : vector<8x128xbf16> to vector<8x32xbf16>
    %56 = vector.shape_cast %52 : vector<8x32xbf16> to vector<1x8x32xbf16>
    %57 = vector.shape_cast %53 : vector<8x32xbf16> to vector<1x8x32xbf16>
    %58 = vector.shape_cast %54 : vector<8x32xbf16> to vector<1x8x32xbf16>
    %59 = vector.shape_cast %55 : vector<8x32xbf16> to vector<1x8x32xbf16>
    %60 = tpu.concatenate %56, %57, %58, %59 in 0 : vector<1x8x32xbf16>, vector<1x8x32xbf16>, vector<1x8x32xbf16>, vector<1x8x32xbf16> -> vector<4x8x32xbf16>
    %61 = vector.extract_strided_slice %49 {offsets = [0, 0], sizes = [8, 32], strides = [1, 1]} : vector<8x128xbf16> to vector<8x32xbf16>
    %62 = vector.extract_strided_slice %49 {offsets = [0, 32], sizes = [8, 32], strides = [1, 1]} : vector<8x128xbf16> to vector<8x32xbf16>
    %63 = vector.extract_strided_slice %49 {offsets = [0, 64], sizes = [8, 32], strides = [1, 1]} : vector<8x128xbf16> to vector<8x32xbf16>
    %64 = vector.extract_strided_slice %49 {offsets = [0, 96], sizes = [8, 32], strides = [1, 1]} : vector<8x128xbf16> to vector<8x32xbf16>
    %65 = vector.shape_cast %61 : vector<8x32xbf16> to vector<1x8x32xbf16>
    %66 = vector.shape_cast %62 : vector<8x32xbf16> to vector<1x8x32xbf16>
    %67 = vector.shape_cast %63 : vector<8x32xbf16> to vector<1x8x32xbf16>
    %68 = vector.shape_cast %64 : vector<8x32xbf16> to vector<1x8x32xbf16>
    %69 = tpu.concatenate %65, %66, %67, %68 in 0 : vector<1x8x32xbf16>, vector<1x8x32xbf16>, vector<1x8x32xbf16>, vector<1x8x32xbf16> -> vector<4x8x32xbf16>
    %70 = vector.extract_strided_slice %51 {offsets = [0, 0], sizes = [8, 32], strides = [1, 1]} : vector<8x128xbf16> to vector<8x32xbf16>
    %71 = vector.extract_strided_slice %51 {offsets = [0, 32], sizes = [8, 32], strides = [1, 1]} : vector<8x128xbf16> to vector<8x32xbf16>
    %72 = vector.extract_strided_slice %51 {offsets = [0, 64], sizes = [8, 32], strides = [1, 1]} : vector<8x128xbf16> to vector<8x32xbf16>
    %73 = vector.extract_strided_slice %51 {offsets = [0, 96], sizes = [8, 32], strides = [1, 1]} : vector<8x128xbf16> to vector<8x32xbf16>
    %74 = vector.shape_cast %70 : vector<8x32xbf16> to vector<1x8x32xbf16>
    %75 = vector.shape_cast %71 : vector<8x32xbf16> to vector<1x8x32xbf16>
    %76 = vector.shape_cast %72 : vector<8x32xbf16> to vector<1x8x32xbf16>
    %77 = vector.shape_cast %73 : vector<8x32xbf16> to vector<1x8x32xbf16>
    %78 = tpu.concatenate %74, %75, %76, %77 in 0 : vector<1x8x32xbf16>, vector<1x8x32xbf16>, vector<1x8x32xbf16>, vector<1x8x32xbf16> -> vector<4x8x32xbf16>
    "tpu.trace_start"() <{level = 10 : i32, message = "hqd,hkd->hqk"}> : () -> ()
    %cst_22 = arith.constant dense<0.000000e+00> : vector<4x8x8xf32>
    %79 = tpu.matmul %60, %69, %cst_22 {dimension_numbers = #tpu.dot_dimension_numbers<[2], [2], [1], [1], [0, 0, 0, 1, 1, 1], [0], [0]>} : vector<4x8x32xbf16>, vector<4x8x32xbf16>, vector<4x8x8xf32> -> vector<4x8x8xf32>
    "tpu.trace_stop"() : () -> ()
    %c0_23 = arith.constant 0 : index
    %c0_24 = arith.constant 0 : index
    %c0_25 = arith.constant 0 : index
    %80 = vector.load %arg3[%c0_23, %c0_24, %c0_25] : memref<2x8x8xf32, #tpu.memory_space<vmem>>, vector<1x8x8xf32>
    %81 = vector.shape_cast %80 : vector<1x8x8xf32> to vector<8x8xf32>
    %82 = vector.shape_cast %81 : vector<8x8xf32> to vector<1x8x8xf32>
    %83 = vector.broadcast %82 : vector<1x8x8xf32> to vector<4x8x8xf32>
    %84 = arith.addf %79, %83 : vector<4x8x8xf32>
    %cst_26 = arith.constant dense<0xFF800000> : vector<4x8xf32>
    %85 = vector.multi_reduction <maximumf>, %84, %cst_26 [2] : vector<4x8x8xf32> to vector<4x8xf32>
    %86 = vector.shape_cast %85 : vector<4x8xf32> to vector<4x8x1xf32>
    %87 = vector.broadcast %86 : vector<4x8x1xf32> to vector<4x8x8xf32>
    %88 = arith.subf %84, %87 : vector<4x8x8xf32>
    %89 = math.exp %88 : vector<4x8x8xf32>
    %cst_27 = arith.constant dense<0.000000e+00> : vector<4x8xf32>
    %90 = vector.multi_reduction <add>, %89, %cst_27 [2] : vector<4x8x8xf32> to vector<4x8xf32>
    %91 = vector.shape_cast %90 : vector<4x8xf32> to vector<4x8x1xf32>
    %92 = tpu.reciprocal %91 {approx = true} : vector<4x8x1xf32> -> vector<4x8x1xf32>
    %93 = vector.broadcast %92 : vector<4x8x1xf32> to vector<4x8x8xf32>
    %94 = arith.mulf %89, %93 : vector<4x8x8xf32>
    %95 = arith.truncf %94 : vector<4x8x8xf32> to vector<4x8x8xbf16>
    "tpu.trace_start"() <{level = 10 : i32, message = "hqk,hkd->hqd"}> : () -> ()
    %cst_28 = arith.constant dense<0.000000e+00> : vector<4x8x32xf32>
    %96 = tpu.matmul %95, %78, %cst_28 {dimension_numbers = #tpu.dot_dimension_numbers<[2], [1], [1], [2], [0, 0, 0, 1, 1, 2], [0], [0]>} : vector<4x8x8xbf16>, vector<4x8x32xbf16>, vector<4x8x32xf32> -> vector<4x8x32xf32>
    "tpu.trace_stop"() : () -> ()
    %97 = vector.extract_strided_slice %96 {offsets = [0, 0, 0], sizes = [1, 8, 32], strides = [1, 1, 1]} : vector<4x8x32xf32> to vector<1x8x32xf32>
    %98 = vector.shape_cast %97 : vector<1x8x32xf32> to vector<8x32xf32>
    %99 = vector.extract_strided_slice %96 {offsets = [1, 0, 0], sizes = [1, 8, 32], strides = [1, 1, 1]} : vector<4x8x32xf32> to vector<1x8x32xf32>
    %100 = vector.shape_cast %99 : vector<1x8x32xf32> to vector<8x32xf32>
    %101 = vector.extract_strided_slice %96 {offsets = [2, 0, 0], sizes = [1, 8, 32], strides = [1, 1, 1]} : vector<4x8x32xf32> to vector<1x8x32xf32>
    %102 = vector.shape_cast %101 : vector<1x8x32xf32> to vector<8x32xf32>
    %103 = vector.extract_strided_slice %96 {offsets = [3, 0, 0], sizes = [1, 8, 32], strides = [1, 1, 1]} : vector<4x8x32xf32> to vector<1x8x32xf32>
    %104 = vector.shape_cast %103 : vector<1x8x32xf32> to vector<8x32xf32>
    %105 = tpu.concatenate %98, %100, %102, %104 in 1 : vector<8x32xf32>, vector<8x32xf32>, vector<8x32xf32>, vector<8x32xf32> -> vector<8x128xf32>
    %106 = vector.extract_strided_slice %43 {offsets = [8, 0], sizes = [8, 128], strides = [1, 1]} : vector<16x128xf32> to vector<8x128xf32>
    %107 = arith.truncf %106 : vector<8x128xf32> to vector<8x128xbf16>
    %108 = vector.extract_strided_slice %44 {offsets = [8, 0], sizes = [8, 128], strides = [1, 1]} : vector<16x128xf32> to vector<8x128xf32>
    %109 = arith.truncf %108 : vector<8x128xf32> to vector<8x128xbf16>
    %110 = vector.extract_strided_slice %45 {offsets = [8, 0], sizes = [8, 128], strides = [1, 1]} : vector<16x128xf32> to vector<8x128xf32>
    %111 = arith.truncf %110 : vector<8x128xf32> to vector<8x128xbf16>
    %112 = vector.extract_strided_slice %107 {offsets = [0, 0], sizes = [8, 32], strides = [1, 1]} : vector<8x128xbf16> to vector<8x32xbf16>
    %113 = vector.extract_strided_slice %107 {offsets = [0, 32], sizes = [8, 32], strides = [1, 1]} : vector<8x128xbf16> to vector<8x32xbf16>
    %114 = vector.extract_strided_slice %107 {offsets = [0, 64], sizes = [8, 32], strides = [1, 1]} : vector<8x128xbf16> to vector<8x32xbf16>
    %115 = vector.extract_strided_slice %107 {offsets = [0, 96], sizes = [8, 32], strides = [1, 1]} : vector<8x128xbf16> to vector<8x32xbf16>
    %116 = vector.shape_cast %112 : vector<8x32xbf16> to vector<1x8x32xbf16>
    %117 = vector.shape_cast %113 : vector<8x32xbf16> to vector<1x8x32xbf16>
    %118 = vector.shape_cast %114 : vector<8x32xbf16> to vector<1x8x32xbf16>
    %119 = vector.shape_cast %115 : vector<8x32xbf16> to vector<1x8x32xbf16>
    %120 = tpu.concatenate %116, %117, %118, %119 in 0 : vector<1x8x32xbf16>, vector<1x8x32xbf16>, vector<1x8x32xbf16>, vector<1x8x32xbf16> -> vector<4x8x32xbf16>
    %121 = vector.extract_strided_slice %109 {offsets = [0, 0], sizes = [8, 32], strides = [1, 1]} : vector<8x128xbf16> to vector<8x32xbf16>
    %122 = vector.extract_strided_slice %109 {offsets = [0, 32], sizes = [8, 32], strides = [1, 1]} : vector<8x128xbf16> to vector<8x32xbf16>
    %123 = vector.extract_strided_slice %109 {offsets = [0, 64], sizes = [8, 32], strides = [1, 1]} : vector<8x128xbf16> to vector<8x32xbf16>
    %124 = vector.extract_strided_slice %109 {offsets = [0, 96], sizes = [8, 32], strides = [1, 1]} : vector<8x128xbf16> to vector<8x32xbf16>
    %125 = vector.shape_cast %121 : vector<8x32xbf16> to vector<1x8x32xbf16>
    %126 = vector.shape_cast %122 : vector<8x32xbf16> to vector<1x8x32xbf16>
    %127 = vector.shape_cast %123 : vector<8x32xbf16> to vector<1x8x32xbf16>
    %128 = vector.shape_cast %124 : vector<8x32xbf16> to vector<1x8x32xbf16>
    %129 = tpu.concatenate %125, %126, %127, %128 in 0 : vector<1x8x32xbf16>, vector<1x8x32xbf16>, vector<1x8x32xbf16>, vector<1x8x32xbf16> -> vector<4x8x32xbf16>
    %130 = vector.extract_strided_slice %111 {offsets = [0, 0], sizes = [8, 32], strides = [1, 1]} : vector<8x128xbf16> to vector<8x32xbf16>
    %131 = vector.extract_strided_slice %111 {offsets = [0, 32], sizes = [8, 32], strides = [1, 1]} : vector<8x128xbf16> to vector<8x32xbf16>
    %132 = vector.extract_strided_slice %111 {offsets = [0, 64], sizes = [8, 32], strides = [1, 1]} : vector<8x128xbf16> to vector<8x32xbf16>
    %133 = vector.extract_strided_slice %111 {offsets = [0, 96], sizes = [8, 32], strides = [1, 1]} : vector<8x128xbf16> to vector<8x32xbf16>
    %134 = vector.shape_cast %130 : vector<8x32xbf16> to vector<1x8x32xbf16>
    %135 = vector.shape_cast %131 : vector<8x32xbf16> to vector<1x8x32xbf16>
    %136 = vector.shape_cast %132 : vector<8x32xbf16> to vector<1x8x32xbf16>
    %137 = vector.shape_cast %133 : vector<8x32xbf16> to vector<1x8x32xbf16>
    %138 = tpu.concatenate %134, %135, %136, %137 in 0 : vector<1x8x32xbf16>, vector<1x8x32xbf16>, vector<1x8x32xbf16>, vector<1x8x32xbf16> -> vector<4x8x32xbf16>
    "tpu.trace_start"() <{level = 10 : i32, message = "hqd,hkd->hqk"}> : () -> ()
    %cst_29 = arith.constant dense<0.000000e+00> : vector<4x8x8xf32>
    %139 = tpu.matmul %120, %129, %cst_29 {dimension_numbers = #tpu.dot_dimension_numbers<[2], [2], [1], [1], [0, 0, 0, 1, 1, 1], [0], [0]>} : vector<4x8x32xbf16>, vector<4x8x32xbf16>, vector<4x8x8xf32> -> vector<4x8x8xf32>
    "tpu.trace_stop"() : () -> ()
    %c1 = arith.constant 1 : index
    %c0_30 = arith.constant 0 : index
    %c0_31 = arith.constant 0 : index
    %140 = vector.load %arg3[%c1, %c0_30, %c0_31] : memref<2x8x8xf32, #tpu.memory_space<vmem>>, vector<1x8x8xf32>
    %141 = vector.shape_cast %140 : vector<1x8x8xf32> to vector<8x8xf32>
    %142 = vector.shape_cast %141 : vector<8x8xf32> to vector<1x8x8xf32>
    %143 = vector.broadcast %142 : vector<1x8x8xf32> to vector<4x8x8xf32>
    %144 = arith.addf %139, %143 : vector<4x8x8xf32>
    %cst_32 = arith.constant dense<0xFF800000> : vector<4x8xf32>
    %145 = vector.multi_reduction <maximumf>, %144, %cst_32 [2] : vector<4x8x8xf32> to vector<4x8xf32>
    %146 = vector.shape_cast %145 : vector<4x8xf32> to vector<4x8x1xf32>
    %147 = vector.broadcast %146 : vector<4x8x1xf32> to vector<4x8x8xf32>
    %148 = arith.subf %144, %147 : vector<4x8x8xf32>
    %149 = math.exp %148 : vector<4x8x8xf32>
    %cst_33 = arith.constant dense<0.000000e+00> : vector<4x8xf32>
    %150 = vector.multi_reduction <add>, %149, %cst_33 [2] : vector<4x8x8xf32> to vector<4x8xf32>
    %151 = vector.shape_cast %150 : vector<4x8xf32> to vector<4x8x1xf32>
    %152 = tpu.reciprocal %151 {approx = true} : vector<4x8x1xf32> -> vector<4x8x1xf32>
    %153 = vector.broadcast %152 : vector<4x8x1xf32> to vector<4x8x8xf32>
    %154 = arith.mulf %149, %153 : vector<4x8x8xf32>
    %155 = arith.truncf %154 : vector<4x8x8xf32> to vector<4x8x8xbf16>
    "tpu.trace_start"() <{level = 10 : i32, message = "hqk,hkd->hqd"}> : () -> ()
    %cst_34 = arith.constant dense<0.000000e+00> : vector<4x8x32xf32>
    %156 = tpu.matmul %155, %138, %cst_34 {dimension_numbers = #tpu.dot_dimension_numbers<[2], [1], [1], [2], [0, 0, 0, 1, 1, 2], [0], [0]>} : vector<4x8x8xbf16>, vector<4x8x32xbf16>, vector<4x8x32xf32> -> vector<4x8x32xf32>
    "tpu.trace_stop"() : () -> ()
    %157 = vector.extract_strided_slice %156 {offsets = [0, 0, 0], sizes = [1, 8, 32], strides = [1, 1, 1]} : vector<4x8x32xf32> to vector<1x8x32xf32>
    %158 = vector.shape_cast %157 : vector<1x8x32xf32> to vector<8x32xf32>
    %159 = vector.extract_strided_slice %156 {offsets = [1, 0, 0], sizes = [1, 8, 32], strides = [1, 1, 1]} : vector<4x8x32xf32> to vector<1x8x32xf32>
    %160 = vector.shape_cast %159 : vector<1x8x32xf32> to vector<8x32xf32>
    %161 = vector.extract_strided_slice %156 {offsets = [2, 0, 0], sizes = [1, 8, 32], strides = [1, 1, 1]} : vector<4x8x32xf32> to vector<1x8x32xf32>
    %162 = vector.shape_cast %161 : vector<1x8x32xf32> to vector<8x32xf32>
    %163 = vector.extract_strided_slice %156 {offsets = [3, 0, 0], sizes = [1, 8, 32], strides = [1, 1, 1]} : vector<4x8x32xf32> to vector<1x8x32xf32>
    %164 = vector.shape_cast %163 : vector<1x8x32xf32> to vector<8x32xf32>
    %165 = tpu.concatenate %158, %160, %162, %164 in 1 : vector<8x32xf32>, vector<8x32xf32>, vector<8x32xf32>, vector<8x32xf32> -> vector<8x128xf32>
    %166 = tpu.concatenate %105, %165 in 0 : vector<8x128xf32>, vector<8x128xf32> -> vector<16x128xf32>
    %167 = arith.truncf %166 : vector<16x128xf32> to vector<16x128xbf16>
    %c0_35 = arith.constant 0 : index
    %c0_36 = arith.constant 0 : index
    %c0_37 = arith.constant 0 : index
    %168 = vector.load %arg7[%c0_35, %c0_36, %c0_37] : memref<1x128x128xbf16, #tpu.memory_space<vmem>>, vector<1x128x128xbf16>
    %169 = vector.shape_cast %168 : vector<1x128x128xbf16> to vector<128x128xbf16>
    %cst_38 = arith.constant dense<0.000000e+00> : vector<16x128xf32>
    %170 = tpu.matmul %167, %169, %cst_38 {dimension_numbers = #tpu.dot_dimension_numbers<[1], [0], [0], [1], [0, 0, 1, 1], [], []>} : vector<16x128xbf16>, vector<128x128xbf16>, vector<16x128xf32> -> vector<16x128xf32>
    %171 = arith.addf %3, %170 : vector<16x128xf32>
    %c0_39 = arith.constant 0 : index
    %c0_40 = arith.constant 0 : index
    %c0_41 = arith.constant 0 : index
    %172 = vector.load %arg8[%c0_39, %c0_40, %c0_41] : memref<1x1x128xf32, #tpu.memory_space<vmem>>, vector<1x1x128xf32>
    %173 = vector.shape_cast %172 : vector<1x1x128xf32> to vector<1x128xf32>
    %174 = vector.broadcast %173 : vector<1x128xf32> to vector<16x128xf32>
    %175 = arith.addf %171, %174 : vector<16x128xf32>
    %176 = vector.extract_strided_slice %6 {offsets = [1, 0], sizes = [1, 128], strides = [1, 1]} : vector<3x128xf32> to vector<1x128xf32>
    %177 = vector.extract_strided_slice %8 {offsets = [1, 0], sizes = [1, 128], strides = [1, 1]} : vector<3x128xf32> to vector<1x128xf32>
    %cst_42 = arith.constant dense<0.000000e+00> : vector<16xf32>
    %178 = vector.multi_reduction <add>, %175, %cst_42 [1] : vector<16x128xf32> to vector<16xf32>
    %179 = vector.shape_cast %178 : vector<16xf32> to vector<16x1xf32>
    %cst_43 = arith.constant 1.280000e+02 : f32
    %180 = vector.broadcast %cst_43 : f32 to vector<16x1xf32>
    %181 = arith.divf %179, %180 : vector<16x1xf32>
    %182 = vector.broadcast %181 : vector<16x1xf32> to vector<16x128xf32>
    %183 = arith.subf %175, %182 : vector<16x128xf32>
    %184 = arith.mulf %183, %183 : vector<16x128xf32>
    %cst_44 = arith.constant dense<0.000000e+00> : vector<16xf32>
    %185 = vector.multi_reduction <add>, %184, %cst_44 [1] : vector<16x128xf32> to vector<16xf32>
    %186 = vector.shape_cast %185 : vector<16xf32> to vector<16x1xf32>
    %cst_45 = arith.constant 0.00787401571 : f32
    %187 = vector.broadcast %cst_45 : f32 to vector<16x1xf32>
    %188 = arith.mulf %186, %187 : vector<16x1xf32>
    %189 = math.sqrt %188 : vector<16x1xf32>
    %190 = vector.broadcast %181 : vector<16x1xf32> to vector<16x128xf32>
    %191 = arith.subf %175, %190 : vector<16x128xf32>
    %192 = vector.broadcast %176 : vector<1x128xf32> to vector<16x128xf32>
    %193 = arith.mulf %192, %191 : vector<16x128xf32>
    %cst_46 = arith.constant 9.99999997E-7 : f32
    %194 = vector.broadcast %cst_46 : f32 to vector<16x1xf32>
    %195 = arith.addf %189, %194 : vector<16x1xf32>
    %196 = vector.broadcast %195 : vector<16x1xf32> to vector<16x128xf32>
    %197 = arith.divf %193, %196 : vector<16x128xf32>
    %198 = vector.broadcast %177 : vector<1x128xf32> to vector<16x128xf32>
    %199 = arith.addf %197, %198 : vector<16x128xf32>
    %200 = arith.truncf %199 : vector<16x128xf32> to vector<16x128xbf16>
    %c0_47 = arith.constant 0 : index
    %c0_48 = arith.constant 0 : index
    %c0_49 = arith.constant 0 : index
    %201 = vector.load %arg9[%c0_47, %c0_48, %c0_49] : memref<1x128x128xbf16, #tpu.memory_space<vmem>>, vector<1x128x128xbf16>
    %202 = vector.shape_cast %201 : vector<1x128x128xbf16> to vector<128x128xbf16>
    %cst_50 = arith.constant dense<0.000000e+00> : vector<16x128xf32>
    %203 = tpu.matmul %200, %202, %cst_50 {dimension_numbers = #tpu.dot_dimension_numbers<[1], [0], [0], [1], [0, 0, 1, 1], [], []>} : vector<16x128xbf16>, vector<128x128xbf16>, vector<16x128xf32> -> vector<16x128xf32>
    %c0_51 = arith.constant 0 : index
    %c0_52 = arith.constant 0 : index
    %c0_53 = arith.constant 0 : index
    %204 = vector.load %arg10[%c0_51, %c0_52, %c0_53] : memref<1x1x128xf32, #tpu.memory_space<vmem>>, vector<1x1x128xf32>
    %205 = vector.shape_cast %204 : vector<1x1x128xf32> to vector<1x128xf32>
    %206 = vector.broadcast %205 : vector<1x128xf32> to vector<16x128xf32>
    %207 = arith.addf %203, %206 : vector<16x128xf32>
    %cst_54 = arith.constant 0.176776692 : f32
    %208 = vector.broadcast %cst_54 : f32 to vector<16x128xf32>
    %209 = arith.mulf %207, %208 : vector<16x128xf32>
    %c0_55 = arith.constant 0 : index
    %c0_56 = arith.constant 0 : index
    %c0_57 = arith.constant 0 : index
    %210 = vector.load %arg11[%c0_55, %c0_56, %c0_57] : memref<1x128x256xbf16, #tpu.memory_space<vmem>>, vector<1x128x256xbf16>
    %211 = vector.shape_cast %210 : vector<1x128x256xbf16> to vector<128x256xbf16>
    %cst_58 = arith.constant dense<0.000000e+00> : vector<16x256xf32>
    %212 = tpu.matmul %4, %211, %cst_58 {dimension_numbers = #tpu.dot_dimension_numbers<[1], [0], [0], [1], [0, 0, 1, 1], [], []>} : vector<16x128xbf16>, vector<128x256xbf16>, vector<16x256xf32> -> vector<16x256xf32>
    %c0_59 = arith.constant 0 : index
    %c0_60 = arith.constant 0 : index
    %c0_61 = arith.constant 0 : index
    %213 = vector.load %arg12[%c0_59, %c0_60, %c0_61] : memref<1x1x256xf32, #tpu.memory_space<vmem>>, vector<1x1x256xf32>
    %214 = vector.shape_cast %213 : vector<1x1x256xf32> to vector<1x256xf32>
    %215 = vector.broadcast %214 : vector<1x256xf32> to vector<16x256xf32>
    %216 = arith.addf %212, %215 : vector<16x256xf32>
    %217 = vector.extract_strided_slice %216 {offsets = [0, 0], sizes = [16, 128], strides = [1, 1]} : vector<16x256xf32> to vector<16x128xf32>
    %218 = vector.extract_strided_slice %216 {offsets = [0, 128], sizes = [16, 128], strides = [1, 1]} : vector<16x256xf32> to vector<16x128xf32>
    %219 = vector.extract_strided_slice %209 {offsets = [0, 0], sizes = [8, 128], strides = [1, 1]} : vector<16x128xf32> to vector<8x128xf32>
    %220 = arith.truncf %219 : vector<8x128xf32> to vector<8x128xbf16>
    %221 = vector.extract_strided_slice %217 {offsets = [0, 0], sizes = [8, 128], strides = [1, 1]} : vector<16x128xf32> to vector<8x128xf32>
    %222 = arith.truncf %221 : vector<8x128xf32> to vector<8x128xbf16>
    %223 = vector.extract_strided_slice %218 {offsets = [0, 0], sizes = [8, 128], strides = [1, 1]} : vector<16x128xf32> to vector<8x128xf32>
    %224 = arith.truncf %223 : vector<8x128xf32> to vector<8x128xbf16>
    %225 = vector.extract_strided_slice %220 {offsets = [0, 0], sizes = [8, 32], strides = [1, 1]} : vector<8x128xbf16> to vector<8x32xbf16>
    %226 = vector.extract_strided_slice %220 {offsets = [0, 32], sizes = [8, 32], strides = [1, 1]} : vector<8x128xbf16> to vector<8x32xbf16>
    %227 = vector.extract_strided_slice %220 {offsets = [0, 64], sizes = [8, 32], strides = [1, 1]} : vector<8x128xbf16> to vector<8x32xbf16>
    %228 = vector.extract_strided_slice %220 {offsets = [0, 96], sizes = [8, 32], strides = [1, 1]} : vector<8x128xbf16> to vector<8x32xbf16>
    %229 = vector.shape_cast %225 : vector<8x32xbf16> to vector<1x8x32xbf16>
    %230 = vector.shape_cast %226 : vector<8x32xbf16> to vector<1x8x32xbf16>
    %231 = vector.shape_cast %227 : vector<8x32xbf16> to vector<1x8x32xbf16>
    %232 = vector.shape_cast %228 : vector<8x32xbf16> to vector<1x8x32xbf16>
    %233 = tpu.concatenate %229, %230, %231, %232 in 0 : vector<1x8x32xbf16>, vector<1x8x32xbf16>, vector<1x8x32xbf16>, vector<1x8x32xbf16> -> vector<4x8x32xbf16>
    %234 = vector.extract_strided_slice %222 {offsets = [0, 0], sizes = [8, 32], strides = [1, 1]} : vector<8x128xbf16> to vector<8x32xbf16>
    %235 = vector.extract_strided_slice %222 {offsets = [0, 32], sizes = [8, 32], strides = [1, 1]} : vector<8x128xbf16> to vector<8x32xbf16>
    %236 = vector.extract_strided_slice %222 {offsets = [0, 64], sizes = [8, 32], strides = [1, 1]} : vector<8x128xbf16> to vector<8x32xbf16>
    %237 = vector.extract_strided_slice %222 {offsets = [0, 96], sizes = [8, 32], strides = [1, 1]} : vector<8x128xbf16> to vector<8x32xbf16>
    %238 = vector.shape_cast %234 : vector<8x32xbf16> to vector<1x8x32xbf16>
    %239 = vector.shape_cast %235 : vector<8x32xbf16> to vector<1x8x32xbf16>
    %240 = vector.shape_cast %236 : vector<8x32xbf16> to vector<1x8x32xbf16>
    %241 = vector.shape_cast %237 : vector<8x32xbf16> to vector<1x8x32xbf16>
    %242 = tpu.concatenate %238, %239, %240, %241 in 0 : vector<1x8x32xbf16>, vector<1x8x32xbf16>, vector<1x8x32xbf16>, vector<1x8x32xbf16> -> vector<4x8x32xbf16>
    %243 = vector.extract_strided_slice %224 {offsets = [0, 0], sizes = [8, 32], strides = [1, 1]} : vector<8x128xbf16> to vector<8x32xbf16>
    %244 = vector.extract_strided_slice %224 {offsets = [0, 32], sizes = [8, 32], strides = [1, 1]} : vector<8x128xbf16> to vector<8x32xbf16>
    %245 = vector.extract_strided_slice %224 {offsets = [0, 64], sizes = [8, 32], strides = [1, 1]} : vector<8x128xbf16> to vector<8x32xbf16>
    %246 = vector.extract_strided_slice %224 {offsets = [0, 96], sizes = [8, 32], strides = [1, 1]} : vector<8x128xbf16> to vector<8x32xbf16>
    %247 = vector.shape_cast %243 : vector<8x32xbf16> to vector<1x8x32xbf16>
    %248 = vector.shape_cast %244 : vector<8x32xbf16> to vector<1x8x32xbf16>
    %249 = vector.shape_cast %245 : vector<8x32xbf16> to vector<1x8x32xbf16>
    %250 = vector.shape_cast %246 : vector<8x32xbf16> to vector<1x8x32xbf16>
    %251 = tpu.concatenate %247, %248, %249, %250 in 0 : vector<1x8x32xbf16>, vector<1x8x32xbf16>, vector<1x8x32xbf16>, vector<1x8x32xbf16> -> vector<4x8x32xbf16>
    "tpu.trace_start"() <{level = 10 : i32, message = "hqd,hkd->hqk"}> : () -> ()
    %cst_62 = arith.constant dense<0.000000e+00> : vector<4x8x8xf32>
    %252 = tpu.matmul %233, %242, %cst_62 {dimension_numbers = #tpu.dot_dimension_numbers<[2], [2], [1], [1], [0, 0, 0, 1, 1, 1], [0], [0]>} : vector<4x8x32xbf16>, vector<4x8x32xbf16>, vector<4x8x8xf32> -> vector<4x8x8xf32>
    "tpu.trace_stop"() : () -> ()
    %c0_63 = arith.constant 0 : index
    %c0_64 = arith.constant 0 : index
    %c0_65 = arith.constant 0 : index
    %253 = vector.load %arg4[%c0_63, %c0_64, %c0_65] : memref<2x8x8xf32, #tpu.memory_space<vmem>>, vector<1x8x8xf32>
    %254 = vector.shape_cast %253 : vector<1x8x8xf32> to vector<8x8xf32>
    %255 = vector.shape_cast %254 : vector<8x8xf32> to vector<1x8x8xf32>
    %256 = vector.broadcast %255 : vector<1x8x8xf32> to vector<4x8x8xf32>
    %257 = arith.addf %252, %256 : vector<4x8x8xf32>
    %cst_66 = arith.constant dense<0xFF800000> : vector<4x8xf32>
    %258 = vector.multi_reduction <maximumf>, %257, %cst_66 [2] : vector<4x8x8xf32> to vector<4x8xf32>
    %259 = vector.shape_cast %258 : vector<4x8xf32> to vector<4x8x1xf32>
    %260 = vector.broadcast %259 : vector<4x8x1xf32> to vector<4x8x8xf32>
    %261 = arith.subf %257, %260 : vector<4x8x8xf32>
    %262 = math.exp %261 : vector<4x8x8xf32>
    %cst_67 = arith.constant dense<0.000000e+00> : vector<4x8xf32>
    %263 = vector.multi_reduction <add>, %262, %cst_67 [2] : vector<4x8x8xf32> to vector<4x8xf32>
    %264 = vector.shape_cast %263 : vector<4x8xf32> to vector<4x8x1xf32>
    %265 = tpu.reciprocal %264 {approx = true} : vector<4x8x1xf32> -> vector<4x8x1xf32>
    %266 = vector.broadcast %265 : vector<4x8x1xf32> to vector<4x8x8xf32>
    %267 = arith.mulf %262, %266 : vector<4x8x8xf32>
    %268 = arith.truncf %267 : vector<4x8x8xf32> to vector<4x8x8xbf16>
    "tpu.trace_start"() <{level = 10 : i32, message = "hqk,hkd->hqd"}> : () -> ()
    %cst_68 = arith.constant dense<0.000000e+00> : vector<4x8x32xf32>
    %269 = tpu.matmul %268, %251, %cst_68 {dimension_numbers = #tpu.dot_dimension_numbers<[2], [1], [1], [2], [0, 0, 0, 1, 1, 2], [0], [0]>} : vector<4x8x8xbf16>, vector<4x8x32xbf16>, vector<4x8x32xf32> -> vector<4x8x32xf32>
    "tpu.trace_stop"() : () -> ()
    %270 = vector.extract_strided_slice %269 {offsets = [0, 0, 0], sizes = [1, 8, 32], strides = [1, 1, 1]} : vector<4x8x32xf32> to vector<1x8x32xf32>
    %271 = vector.shape_cast %270 : vector<1x8x32xf32> to vector<8x32xf32>
    %272 = vector.extract_strided_slice %269 {offsets = [1, 0, 0], sizes = [1, 8, 32], strides = [1, 1, 1]} : vector<4x8x32xf32> to vector<1x8x32xf32>
    %273 = vector.shape_cast %272 : vector<1x8x32xf32> to vector<8x32xf32>
    %274 = vector.extract_strided_slice %269 {offsets = [2, 0, 0], sizes = [1, 8, 32], strides = [1, 1, 1]} : vector<4x8x32xf32> to vector<1x8x32xf32>
    %275 = vector.shape_cast %274 : vector<1x8x32xf32> to vector<8x32xf32>
    %276 = vector.extract_strided_slice %269 {offsets = [3, 0, 0], sizes = [1, 8, 32], strides = [1, 1, 1]} : vector<4x8x32xf32> to vector<1x8x32xf32>
    %277 = vector.shape_cast %276 : vector<1x8x32xf32> to vector<8x32xf32>
    %278 = tpu.concatenate %271, %273, %275, %277 in 1 : vector<8x32xf32>, vector<8x32xf32>, vector<8x32xf32>, vector<8x32xf32> -> vector<8x128xf32>
    %279 = vector.extract_strided_slice %209 {offsets = [8, 0], sizes = [8, 128], strides = [1, 1]} : vector<16x128xf32> to vector<8x128xf32>
    %280 = arith.truncf %279 : vector<8x128xf32> to vector<8x128xbf16>
    %281 = vector.extract_strided_slice %217 {offsets = [8, 0], sizes = [8, 128], strides = [1, 1]} : vector<16x128xf32> to vector<8x128xf32>
    %282 = arith.truncf %281 : vector<8x128xf32> to vector<8x128xbf16>
    %283 = vector.extract_strided_slice %218 {offsets = [8, 0], sizes = [8, 128], strides = [1, 1]} : vector<16x128xf32> to vector<8x128xf32>
    %284 = arith.truncf %283 : vector<8x128xf32> to vector<8x128xbf16>
    %285 = vector.extract_strided_slice %280 {offsets = [0, 0], sizes = [8, 32], strides = [1, 1]} : vector<8x128xbf16> to vector<8x32xbf16>
    %286 = vector.extract_strided_slice %280 {offsets = [0, 32], sizes = [8, 32], strides = [1, 1]} : vector<8x128xbf16> to vector<8x32xbf16>
    %287 = vector.extract_strided_slice %280 {offsets = [0, 64], sizes = [8, 32], strides = [1, 1]} : vector<8x128xbf16> to vector<8x32xbf16>
    %288 = vector.extract_strided_slice %280 {offsets = [0, 96], sizes = [8, 32], strides = [1, 1]} : vector<8x128xbf16> to vector<8x32xbf16>
    %289 = vector.shape_cast %285 : vector<8x32xbf16> to vector<1x8x32xbf16>
    %290 = vector.shape_cast %286 : vector<8x32xbf16> to vector<1x8x32xbf16>
    %291 = vector.shape_cast %287 : vector<8x32xbf16> to vector<1x8x32xbf16>
    %292 = vector.shape_cast %288 : vector<8x32xbf16> to vector<1x8x32xbf16>
    %293 = tpu.concatenate %289, %290, %291, %292 in 0 : vector<1x8x32xbf16>, vector<1x8x32xbf16>, vector<1x8x32xbf16>, vector<1x8x32xbf16> -> vector<4x8x32xbf16>
    %294 = vector.extract_strided_slice %282 {offsets = [0, 0], sizes = [8, 32], strides = [1, 1]} : vector<8x128xbf16> to vector<8x32xbf16>
    %295 = vector.extract_strided_slice %282 {offsets = [0, 32], sizes = [8, 32], strides = [1, 1]} : vector<8x128xbf16> to vector<8x32xbf16>
    %296 = vector.extract_strided_slice %282 {offsets = [0, 64], sizes = [8, 32], strides = [1, 1]} : vector<8x128xbf16> to vector<8x32xbf16>
    %297 = vector.extract_strided_slice %282 {offsets = [0, 96], sizes = [8, 32], strides = [1, 1]} : vector<8x128xbf16> to vector<8x32xbf16>
    %298 = vector.shape_cast %294 : vector<8x32xbf16> to vector<1x8x32xbf16>
    %299 = vector.shape_cast %295 : vector<8x32xbf16> to vector<1x8x32xbf16>
    %300 = vector.shape_cast %296 : vector<8x32xbf16> to vector<1x8x32xbf16>
    %301 = vector.shape_cast %297 : vector<8x32xbf16> to vector<1x8x32xbf16>
    %302 = tpu.concatenate %298, %299, %300, %301 in 0 : vector<1x8x32xbf16>, vector<1x8x32xbf16>, vector<1x8x32xbf16>, vector<1x8x32xbf16> -> vector<4x8x32xbf16>
    %303 = vector.extract_strided_slice %284 {offsets = [0, 0], sizes = [8, 32], strides = [1, 1]} : vector<8x128xbf16> to vector<8x32xbf16>
    %304 = vector.extract_strided_slice %284 {offsets = [0, 32], sizes = [8, 32], strides = [1, 1]} : vector<8x128xbf16> to vector<8x32xbf16>
    %305 = vector.extract_strided_slice %284 {offsets = [0, 64], sizes = [8, 32], strides = [1, 1]} : vector<8x128xbf16> to vector<8x32xbf16>
    %306 = vector.extract_strided_slice %284 {offsets = [0, 96], sizes = [8, 32], strides = [1, 1]} : vector<8x128xbf16> to vector<8x32xbf16>
    %307 = vector.shape_cast %303 : vector<8x32xbf16> to vector<1x8x32xbf16>
    %308 = vector.shape_cast %304 : vector<8x32xbf16> to vector<1x8x32xbf16>
    %309 = vector.shape_cast %305 : vector<8x32xbf16> to vector<1x8x32xbf16>
    %310 = vector.shape_cast %306 : vector<8x32xbf16> to vector<1x8x32xbf16>
    %311 = tpu.concatenate %307, %308, %309, %310 in 0 : vector<1x8x32xbf16>, vector<1x8x32xbf16>, vector<1x8x32xbf16>, vector<1x8x32xbf16> -> vector<4x8x32xbf16>
    "tpu.trace_start"() <{level = 10 : i32, message = "hqd,hkd->hqk"}> : () -> ()
    %cst_69 = arith.constant dense<0.000000e+00> : vector<4x8x8xf32>
    %312 = tpu.matmul %293, %302, %cst_69 {dimension_numbers = #tpu.dot_dimension_numbers<[2], [2], [1], [1], [0, 0, 0, 1, 1, 1], [0], [0]>} : vector<4x8x32xbf16>, vector<4x8x32xbf16>, vector<4x8x8xf32> -> vector<4x8x8xf32>
    "tpu.trace_stop"() : () -> ()
    %c1_70 = arith.constant 1 : index
    %c0_71 = arith.constant 0 : index
    %c0_72 = arith.constant 0 : index
    %313 = vector.load %arg4[%c1_70, %c0_71, %c0_72] : memref<2x8x8xf32, #tpu.memory_space<vmem>>, vector<1x8x8xf32>
    %314 = vector.shape_cast %313 : vector<1x8x8xf32> to vector<8x8xf32>
    %315 = vector.shape_cast %314 : vector<8x8xf32> to vector<1x8x8xf32>
    %316 = vector.broadcast %315 : vector<1x8x8xf32> to vector<4x8x8xf32>
    %317 = arith.addf %312, %316 : vector<4x8x8xf32>
    %cst_73 = arith.constant dense<0xFF800000> : vector<4x8xf32>
    %318 = vector.multi_reduction <maximumf>, %317, %cst_73 [2] : vector<4x8x8xf32> to vector<4x8xf32>
    %319 = vector.shape_cast %318 : vector<4x8xf32> to vector<4x8x1xf32>
    %320 = vector.broadcast %319 : vector<4x8x1xf32> to vector<4x8x8xf32>
    %321 = arith.subf %317, %320 : vector<4x8x8xf32>
    %322 = math.exp %321 : vector<4x8x8xf32>
    %cst_74 = arith.constant dense<0.000000e+00> : vector<4x8xf32>
    %323 = vector.multi_reduction <add>, %322, %cst_74 [2] : vector<4x8x8xf32> to vector<4x8xf32>
    %324 = vector.shape_cast %323 : vector<4x8xf32> to vector<4x8x1xf32>
    %325 = tpu.reciprocal %324 {approx = true} : vector<4x8x1xf32> -> vector<4x8x1xf32>
    %326 = vector.broadcast %325 : vector<4x8x1xf32> to vector<4x8x8xf32>
    %327 = arith.mulf %322, %326 : vector<4x8x8xf32>
    %328 = arith.truncf %327 : vector<4x8x8xf32> to vector<4x8x8xbf16>
    "tpu.trace_start"() <{level = 10 : i32, message = "hqk,hkd->hqd"}> : () -> ()
    %cst_75 = arith.constant dense<0.000000e+00> : vector<4x8x32xf32>
    %329 = tpu.matmul %328, %311, %cst_75 {dimension_numbers = #tpu.dot_dimension_numbers<[2], [1], [1], [2], [0, 0, 0, 1, 1, 2], [0], [0]>} : vector<4x8x8xbf16>, vector<4x8x32xbf16>, vector<4x8x32xf32> -> vector<4x8x32xf32>
    "tpu.trace_stop"() : () -> ()
    %330 = vector.extract_strided_slice %329 {offsets = [0, 0, 0], sizes = [1, 8, 32], strides = [1, 1, 1]} : vector<4x8x32xf32> to vector<1x8x32xf32>
    %331 = vector.shape_cast %330 : vector<1x8x32xf32> to vector<8x32xf32>
    %332 = vector.extract_strided_slice %329 {offsets = [1, 0, 0], sizes = [1, 8, 32], strides = [1, 1, 1]} : vector<4x8x32xf32> to vector<1x8x32xf32>
    %333 = vector.shape_cast %332 : vector<1x8x32xf32> to vector<8x32xf32>
    %334 = vector.extract_strided_slice %329 {offsets = [2, 0, 0], sizes = [1, 8, 32], strides = [1, 1, 1]} : vector<4x8x32xf32> to vector<1x8x32xf32>
    %335 = vector.shape_cast %334 : vector<1x8x32xf32> to vector<8x32xf32>
    %336 = vector.extract_strided_slice %329 {offsets = [3, 0, 0], sizes = [1, 8, 32], strides = [1, 1, 1]} : vector<4x8x32xf32> to vector<1x8x32xf32>
    %337 = vector.shape_cast %336 : vector<1x8x32xf32> to vector<8x32xf32>
    %338 = tpu.concatenate %331, %333, %335, %337 in 1 : vector<8x32xf32>, vector<8x32xf32>, vector<8x32xf32>, vector<8x32xf32> -> vector<8x128xf32>
    %339 = tpu.concatenate %278, %338 in 0 : vector<8x128xf32>, vector<8x128xf32> -> vector<16x128xf32>
    %340 = arith.truncf %339 : vector<16x128xf32> to vector<16x128xbf16>
    %c0_76 = arith.constant 0 : index
    %c0_77 = arith.constant 0 : index
    %c0_78 = arith.constant 0 : index
    %341 = vector.load %arg13[%c0_76, %c0_77, %c0_78] : memref<1x128x128xbf16, #tpu.memory_space<vmem>>, vector<1x128x128xbf16>
    %342 = vector.shape_cast %341 : vector<1x128x128xbf16> to vector<128x128xbf16>
    %cst_79 = arith.constant dense<0.000000e+00> : vector<16x128xf32>
    %343 = tpu.matmul %340, %342, %cst_79 {dimension_numbers = #tpu.dot_dimension_numbers<[1], [0], [0], [1], [0, 0, 1, 1], [], []>} : vector<16x128xbf16>, vector<128x128xbf16>, vector<16x128xf32> -> vector<16x128xf32>
    %344 = arith.addf %175, %343 : vector<16x128xf32>
    %c0_80 = arith.constant 0 : index
    %c0_81 = arith.constant 0 : index
    %c0_82 = arith.constant 0 : index
    %345 = vector.load %arg14[%c0_80, %c0_81, %c0_82] : memref<1x1x128xf32, #tpu.memory_space<vmem>>, vector<1x1x128xf32>
    %346 = vector.shape_cast %345 : vector<1x1x128xf32> to vector<1x128xf32>
    %347 = vector.broadcast %346 : vector<1x128xf32> to vector<16x128xf32>
    %348 = arith.addf %344, %347 : vector<16x128xf32>
    %349 = vector.extract_strided_slice %6 {offsets = [2, 0], sizes = [1, 128], strides = [1, 1]} : vector<3x128xf32> to vector<1x128xf32>
    %350 = vector.extract_strided_slice %8 {offsets = [2, 0], sizes = [1, 128], strides = [1, 1]} : vector<3x128xf32> to vector<1x128xf32>
    %cst_83 = arith.constant dense<0.000000e+00> : vector<16xf32>
    %351 = vector.multi_reduction <add>, %348, %cst_83 [1] : vector<16x128xf32> to vector<16xf32>
    %352 = vector.shape_cast %351 : vector<16xf32> to vector<16x1xf32>
    %cst_84 = arith.constant 1.280000e+02 : f32
    %353 = vector.broadcast %cst_84 : f32 to vector<16x1xf32>
    %354 = arith.divf %352, %353 : vector<16x1xf32>
    %355 = vector.broadcast %354 : vector<16x1xf32> to vector<16x128xf32>
    %356 = arith.subf %348, %355 : vector<16x128xf32>
    %357 = arith.mulf %356, %356 : vector<16x128xf32>
    %cst_85 = arith.constant dense<0.000000e+00> : vector<16xf32>
    %358 = vector.multi_reduction <add>, %357, %cst_85 [1] : vector<16x128xf32> to vector<16xf32>
    %359 = vector.shape_cast %358 : vector<16xf32> to vector<16x1xf32>
    %cst_86 = arith.constant 0.00787401571 : f32
    %360 = vector.broadcast %cst_86 : f32 to vector<16x1xf32>
    %361 = arith.mulf %359, %360 : vector<16x1xf32>
    %362 = math.sqrt %361 : vector<16x1xf32>
    %363 = vector.broadcast %354 : vector<16x1xf32> to vector<16x128xf32>
    %364 = arith.subf %348, %363 : vector<16x128xf32>
    %365 = vector.broadcast %349 : vector<1x128xf32> to vector<16x128xf32>
    %366 = arith.mulf %365, %364 : vector<16x128xf32>
    %cst_87 = arith.constant 9.99999997E-7 : f32
    %367 = vector.broadcast %cst_87 : f32 to vector<16x1xf32>
    %368 = arith.addf %362, %367 : vector<16x1xf32>
    %369 = vector.broadcast %368 : vector<16x1xf32> to vector<16x128xf32>
    %370 = arith.divf %366, %369 : vector<16x128xf32>
    %371 = vector.broadcast %350 : vector<1x128xf32> to vector<16x128xf32>
    %372 = arith.addf %370, %371 : vector<16x128xf32>
    %373 = arith.truncf %372 : vector<16x128xf32> to vector<16x128xbf16>
    %c0_88 = arith.constant 0 : index
    %c0_89 = arith.constant 0 : index
    %c0_90 = arith.constant 0 : index
    %374 = vector.load %arg15[%c0_88, %c0_89, %c0_90] : memref<1x128x256xbf16, #tpu.memory_space<vmem>>, vector<1x128x256xbf16>
    %375 = vector.shape_cast %374 : vector<1x128x256xbf16> to vector<128x256xbf16>
    %cst_91 = arith.constant dense<0.000000e+00> : vector<16x256xf32>
    %376 = tpu.matmul %373, %375, %cst_91 {dimension_numbers = #tpu.dot_dimension_numbers<[1], [0], [0], [1], [0, 0, 1, 1], [], []>} : vector<16x128xbf16>, vector<128x256xbf16>, vector<16x256xf32> -> vector<16x256xf32>
    %c0_92 = arith.constant 0 : index
    %c0_93 = arith.constant 0 : index
    %c0_94 = arith.constant 0 : index
    %377 = vector.load %arg16[%c0_92, %c0_93, %c0_94] : memref<1x1x256xf32, #tpu.memory_space<vmem>>, vector<1x1x256xf32>
    %378 = vector.shape_cast %377 : vector<1x1x256xf32> to vector<1x256xf32>
    %379 = vector.broadcast %378 : vector<1x256xf32> to vector<16x256xf32>
    %380 = arith.addf %376, %379 : vector<16x256xf32>
    %cst_95 = arith.constant 0.000000e+00 : f32
    %381 = vector.broadcast %cst_95 : f32 to vector<16x256xf32>
    %382 = arith.maximumf %380, %381 : vector<16x256xf32>
    %383 = arith.truncf %382 : vector<16x256xf32> to vector<16x256xbf16>
    %c0_96 = arith.constant 0 : index
    %c0_97 = arith.constant 0 : index
    %c0_98 = arith.constant 0 : index
    %384 = vector.load %arg17[%c0_96, %c0_97, %c0_98] : memref<1x256x128xbf16, #tpu.memory_space<vmem>>, vector<1x256x128xbf16>
    %385 = vector.shape_cast %384 : vector<1x256x128xbf16> to vector<256x128xbf16>
    %cst_99 = arith.constant dense<0.000000e+00> : vector<16x128xf32>
    %386 = tpu.matmul %383, %385, %cst_99 {dimension_numbers = #tpu.dot_dimension_numbers<[1], [0], [0], [1], [0, 0, 1, 1], [], []>} : vector<16x256xbf16>, vector<256x128xbf16>, vector<16x128xf32> -> vector<16x128xf32>
    %c0_100 = arith.constant 0 : index
    %c0_101 = arith.constant 0 : index
    %c0_102 = arith.constant 0 : index
    %387 = vector.load %arg18[%c0_100, %c0_101, %c0_102] : memref<1x1x128xf32, #tpu.memory_space<vmem>>, vector<1x1x128xf32>
    %388 = vector.shape_cast %387 : vector<1x1x128xf32> to vector<1x128xf32>
    %389 = vector.broadcast %388 : vector<1x128xf32> to vector<16x128xf32>
    %390 = arith.addf %386, %389 : vector<16x128xf32>
    %391 = arith.addf %348, %390 : vector<16x128xf32>
    %c0_103 = arith.constant 0 : index
    %c0_104 = arith.constant 0 : index
    %392 = vector.load %arg24[%c0_103, %c0_104] : memref<16x128xf32, #tpu.memory_space<vmem>>, vector<16x128xf32>
    tpu.vector_store %arg24[%c0_103, %c0_104], %391 {strides = array<i32>} : memref<16x128xf32, #tpu.memory_space<vmem>>, vector<16x128xf32>,
    %c1_i32 = arith.constant 1 : i32
    %393 = arith.cmpi eq, %arg0, %c1_i32 : i32
    %394 = arith.extui %393 : i1 to i32
    %c0_i32_105 = arith.constant 0 : i32
    %395 = arith.cmpi ne, %394, %c0_i32_105 : i32
    scf.if %395 {
      %c0_106 = arith.constant 0 : index
      %c0_107 = arith.constant 0 : index
      %396 = vector.load %arg21[%c0_106, %c0_107] : memref<1x128xf32, #tpu.memory_space<vmem>>, vector<1x128xf32>
      %c0_108 = arith.constant 0 : index
      %c0_109 = arith.constant 0 : index
      %397 = vector.load %arg22[%c0_108, %c0_109] : memref<1x128xf32, #tpu.memory_space<vmem>>, vector<1x128xf32>
      %cst_110 = arith.constant dense<0.000000e+00> : vector<16xf32>
      %398 = vector.multi_reduction <add>, %391, %cst_110 [1] : vector<16x128xf32> to vector<16xf32>
      %399 = vector.shape_cast %398 : vector<16xf32> to vector<16x1xf32>
      %cst_111 = arith.constant 1.280000e+02 : f32
      %400 = vector.broadcast %cst_111 : f32 to vector<16x1xf32>
      %401 = arith.divf %399, %400 : vector<16x1xf32>
      %402 = vector.broadcast %401 : vector<16x1xf32> to vector<16x128xf32>
      %403 = arith.subf %391, %402 : vector<16x128xf32>
      %404 = arith.mulf %403, %403 : vector<16x128xf32>
      %cst_112 = arith.constant dense<0.000000e+00> : vector<16xf32>
      %405 = vector.multi_reduction <add>, %404, %cst_112 [1] : vector<16x128xf32> to vector<16xf32>
      %406 = vector.shape_cast %405 : vector<16xf32> to vector<16x1xf32>
      %cst_113 = arith.constant 0.00787401571 : f32
      %407 = vector.broadcast %cst_113 : f32 to vector<16x1xf32>
      %408 = arith.mulf %406, %407 : vector<16x1xf32>
      %409 = math.sqrt %408 : vector<16x1xf32>
      %410 = vector.broadcast %401 : vector<16x1xf32> to vector<16x128xf32>
      %411 = arith.subf %391, %410 : vector<16x128xf32>
      %412 = vector.broadcast %396 : vector<1x128xf32> to vector<16x128xf32>
      %413 = arith.mulf %412, %411 : vector<16x128xf32>
      %cst_114 = arith.constant 9.99999997E-7 : f32
      %414 = vector.broadcast %cst_114 : f32 to vector<16x1xf32>
      %415 = arith.addf %409, %414 : vector<16x1xf32>
      %416 = vector.broadcast %415 : vector<16x1xf32> to vector<16x128xf32>
      %417 = arith.divf %413, %416 : vector<16x128xf32>
      %418 = vector.broadcast %397 : vector<1x128xf32> to vector<16x128xf32>
      %419 = arith.addf %417, %418 : vector<16x128xf32>
      %c0_115 = arith.constant 0 : index
      %c0_116 = arith.constant 0 : index
      %420 = vector.load %arg23[%c0_115, %c0_116] : memref<16x128xf32, #tpu.memory_space<vmem>>, vector<16x128xf32>
      tpu.vector_store %arg23[%c0_115, %c0_116], %419 {strides = array<i32>} : memref<16x128xf32, #tpu.memory_space<vmem>>, vector<16x128xf32>,
    } else {
    }
    return
  }
  func.func @transform_0(%arg0: i32) -> (i32, i32) {
    %c0_i32 = arith.constant 0 : i32
    %c0_i32_0 = arith.constant 0 : i32
    %c0_i32_1 = arith.constant 0 : i32
    return %c0_i32, %c0_i32_0 : i32, i32
  }
  func.func @transform_1(%arg0: i32) -> (i32, i32) {
    %c0_i32 = arith.constant 0 : i32
    %c0_i32_0 = arith.constant 0 : i32
    %c0_i32_1 = arith.constant 0 : i32
    return %c0_i32, %c0_i32_0 : i32, i32
  }
  func.func @transform_2(%arg0: i32) -> (i32, i32, i32) {
    %c0_i32 = arith.constant 0 : i32
    %c0_i32_0 = arith.constant 0 : i32
    %c0_i32_1 = arith.constant 0 : i32
    %c0_i32_2 = arith.constant 0 : i32
    return %c0_i32, %c0_i32_0, %c0_i32_1 : i32, i32, i32
  }
  func.func @transform_3(%arg0: i32) -> (i32, i32, i32) {
    %c0_i32 = arith.constant 0 : i32
    %c0_i32_0 = arith.constant 0 : i32
    %c0_i32_1 = arith.constant 0 : i32
    %c0_i32_2 = arith.constant 0 : i32
    return %c0_i32, %c0_i32_0, %c0_i32_1 : i32, i32, i32
  }
  func.func @transform_4(%arg0: i32) -> (i32, i32, i32) {
    %c0_i32 = arith.constant 0 : i32
    %c0_i32_0 = arith.constant 0 : i32
    %c0_i32_1 = arith.constant 0 : i32
    return %arg0, %c0_i32, %c0_i32_0 : i32, i32, i32
  }
  func.func @transform_5(%arg0: i32) -> (i32, i32, i32) {
    %c0_i32 = arith.constant 0 : i32
    %c0_i32_0 = arith.constant 0 : i32
    %c0_i32_1 = arith.constant 0 : i32
    return %arg0, %c0_i32, %c0_i32_0 : i32, i32, i32
  }
  func.func @transform_6(%arg0: i32) -> (i32, i32, i32) {
    %c0_i32 = arith.constant 0 : i32
    %c0_i32_0 = arith.constant 0 : i32
    %c0_i32_1 = arith.constant 0 : i32
    return %arg0, %c0_i32, %c0_i32_0 : i32, i32, i32
  }
  func.func @transform_7(%arg0: i32) -> (i32, i32, i32) {
    %c0_i32 = arith.constant 0 : i32
    %c0_i32_0 = arith.constant 0 : i32
    %c0_i32_1 = arith.constant 0 : i32
    return %arg0, %c0_i32, %c0_i32_0 : i32, i32, i32
  }
  func.func @transform_8(%arg0: i32) -> (i32, i32, i32) {
    %c0_i32 = arith.constant 0 : i32
    %c0_i32_0 = arith.constant 0 : i32
    %c0_i32_1 = arith.constant 0 : i32
    return %arg0, %c0_i32, %c0_i32_0 : i32, i32, i32
  }
  func.func @transform_9(%arg0: i32) -> (i32, i32, i32) {
    %c0_i32 = arith.constant 0 : i32
    %c0_i32_0 = arith.constant 0 : i32
    %c0_i32_1 = arith.constant 0 : i32
    return %arg0, %c0_i32, %c0_i32_0 : i32, i32, i32
  }
  func.func @transform_10(%arg0: i32) -> (i32, i32, i32) {
    %c0_i32 = arith.constant 0 : i32
    %c0_i32_0 = arith.constant 0 : i32
    %c0_i32_1 = arith.constant 0 : i32
    return %arg0, %c0_i32, %c0_i32_0 : i32, i32, i32
  }
  func.func @transform_11(%arg0: i32) -> (i32, i32, i32) {
    %c0_i32 = arith.constant 0 : i32
    %c0_i32_0 = arith.constant 0 : i32
    %c0_i32_1 = arith.constant 0 : i32
    return %arg0, %c0_i32, %c0_i32_0 : i32, i32, i32
  }
  func.func @transform_12(%arg0: i32) -> (i32, i32, i32) {
    %c0_i32 = arith.constant 0 : i32
    %c0_i32_0 = arith.constant 0 : i32
    %c0_i32_1 = arith.constant 0 : i32
    return %arg0, %c0_i32, %c0_i32_0 : i32, i32, i32
  }
  func.func @transform_13(%arg0: i32) -> (i32, i32, i32) {
    %c0_i32 = arith.constant 0 : i32
    %c0_i32_0 = arith.constant 0 : i32
    %c0_i32_1 = arith.constant 0 : i32
    return %arg0, %c0_i32, %c0_i32_0 : i32, i32, i32
  }
  func.func @transform_14(%arg0: i32) -> (i32, i32, i32) {
    %c0_i32 = arith.constant 0 : i32
    %c0_i32_0 = arith.constant 0 : i32
    %c0_i32_1 = arith.constant 0 : i32
    return %arg0, %c0_i32, %c0_i32_0 : i32, i32, i32
  }
  func.func @transform_15(%arg0: i32) -> (i32, i32, i32) {
    %c0_i32 = arith.constant 0 : i32
    %c0_i32_0 = arith.constant 0 : i32
    %c0_i32_1 = arith.constant 0 : i32
    return %arg0, %c0_i32, %c0_i32_0 : i32, i32, i32
  }
  func.func @transform_16(%arg0: i32) -> (i32, i32, i32) {
    %c0_i32 = arith.constant 0 : i32
    %c0_i32_0 = arith.constant 0 : i32
    %c0_i32_1 = arith.constant 0 : i32
    return %arg0, %c0_i32, %c0_i32_0 : i32, i32, i32
  }
  func.func @transform_17(%arg0: i32) -> (i32, i32, i32) {
    %c0_i32 = arith.constant 0 : i32
    %c0_i32_0 = arith.constant 0 : i32
    %c0_i32_1 = arith.constant 0 : i32
    return %arg0, %c0_i32, %c0_i32_0 : i32, i32, i32
  }
  func.func @transform_18(%arg0: i32) -> (i32, i32, i32) {
    %c0_i32 = arith.constant 0 : i32
    %c0_i32_0 = arith.constant 0 : i32
    %c0_i32_1 = arith.constant 0 : i32
    return %arg0, %c0_i32, %c0_i32_0 : i32, i32, i32
  }
  func.func @transform_19(%arg0: i32) -> (i32, i32, i32) {
    %c0_i32 = arith.constant 0 : i32
    %c0_i32_0 = arith.constant 0 : i32
    %c0_i32_1 = arith.constant 0 : i32
    return %arg0, %c0_i32, %c0_i32_0 : i32, i32, i32
  }
  func.func @transform_20(%arg0: i32) -> (i32, i32) {
    %c0_i32 = arith.constant 0 : i32
    %c0_i32_0 = arith.constant 0 : i32
    %c0_i32_1 = arith.constant 0 : i32
    return %c0_i32, %c0_i32_0 : i32, i32
  }
  func.func @transform_21(%arg0: i32) -> (i32, i32) {
    %c0_i32 = arith.constant 0 : i32
    %c0_i32_0 = arith.constant 0 : i32
    %c0_i32_1 = arith.constant 0 : i32
    return %c0_i32, %c0_i32_0 : i32, i32
  }
  func.func @transform_22(%arg0: i32) -> (i32, i32) {
    %c0_i32 = arith.constant 0 : i32
    %c0_i32_0 = arith.constant 0 : i32
    %c0_i32_1 = arith.constant 0 : i32
    return %c0_i32, %c0_i32_0 : i32, i32
  }
}

</mosaic_0001>

<llo_original>
// kernel: tpu_custom_call.1
$region0: #{tpu_custom_call.1}
  #allocation0 [shape = 'u32[]', space=smem, size = 0x4, offset = 0x4, fixed_abs, tag = 'smem constant byte address 0x4 - core index']
  #allocation1 [shape = 'u32[144,128]{1,0:T(1,128)}', space=vmem, size = 0x12000, scoped, tag = 'internal scratch']
  #allocation2 [shape = 'f32[16,128]{1,0:T(8,128)}', space=vmem, size = 0x2000, scoped, tag = 'scratch operand']
  %s0 = inlined_call_operand.vmem [shape: f32[16,128], index: 0, kind: input, shape index: {}]
  %s1 = inlined_call_operand.hbm [shape: bf16[16,128], index: 1, kind: input, shape index: {}]
  %s2 = inlined_call_operand.vmem [shape: f32[2,8,8], index: 2, kind: input, shape index: {}]
  %s3 = inlined_call_operand.hbm [shape: f32[2,8,8], index: 3, kind: input, shape index: {}]
  %s4 = inlined_call_operand.hbm [shape: bf16[2,128,384], index: 4, kind: input, shape index: {}]
  %s5 = inlined_call_operand.vmem [shape: f32[2,1,384], index: 5, kind: input, shape index: {}]
  %s6 = inlined_call_operand.hbm [shape: bf16[2,128,128], index: 6, kind: input, shape index: {}]
  %s7 = inlined_call_operand.hbm [shape: f32[2,1,128], index: 7, kind: input, shape index: {}]
  %s8 = inlined_call_operand.hbm [shape: bf16[2,128,128], index: 8, kind: input, shape index: {}]
  %s9 = inlined_call_operand.vmem [shape: f32[2,1,128], index: 9, kind: input, shape index: {}]
  %s10 = inlined_call_operand.hbm [shape: bf16[2,128,256], index: 10, kind: input, shape index: {}]
  %s11 = inlined_call_operand.vmem [shape: f32[2,1,256], index: 11, kind: input, shape index: {}]
  %s12 = inlined_call_operand.hbm [shape: bf16[2,128,128], index: 12, kind: input, shape index: {}]
  %s13 = inlined_call_operand.vmem [shape: f32[2,1,128], index: 13, kind: input, shape index: {}]
  %s14 = inlined_call_operand.hbm [shape: bf16[2,128,256], index: 14, kind: input, shape index: {}]
  %s15 = inlined_call_operand.vmem [shape: f32[2,1,256], index: 15, kind: input, shape index: {}]
  %s16 = inlined_call_operand.hbm [shape: bf16[2,256,128], index: 16, kind: input, shape index: {}]
  %s17 = inlined_call_operand.vmem [shape: f32[2,1,128], index: 17, kind: input, shape index: {}]
  %s18 = inlined_call_operand.vmem [shape: f32[2,3,128], index: 18, kind: input, shape index: {}]
  %s19 = inlined_call_operand.vmem [shape: f32[2,3,128], index: 19, kind: input, shape index: {}]
  %s20 = inlined_call_operand.vmem [shape: f32[1,128], index: 20, kind: input, shape index: {}]
  %s21 = inlined_call_operand.vmem [shape: f32[1,128], index: 21, kind: input, shape index: {}]
  %s22 = inlined_call_operand.hbm [shape: f32[16,128], index: 22, kind: output, shape index: {}]
  %s23 = sld [smem:[#allocation0]]
  $region169: #{tpu_custom_call.1} parent=0
    _
  %s25 = ssub.s32 1, %s23
  %s26 = scalar_select 0, %s25, %s23
  $region1: #{tpu_custom_call.1} parent=0
    #allocation3 [shape = 'u8[4096]{0}', space=vmem, size = 0x1000, scoped, tag = 'input window, operand 1, single buffered']
    #allocation4 [shape = 's32[2]{0}', space=sflag, size = 0x8, scoped, tag = 'scoped memory for tpu_custom_call.1']
    #allocation5 [shape = 's32[2]{0}', space=sflag, size = 0x8, scoped, tag = 'scoped memory for tpu_custom_call.1']
    #allocation6 [shape = 'u8[8192]{0}', space=vmem, size = 0x2000, scoped, tag = 'input window, operand 3, single buffered']
    #allocation7 [shape = 's32[1]{0}', space=sflag, size = 0x4, scoped, tag = 'scoped memory for tpu_custom_call.1']
    #allocation8 [shape = 'u8[196608]{0}', space=vmem, size = 0x30000, scoped, tag = 'input window, operand 4']
    #allocation9 [shape = 'u8[65536]{0}', space=vmem, size = 0x10000, scoped, tag = 'input window, operand 6']
    #allocation10 [shape = 'u8[1024]{0}', space=vmem, size = 0x400, scoped, tag = 'input window, operand 7']
    #allocation11 [shape = 'u8[65536]{0}', space=vmem, size = 0x10000, scoped, tag = 'input window, operand 8']
    #allocation12 [shape = 'u8[131072]{0}', space=vmem, size = 0x20000, scoped, tag = 'input window, operand 10']
    #allocation13 [shape = 'u8[65536]{0}', space=vmem, size = 0x10000, scoped, tag = 'input window, operand 12']
    #allocation14 [shape = 'u8[131072]{0}', space=vmem, size = 0x20000, scoped, tag = 'input window, operand 14']
    #allocation15 [shape = 'u8[131072]{0}', space=vmem, size = 0x20000, scoped, tag = 'input window, operand 16']
    #allocation16 [shape = 'u8[8192]{0}', space=vmem, size = 0x2000, scoped, tag = 'output window, operand 0, single buffered']
    %27 = vsyncpa [#allocation4], 0
    %28 = vsyncpa [#allocation7], 0
    %29 = vsyncpa [#allocation5], 0
    loop: start=0, step=1, limit=4
    $region2: #{tpu_custom_call.1} parent=1 // loop_pre_header
      _
    $region3: #{tpu_custom_call.1} parent=1 // loop_header
      %s31 = sphi 0, %s35
      %p32 = scmp.ge.s32.totalorder %s31, 4
      %s39 = sphi 0, %s39
      %s41 = sphi 0, %s39
      %s42 = sphi 0, %s41
      %s56 = sphi 0, %s42
      %s60 = sphi 0, %s60
      %s62 = sphi 0, %s60
      %s63 = sphi 0, %s62
      %s77 = sphi 0, %s63
      %s81 = sphi 0, %s81
      %s83 = sphi 0, %s81
      %s84 = sphi 0, %s83
      %s98 = sphi 0, %s84
      %s102 = sphi 0, %s102
      %s104 = sphi 0, %s102
      %s105 = sphi 0, %s104
      %s119 = sphi 0, %s105
      %s125 = sphi 0, %s127
      %s128 = sphi 0, %s125
      %s129 = sphi 0, %s128
      %s145 = sphi 0, %s129
      %s151 = sphi 0, %s153
      %s154 = sphi 0, %s151
      %s155 = sphi 0, %s154
      %s171 = sphi 0, %s155
      %s177 = sphi 0, %s179
      %s180 = sphi 0, %s177
      %s181 = sphi 0, %s180
      %s197 = sphi 0, %s181
      %s203 = sphi 0, %s205
      %s206 = sphi 0, %s203
      %s207 = sphi 0, %s206
      %s223 = sphi 0, %s207
      %s229 = sphi 0, %s231
      %s232 = sphi 0, %s229
      %s233 = sphi 0, %s232
      %s249 = sphi 0, %s233
      %s255 = sphi 0, %s257
      %s258 = sphi 0, %s255
      %s259 = sphi 0, %s258
      %s275 = sphi 0, %s259
      %s281 = sphi 0, %s283
      %s284 = sphi 0, %s281
      %s285 = sphi 0, %s284
      %s301 = sphi 0, %s285
      %s307 = sphi 0, %s309
      %s310 = sphi 0, %s307
      %s311 = sphi 0, %s310
      %s327 = sphi 0, %s311
      %s333 = sphi 0, %s335
      %s336 = sphi 0, %s333
      %s337 = sphi 0, %s336
      %s353 = sphi 0, %s337
      %s359 = sphi 0, %s361
      %s362 = sphi 0, %s359
      %s363 = sphi 0, %s362
      %s379 = sphi 0, %s363
      %s385 = sphi 0, %s387
      %s388 = sphi 0, %s385
      %s389 = sphi 0, %s388
      %s405 = sphi 0, %s389
      %s411 = sphi 0, %s413
      %s414 = sphi 0, %s411
      %s415 = sphi 0, %s414
      %s431 = sphi 0, %s415
      %s437 = sphi 0, %s439
      %s440 = sphi 0, %s437
      %s441 = sphi 0, %s440
      %s457 = sphi 0, %s441
      %s463 = sphi 0, %s465
      %s466 = sphi 0, %s463
      %s467 = sphi 0, %s466
      %s483 = sphi 0, %s467
      %s489 = sphi 0, %s491
      %s492 = sphi 0, %s489
      %s493 = sphi 0, %s492
      %s509 = sphi 0, %s493
      %s515 = sphi 0, %s517
      %s518 = sphi 0, %s515
      %s519 = sphi 0, %s518
      %s535 = sphi 0, %s519
      %s539 = sphi 0, %s539
      %s541 = sphi 0, %s539
      %s542 = sphi 0, %s541
      %s556 = sphi 0, %s542
      %s560 = sphi 0, %s560
      %s562 = sphi 0, %s560
      %s563 = sphi 0, %s562
      %s577 = sphi 0, %s563
      %s581 = sphi 0, %s581
      %s583 = sphi 0, %s581
      %s584 = sphi 0, %s583
      %s598 = sphi 0, %s584
    $region4: #{tpu_custom_call.1} parent=1 // loop_header_branch
      %34 = sbr.rel (%p32) target = $region8
    $region5: #{tpu_custom_call.1} parent=1 // loop_body
      %s36 = ssub.s32 %s31, 1
      %s37 = ssub.s32 %s31, 2
      %s38 = sadd.s32 %s31, 1
      %s40 = sadd.s32 %s39, 1
      %p43 = scmp.eq.s32.totalorder %s31, 1
      %p44 = scmp.ne.s32.totalorder %s39, %s41
      %p45 = scmp.eq.s32.totalorder %s31, 0
      %p46 = por %p44, %p45
      %p47 = scmp.ne.s32.totalorder %s39, %s41
      %p48 = scmp.eq.s32.totalorder %s36, 1
      %p49 = por %p47, %p48
      %p50 = scmp.ne.s32.totalorder %s41, %s42
      %p51 = scmp.eq.s32.totalorder %s36, 0
      %p52 = por %p50, %p51
      %p53 = scmp.ne.s32.totalorder %s41, %s42
      %p54 = scmp.eq.s32.totalorder %s37, 1
      %p55 = por %p53, %p54
      %p57 = scmp.ne.s32.totalorder %s42, %s56
      %p58 = scmp.eq.s32.totalorder %s37, 0
      %p59 = por %p57, %p58
      %s61 = sadd.s32 %s60, 1
      %p64 = scmp.eq.s32.totalorder %s31, 1
      %p65 = scmp.ne.s32.totalorder %s60, %s62
      %p66 = scmp.eq.s32.totalorder %s31, 0
      %p67 = por %p65, %p66
      %p68 = scmp.ne.s32.totalorder %s60, %s62
      %p69 = scmp.eq.s32.totalorder %s36, 1
      %p70 = por %p68, %p69
      %p71 = scmp.ne.s32.totalorder %s62, %s63
      %p72 = scmp.eq.s32.totalorder %s36, 0
      %p73 = por %p71, %p72
      %p74 = scmp.ne.s32.totalorder %s62, %s63
      %p75 = scmp.eq.s32.totalorder %s37, 1
      %p76 = por %p74, %p75
      %p78 = scmp.ne.s32.totalorder %s63, %s77
      %p79 = scmp.eq.s32.totalorder %s37, 0
      %p80 = por %p78, %p79
      %s82 = sadd.s32 %s81, 1
      %p85 = scmp.eq.s32.totalorder %s31, 1
      %p86 = scmp.ne.s32.totalorder %s81, %s83
      %p87 = scmp.eq.s32.totalorder %s31, 0
      %p88 = por %p86, %p87
      %p89 = scmp.ne.s32.totalorder %s81, %s83
      %p90 = scmp.eq.s32.totalorder %s36, 1
      %p91 = por %p89, %p90
      %p92 = scmp.ne.s32.totalorder %s83, %s84
      %p93 = scmp.eq.s32.totalorder %s36, 0
      %p94 = por %p92, %p93
      %p95 = scmp.ne.s32.totalorder %s83, %s84
      %p96 = scmp.eq.s32.totalorder %s37, 1
      %p97 = por %p95, %p96
      %p99 = scmp.ne.s32.totalorder %s84, %s98
      %p100 = scmp.eq.s32.totalorder %s37, 0
      %p101 = por %p99, %p100
      %s103 = sadd.s32 %s102, 1
      %p106 = scmp.eq.s32.totalorder %s31, 1
      %p107 = scmp.ne.s32.totalorder %s102, %s104
      %p108 = scmp.eq.s32.totalorder %s31, 0
      %p109 = por %p107, %p108
      %p110 = scmp.ne.s32.totalorder %s102, %s104
      %p111 = scmp.eq.s32.totalorder %s36, 1
      %p112 = por %p110, %p111
      %p113 = scmp.ne.s32.totalorder %s104, %s105
      %p114 = scmp.eq.s32.totalorder %s36, 0
      %p115 = por %p113, %p114
      %p116 = scmp.ne.s32.totalorder %s104, %s105
      %p117 = scmp.eq.s32.totalorder %s37, 1
      %p118 = por %p116, %p117
      %p120 = scmp.ne.s32.totalorder %s105, %s119
      %p121 = scmp.eq.s32.totalorder %s37, 0
      %p122 = por %p120, %p121
      %s123 = ssub.s32 %s31, %s38
      %p124 = scmp.eq.s32.totalorder %s123, 0
      %s126 = sadd.s32 %s125, 1
      %s127 = scalar_select %p124, %s125, %s126
      %p130 = pneg %p124
      %p131 = scmp.eq.s32.totalorder %s31, 1
      %p132 = por %p130, %p131
      %p133 = scmp.ne.s32.totalorder %s125, %s128
      %p134 = scmp.eq.s32.totalorder %s31, 0
      %p135 = por %p133, %p134
      %p136 = scmp.ne.s32.totalorder %s125, %s128
      %p137 = scmp.eq.s32.totalorder %s36, 1
      %p138 = por %p136, %p137
      %p139 = scmp.ne.s32.totalorder %s128, %s129
      %p140 = scmp.eq.s32.totalorder %s36, 0
      %p141 = por %p139, %p140
      %p142 = scmp.ne.s32.totalorder %s128, %s129
      %p143 = scmp.eq.s32.totalorder %s37, 1
      %p144 = por %p142, %p143
      %p146 = scmp.ne.s32.totalorder %s129, %s145
      %p147 = scmp.eq.s32.totalorder %s37, 0
      %p148 = por %p146, %p147
      %s149 = ssub.s32 %s31, %s38
      %p150 = scmp.eq.s32.totalorder %s149, 0
      %s152 = sadd.s32 %s151, 1
      %s153 = scalar_select %p150, %s151, %s152
      %p156 = pneg %p150
      %p157 = scmp.eq.s32.totalorder %s31, 1
      %p158 = por %p156, %p157
      %p159 = scmp.ne.s32.totalorder %s151, %s154
      %p160 = scmp.eq.s32.totalorder %s31, 0
      %p161 = por %p159, %p160
      %p162 = scmp.ne.s32.totalorder %s151, %s154
      %p163 = scmp.eq.s32.totalorder %s36, 1
      %p164 = por %p162, %p163
      %p165 = scmp.ne.s32.totalorder %s154, %s155
      %p166 = scmp.eq.s32.totalorder %s36, 0
      %p167 = por %p165, %p166
      %p168 = scmp.ne.s32.totalorder %s154, %s155
      %p169 = scmp.eq.s32.totalorder %s37, 1
      %p170 = por %p168, %p169
      %p172 = scmp.ne.s32.totalorder %s155, %s171
      %p173 = scmp.eq.s32.totalorder %s37, 0
      %p174 = por %p172, %p173
      %s175 = ssub.s32 %s31, %s38
      %p176 = scmp.eq.s32.totalorder %s175, 0
      %s178 = sadd.s32 %s177, 1
      %s179 = scalar_select %p176, %s177, %s178
      %p182 = pneg %p176
      %p183 = scmp.eq.s32.totalorder %s31, 1
      %p184 = por %p182, %p183
      %p185 = scmp.ne.s32.totalorder %s177, %s180
      %p186 = scmp.eq.s32.totalorder %s31, 0
      %p187 = por %p185, %p186
      %p188 = scmp.ne.s32.totalorder %s177, %s180
      %p189 = scmp.eq.s32.totalorder %s36, 1
      %p190 = por %p188, %p189
      %p191 = scmp.ne.s32.totalorder %s180, %s181
      %p192 = scmp.eq.s32.totalorder %s36, 0
      %p193 = por %p191, %p192
      %p194 = scmp.ne.s32.totalorder %s180, %s181
      %p195 = scmp.eq.s32.totalorder %s37, 1
      %p196 = por %p194, %p195
      %p198 = scmp.ne.s32.totalorder %s181, %s197
      %p199 = scmp.eq.s32.totalorder %s37, 0
      %p200 = por %p198, %p199
      %s201 = ssub.s32 %s31, %s38
      %p202 = scmp.eq.s32.totalorder %s201, 0
      %s204 = sadd.s32 %s203, 1
      %s205 = scalar_select %p202, %s203, %s204
      %p208 = pneg %p202
      %p209 = scmp.eq.s32.totalorder %s31, 1
      %p210 = por %p208, %p209
      %p211 = scmp.ne.s32.totalorder %s203, %s206
      %p212 = scmp.eq.s32.totalorder %s31, 0
      %p213 = por %p211, %p212
      %p214 = scmp.ne.s32.totalorder %s203, %s206
      %p215 = scmp.eq.s32.totalorder %s36, 1
      %p216 = por %p214, %p215
      %p217 = scmp.ne.s32.totalorder %s206, %s207
      %p218 = scmp.eq.s32.totalorder %s36, 0
      %p219 = por %p217, %p218
      %p220 = scmp.ne.s32.totalorder %s206, %s207
      %p221 = scmp.eq.s32.totalorder %s37, 1
      %p222 = por %p220, %p221
      %p224 = scmp.ne.s32.totalorder %s207, %s223
      %p225 = scmp.eq.s32.totalorder %s37, 0
      %p226 = por %p224, %p225
      %s227 = ssub.s32 %s31, %s38
      %p228 = scmp.eq.s32.totalorder %s227, 0
      %s230 = sadd.s32 %s229, 1
      %s231 = scalar_select %p228, %s229, %s230
      %p234 = pneg %p228
      %p235 = scmp.eq.s32.totalorder %s31, 1
      %p236 = por %p234, %p235
      %p237 = scmp.ne.s32.totalorder %s229, %s232
      %p238 = scmp.eq.s32.totalorder %s31, 0
      %p239 = por %p237, %p238
      %p240 = scmp.ne.s32.totalorder %s229, %s232
      %p241 = scmp.eq.s32.totalorder %s36, 1
      %p242 = por %p240, %p241
      %p243 = scmp.ne.s32.totalorder %s232, %s233
      %p244 = scmp.eq.s32.totalorder %s36, 0
      %p245 = por %p243, %p244
      %p246 = scmp.ne.s32.totalorder %s232, %s233
      %p247 = scmp.eq.s32.totalorder %s37, 1
      %p248 = por %p246, %p247
      %p250 = scmp.ne.s32.totalorder %s233, %s249
      %p251 = scmp.eq.s32.totalorder %s37, 0
      %p252 = por %p250, %p251
      %s253 = ssub.s32 %s31, %s38
      %p254 = scmp.eq.s32.totalorder %s253, 0
      %s256 = sadd.s32 %s255, 1
      %s257 = scalar_select %p254, %s255, %s256
      %p260 = pneg %p254
      %p261 = scmp.eq.s32.totalorder %s31, 1
      %p262 = por %p260, %p261
      %p263 = scmp.ne.s32.totalorder %s255, %s258
      %p264 = scmp.eq.s32.totalorder %s31, 0
      %p265 = por %p263, %p264
      %p266 = scmp.ne.s32.totalorder %s255, %s258
      %p267 = scmp.eq.s32.totalorder %s36, 1
      %p268 = por %p266, %p267
      %p269 = scmp.ne.s32.totalorder %s258, %s259
      %p270 = scmp.eq.s32.totalorder %s36, 0
      %p271 = por %p269, %p270
      %p272 = scmp.ne.s32.totalorder %s258, %s259
      %p273 = scmp.eq.s32.totalorder %s37, 1
      %p274 = por %p272, %p273
      %p276 = scmp.ne.s32.totalorder %s259, %s275
      %p277 = scmp.eq.s32.totalorder %s37, 0
      %p278 = por %p276, %p277
      %s279 = ssub.s32 %s31, %s38
      %p280 = scmp.eq.s32.totalorder %s279, 0
      %s282 = sadd.s32 %s281, 1
      %s283 = scalar_select %p280, %s281, %s282
      %p286 = pneg %p280
      %p287 = scmp.eq.s32.totalorder %s31, 1
      %p288 = por %p286, %p287
      %p289 = scmp.ne.s32.totalorder %s281, %s284
      %p290 = scmp.eq.s32.totalorder %s31, 0
      %p291 = por %p289, %p290
      %p292 = scmp.ne.s32.totalorder %s281, %s284
      %p293 = scmp.eq.s32.totalorder %s36, 1
      %p294 = por %p292, %p293
      %p295 = scmp.ne.s32.totalorder %s284, %s285
      %p296 = scmp.eq.s32.totalorder %s36, 0
      %p297 = por %p295, %p296
      %p298 = scmp.ne.s32.totalorder %s284, %s285
      %p299 = scmp.eq.s32.totalorder %s37, 1
      %p300 = por %p298, %p299
      %p302 = scmp.ne.s32.totalorder %s285, %s301
      %p303 = scmp.eq.s32.totalorder %s37, 0
      %p304 = por %p302, %p303
      %s305 = ssub.s32 %s31, %s38
      %p306 = scmp.eq.s32.totalorder %s305, 0
      %s308 = sadd.s32 %s307, 1
      %s309 = scalar_select %p306, %s307, %s308
      %p312 = pneg %p306
      %p313 = scmp.eq.s32.totalorder %s31, 1
      %p314 = por %p312, %p313
      %p315 = scmp.ne.s32.totalorder %s307, %s310
      %p316 = scmp.eq.s32.totalorder %s31, 0
      %p317 = por %p315, %p316
      %p318 = scmp.ne.s32.totalorder %s307, %s310
      %p319 = scmp.eq.s32.totalorder %s36, 1
      %p320 = por %p318, %p319
      %p321 = scmp.ne.s32.totalorder %s310, %s311
      %p322 = scmp.eq.s32.totalorder %s36, 0
      %p323 = por %p321, %p322
      %p324 = scmp.ne.s32.totalorder %s310, %s311
      %p325 = scmp.eq.s32.totalorder %s37, 1
      %p326 = por %p324, %p325
      %p328 = scmp.ne.s32.totalorder %s311, %s327
      %p329 = scmp.eq.s32.totalorder %s37, 0
      %p330 = por %p328, %p329
      %s331 = ssub.s32 %s31, %s38
      %p332 = scmp.eq.s32.totalorder %s331, 0
      %s334 = sadd.s32 %s333, 1
      %s335 = scalar_select %p332, %s333, %s334
      %p338 = pneg %p332
      %p339 = scmp.eq.s32.totalorder %s31, 1
      %p340 = por %p338, %p339
      %p341 = scmp.ne.s32.totalorder %s333, %s336
      %p342 = scmp.eq.s32.totalorder %s31, 0
      %p343 = por %p341, %p342
      %p344 = scmp.ne.s32.totalorder %s333, %s336
      %p345 = scmp.eq.s32.totalorder %s36, 1
      %p346 = por %p344, %p345
      %p347 = scmp.ne.s32.totalorder %s336, %s337
      %p348 = scmp.eq.s32.totalorder %s36, 0
      %p349 = por %p347, %p348
      %p350 = scmp.ne.s32.totalorder %s336, %s337
      %p351 = scmp.eq.s32.totalorder %s37, 1
      %p352 = por %p350, %p351
      %p354 = scmp.ne.s32.totalorder %s337, %s353
      %p355 = scmp.eq.s32.totalorder %s37, 0
      %p356 = por %p354, %p355
      %s357 = ssub.s32 %s31, %s38
      %p358 = scmp.eq.s32.totalorder %s357, 0
      %s360 = sadd.s32 %s359, 1
      %s361 = scalar_select %p358, %s359, %s360
      %p364 = pneg %p358
      %p365 = scmp.eq.s32.totalorder %s31, 1
      %p366 = por %p364, %p365
      %p367 = scmp.ne.s32.totalorder %s359, %s362
      %p368 = scmp.eq.s32.totalorder %s31, 0
      %p369 = por %p367, %p368
      %p370 = scmp.ne.s32.totalorder %s359, %s362
      %p371 = scmp.eq.s32.totalorder %s36, 1
      %p372 = por %p370, %p371
      %p373 = scmp.ne.s32.totalorder %s362, %s363
      %p374 = scmp.eq.s32.totalorder %s36, 0
      %p375 = por %p373, %p374
      %p376 = scmp.ne.s32.totalorder %s362, %s363
      %p377 = scmp.eq.s32.totalorder %s37, 1
      %p378 = por %p376, %p377
      %p380 = scmp.ne.s32.totalorder %s363, %s379
      %p381 = scmp.eq.s32.totalorder %s37, 0
      %p382 = por %p380, %p381
      %s383 = ssub.s32 %s31, %s38
      %p384 = scmp.eq.s32.totalorder %s383, 0
      %s386 = sadd.s32 %s385, 1
      %s387 = scalar_select %p384, %s385, %s386
      %p390 = pneg %p384
      %p391 = scmp.eq.s32.totalorder %s31, 1
      %p392 = por %p390, %p391
      %p393 = scmp.ne.s32.totalorder %s385, %s388
      %p394 = scmp.eq.s32.totalorder %s31, 0
      %p395 = por %p393, %p394
      %p396 = scmp.ne.s32.totalorder %s385, %s388
      %p397 = scmp.eq.s32.totalorder %s36, 1
      %p398 = por %p396, %p397
      %p399 = scmp.ne.s32.totalorder %s388, %s389
      %p400 = scmp.eq.s32.totalorder %s36, 0
      %p401 = por %p399, %p400
      %p402 = scmp.ne.s32.totalorder %s388, %s389
      %p403 = scmp.eq.s32.totalorder %s37, 1
      %p404 = por %p402, %p403
      %p406 = scmp.ne.s32.totalorder %s389, %s405
      %p407 = scmp.eq.s32.totalorder %s37, 0
      %p408 = por %p406, %p407
      %s409 = ssub.s32 %s31, %s38
      %p410 = scmp.eq.s32.totalorder %s409, 0
      %s412 = sadd.s32 %s411, 1
      %s413 = scalar_select %p410, %s411, %s412
      %p416 = pneg %p410
      %p417 = scmp.eq.s32.totalorder %s31, 1
      %p418 = por %p416, %p417
      %p419 = scmp.ne.s32.totalorder %s411, %s414
      %p420 = scmp.eq.s32.totalorder %s31, 0
      %p421 = por %p419, %p420
      %p422 = scmp.ne.s32.totalorder %s411, %s414
      %p423 = scmp.eq.s32.totalorder %s36, 1
      %p424 = por %p422, %p423
      %p425 = scmp.ne.s32.totalorder %s414, %s415
      %p426 = scmp.eq.s32.totalorder %s36, 0
      %p427 = por %p425, %p426
      %p428 = scmp.ne.s32.totalorder %s414, %s415
      %p429 = scmp.eq.s32.totalorder %s37, 1
      %p430 = por %p428, %p429
      %p432 = scmp.ne.s32.totalorder %s415, %s431
      %p433 = scmp.eq.s32.totalorder %s37, 0
      %p434 = por %p432, %p433
      %s435 = ssub.s32 %s31, %s38
      %p436 = scmp.eq.s32.totalorder %s435, 0
      %s438 = sadd.s32 %s437, 1
      %s439 = scalar_select %p436, %s437, %s438
      %p442 = pneg %p436
      %p443 = scmp.eq.s32.totalorder %s31, 1
      %p444 = por %p442, %p443
      %p445 = scmp.ne.s32.totalorder %s437, %s440
      %p446 = scmp.eq.s32.totalorder %s31, 0
      %p447 = por %p445, %p446
      %p448 = scmp.ne.s32.totalorder %s437, %s440
      %p449 = scmp.eq.s32.totalorder %s36, 1
      %p450 = por %p448, %p449
      %p451 = scmp.ne.s32.totalorder %s440, %s441
      %p452 = scmp.eq.s32.totalorder %s36, 0
      %p453 = por %p451, %p452
      %p454 = scmp.ne.s32.totalorder %s440, %s441
      %p455 = scmp.eq.s32.totalorder %s37, 1
      %p456 = por %p454, %p455
      %p458 = scmp.ne.s32.totalorder %s441, %s457
      %p459 = scmp.eq.s32.totalorder %s37, 0
      %p460 = por %p458, %p459
      %s461 = ssub.s32 %s31, %s38
      %p462 = scmp.eq.s32.totalorder %s461, 0
      %s464 = sadd.s32 %s463, 1
      %s465 = scalar_select %p462, %s463, %s464
      %p468 = pneg %p462
      %p469 = scmp.eq.s32.totalorder %s31, 1
      %p470 = por %p468, %p469
      %p471 = scmp.ne.s32.totalorder %s463, %s466
      %p472 = scmp.eq.s32.totalorder %s31, 0
      %p473 = por %p471, %p472
      %p474 = scmp.ne.s32.totalorder %s463, %s466
      %p475 = scmp.eq.s32.totalorder %s36, 1
      %p476 = por %p474, %p475
      %p477 = scmp.ne.s32.totalorder %s466, %s467
      %p478 = scmp.eq.s32.totalorder %s36, 0
      %p479 = por %p477, %p478
      %p480 = scmp.ne.s32.totalorder %s466, %s467
      %p481 = scmp.eq.s32.totalorder %s37, 1
      %p482 = por %p480, %p481
      %p484 = scmp.ne.s32.totalorder %s467, %s483
      %p485 = scmp.eq.s32.totalorder %s37, 0
      %p486 = por %p484, %p485
      %s487 = ssub.s32 %s31, %s38
      %p488 = scmp.eq.s32.totalorder %s487, 0
      %s490 = sadd.s32 %s489, 1
      %s491 = scalar_select %p488, %s489, %s490
      %p494 = pneg %p488
      %p495 = scmp.eq.s32.totalorder %s31, 1
      %p496 = por %p494, %p495
      %p497 = scmp.ne.s32.totalorder %s489, %s492
      %p498 = scmp.eq.s32.totalorder %s31, 0
      %p499 = por %p497, %p498
      %p500 = scmp.ne.s32.totalorder %s489, %s492
      %p501 = scmp.eq.s32.totalorder %s36, 1
      %p502 = por %p500, %p501
      %p503 = scmp.ne.s32.totalorder %s492, %s493
      %p504 = scmp.eq.s32.totalorder %s36, 0
      %p505 = por %p503, %p504
      %p506 = scmp.ne.s32.totalorder %s492, %s493
      %p507 = scmp.eq.s32.totalorder %s37, 1
      %p508 = por %p506, %p507
      %p510 = scmp.ne.s32.totalorder %s493, %s509
      %p511 = scmp.eq.s32.totalorder %s37, 0
      %p512 = por %p510, %p511
      %s513 = ssub.s32 %s31, %s38
      %p514 = scmp.eq.s32.totalorder %s513, 0
      %s516 = sadd.s32 %s515, 1
      %s517 = scalar_select %p514, %s515, %s516
      %p520 = pneg %p514
      %p521 = scmp.eq.s32.totalorder %s31, 1
      %p522 = por %p520, %p521
      %p523 = scmp.ne.s32.totalorder %s515, %s518
      %p524 = scmp.eq.s32.totalorder %s31, 0
      %p525 = por %p523, %p524
      %p526 = scmp.ne.s32.totalorder %s515, %s518
      %p527 = scmp.eq.s32.totalorder %s36, 1
      %p528 = por %p526, %p527
      %p529 = scmp.ne.s32.totalorder %s518, %s519
      %p530 = scmp.eq.s32.totalorder %s36, 0
      %p531 = por %p529, %p530
      %p532 = scmp.ne.s32.totalorder %s518, %s519
      %p533 = scmp.eq.s32.totalorder %s37, 1
      %p534 = por %p532, %p533
      %p536 = scmp.ne.s32.totalorder %s519, %s535
      %p537 = scmp.eq.s32.totalorder %s37, 0
      %p538 = por %p536, %p537
      %s540 = sadd.s32 %s539, 1
      %p543 = scmp.eq.s32.totalorder %s31, 1
      %p544 = scmp.ne.s32.totalorder %s539, %s541
      %p545 = scmp.eq.s32.totalorder %s31, 0
      %p546 = por %p544, %p545
      %p547 = scmp.ne.s32.totalorder %s539, %s541
      %p548 = scmp.eq.s32.totalorder %s36, 1
      %p549 = por %p547, %p548
      %p550 = scmp.ne.s32.totalorder %s541, %s542
      %p551 = scmp.eq.s32.totalorder %s36, 0
      %p552 = por %p550, %p551
      %p553 = scmp.ne.s32.totalorder %s541, %s542
      %p554 = scmp.eq.s32.totalorder %s37, 1
      %p555 = por %p553, %p554
      %p557 = scmp.ne.s32.totalorder %s542, %s556
      %p558 = scmp.eq.s32.totalorder %s37, 0
      %p559 = por %p557, %p558
      %s561 = sadd.s32 %s560, 1
      %p564 = scmp.eq.s32.totalorder %s31, 1
      %p565 = scmp.ne.s32.totalorder %s560, %s562
      %p566 = scmp.eq.s32.totalorder %s31, 0
      %p567 = por %p565, %p566
      %p568 = scmp.ne.s32.totalorder %s560, %s562
      %p569 = scmp.eq.s32.totalorder %s36, 1
      %p570 = por %p568, %p569
      %p571 = scmp.ne.s32.totalorder %s562, %s563
      %p572 = scmp.eq.s32.totalorder %s36, 0
      %p573 = por %p571, %p572
      %p574 = scmp.ne.s32.totalorder %s562, %s563
      %p575 = scmp.eq.s32.totalorder %s37, 1
      %p576 = por %p574, %p575
      %p578 = scmp.ne.s32.totalorder %s563, %s577
      %p579 = scmp.eq.s32.totalorder %s37, 0
      %p580 = por %p578, %p579
      %s582 = sadd.s32 %s581, 1
      %p585 = scmp.eq.s32.totalorder %s31, 1
      %p586 = scmp.ne.s32.totalorder %s581, %s583
      %p587 = scmp.eq.s32.totalorder %s31, 0
      %p588 = por %p586, %p587
      %p589 = scmp.ne.s32.totalorder %s581, %s583
      %p590 = scmp.eq.s32.totalorder %s36, 1
      %p591 = por %p589, %p590
      %p592 = scmp.ne.s32.totalorder %s583, %s584
      %p593 = scmp.eq.s32.totalorder %s36, 0
      %p594 = por %p592, %p593
      %p595 = scmp.ne.s32.totalorder %s583, %s584
      %p596 = scmp.eq.s32.totalorder %s37, 1
      %p597 = por %p595, %p596
      %p599 = scmp.ne.s32.totalorder %s584, %s598
      %p600 = scmp.eq.s32.totalorder %s37, 0
      %p601 = por %p599, %p600
      %p602 = scmp.le.s32.totalorder 1, %s31
      %p603 = scmp.lt.s32.totalorder %s31, 3
      %p604 = pnand %p602, %p603
      %p605 = pneg %p604
      // Predicated region
      $region9: #{tpu_custom_call.1} parent=5 // pred_check
        _
      $region10: #{tpu_custom_call.1} parent=5 // pred_check_branch
        %607 = sbr.rel (%p604) target = $region12
      $region11: #{tpu_custom_call.1} parent=5 // pred_region
        %s608 = ssub.s32 %s31, 1
        // Predicated region
        $region13: #{tpu_custom_call.1} parent=11 // pred_check
          %p609 = pneg %p52
        $region14: #{tpu_custom_call.1} parent=11 // pred_check_branch
          %611 = sbr.rel (%p609) target = $region16
        $region15: #{tpu_custom_call.1} parent=11 // pred_region
          _
        $region16: #{tpu_custom_call.1} parent=11 // pred_fallthru
          _
        // Predicated region
        $region17: #{tpu_custom_call.1} parent=11 // pred_check
          %p612 = pneg %p73
        $region18: #{tpu_custom_call.1} parent=11 // pred_check_branch
          %614 = sbr.rel (%p612) target = $region20
        $region19: #{tpu_custom_call.1} parent=11 // pred_region
          %s616 = ssub.s32 128, 128
          %617 = vsyncadd [#allocation4], %s616
          %s618 = sshll.u32 [#allocation3], 4
          %s619 = int_to_ptr.vmem [resolvable:$true] %s618
          %624 = dma.hbm_to_vmem [thread:$0]  %s1, 128, %s619, [#allocation4], 64, 64, 4
        $region20: #{tpu_custom_call.1} parent=11 // pred_fallthru
          _
        // Predicated region
        $region21: #{tpu_custom_call.1} parent=11 // pred_check
          %p625 = pneg %p94
        $region22: #{tpu_custom_call.1} parent=11 // pred_check_branch
          %627 = sbr.rel (%p625) target = $region24
        $region23: #{tpu_custom_call.1} parent=11 // pred_region
          _
        $region24: #{tpu_custom_call.1} parent=11 // pred_fallthru
          _
        // Predicated region
        $region25: #{tpu_custom_call.1} parent=11 // pred_check
          %p628 = pneg %p115
        $region26: #{tpu_custom_call.1} parent=11 // pred_check_branch
          %630 = sbr.rel (%p628) target = $region28
        $region27: #{tpu_custom_call.1} parent=11 // pred_region
          %s632 = ssub.s32 256, 256
          %633 = vsyncadd [#allocation7], %s632
          %s634 = sshll.u32 [#allocation6], 4
          %s635 = int_to_ptr.vmem [resolvable:$true] %s634
          %640 = dma.hbm_to_vmem [thread:$0]  %s3, 256, %s635, [#allocation7], 128, 128, 8
        $region28: #{tpu_custom_call.1} parent=11 // pred_fallthru
          _
        // Predicated region
        $region29: #{tpu_custom_call.1} parent=11 // pred_check
          %p641 = pneg %p552
        $region30: #{tpu_custom_call.1} parent=11 // pred_check_branch
          %643 = sbr.rel (%p641) target = $region32
        $region31: #{tpu_custom_call.1} parent=11 // pred_region
          _
        $region32: #{tpu_custom_call.1} parent=11 // pred_fallthru
          _
        // Predicated region
        $region33: #{tpu_custom_call.1} parent=11 // pred_check
          %p644 = pneg %p573
        $region34: #{tpu_custom_call.1} parent=11 // pred_check_branch
          %646 = sbr.rel (%p644) target = $region36
        $region35: #{tpu_custom_call.1} parent=11 // pred_region
          _
        $region36: #{tpu_custom_call.1} parent=11 // pred_fallthru
          _
      $region12: #{tpu_custom_call.1} parent=5 // pred_fallthru
        _
      %p647 = scmp.lt.s32.totalorder %s31, 2
      // Predicated region
      $region37: #{tpu_custom_call.1} parent=5 // pred_check
        %p648 = pneg %p647
      $region38: #{tpu_custom_call.1} parent=5 // pred_check_branch
        %650 = sbr.rel (%p648) target = $region40
      $region39: #{tpu_custom_call.1} parent=5 // pred_region
        // Predicated region
        $region41: #{tpu_custom_call.1} parent=39 // pred_check
          %p651 = pneg %p135
        $region42: #{tpu_custom_call.1} parent=39 // pred_check_branch
          %653 = sbr.rel (%p651) target = $region44
        $region43: #{tpu_custom_call.1} parent=39 // pred_region
          %s654 = sand.u32 %s31, 1
          %s655 = scalar_lea.sflag [#allocation4], %s654
          %s656 = sand.u32 %s125, 1
          %s657 = smul.addr %s656, 192
          %s658 = scalar_lea.vmem [#allocation8], %s657
          %s660 = ssub.s32 3072, 3072
          %661 = vsyncadd %s655, %s660
          %s662 = smul.addr %s31, 48
          %s663 = smul.addr %s662, 64
          %s664 = scalar_lea.hbm %s4, %s663
          %s665 = sshll.u32 %s658, 4
          %s666 = int_to_ptr.vmem [resolvable:$true] %s665
          %671 = dma.hbm_to_vmem [thread:$0]  %s664, 3072, %s666, %s655, 192, 192, 12
        $region44: #{tpu_custom_call.1} parent=39 // pred_fallthru
          _
        // Predicated region
        $region45: #{tpu_custom_call.1} parent=39 // pred_check
          %p672 = pneg %p161
        $region46: #{tpu_custom_call.1} parent=39 // pred_check_branch
          %674 = sbr.rel (%p672) target = $region48
        $region47: #{tpu_custom_call.1} parent=39 // pred_region
          %p675 = scmp.lt.s32.totalorder %s31, 1
          %s676 = scalar_select %p675, %s31, 1
          %s677 = smul.addr %s676, 3
          %s678 = scalar_lea.vmem %s5, %s677
        $region48: #{tpu_custom_call.1} parent=39 // pred_fallthru
          _
        // Predicated region
        $region49: #{tpu_custom_call.1} parent=39 // pred_check
          %p679 = pneg %p187
        $region50: #{tpu_custom_call.1} parent=39 // pred_check_branch
          %681 = sbr.rel (%p679) target = $region52
        $region51: #{tpu_custom_call.1} parent=39 // pred_region
          %s682 = sand.u32 %s31, 1
          %s683 = scalar_lea.sflag [#allocation4], %s682
          %s684 = sand.u32 %s177, 1
          %s685 = smul.addr %s684, 64
          %s686 = scalar_lea.vmem [#allocation9], %s685
          %s688 = ssub.s32 1024, 1024
          %689 = vsyncadd %s683, %s688
          %s690 = smul.addr %s31, 16
          %s691 = smul.addr %s690, 64
          %s692 = scalar_lea.hbm %s6, %s691
          %s693 = sshll.u32 %s686, 4
          %s694 = int_to_ptr.vmem [resolvable:$true] %s693
          %699 = dma.hbm_to_vmem [thread:$0]  %s692, 1024, %s694, %s683, 64, 64, 4
        $region52: #{tpu_custom_call.1} parent=39 // pred_fallthru
          _
        // Predicated region
        $region53: #{tpu_custom_call.1} parent=39 // pred_check
          %p700 = pneg %p213
        $region54: #{tpu_custom_call.1} parent=39 // pred_check_branch
          %702 = sbr.rel (%p700) target = $region56
        $region55: #{tpu_custom_call.1} parent=39 // pred_region
          %s703 = sand.u32 %s31, 1
          %s704 = scalar_lea.sflag [#allocation4], %s703
          %s705 = sand.u32 %s203, 1
          %s706 = scalar_lea.vmem [#allocation10], %s705
          %s708 = ssub.s32 16, 16
          %709 = vsyncadd %s704, %s708
          %s710 = smul.addr %s31, 16
          %s711 = scalar_lea.hbm %s7, %s710
          %s713 = sshll.u32 %s706, 4
          %s714 = int_to_ptr.vmem [resolvable:$true] %s713
          %716 = dma.hbm_to_vmem [thread:$0]  %s711, 16, %s714, %s704
        $region56: #{tpu_custom_call.1} parent=39 // pred_fallthru
          _
        // Predicated region
        $region57: #{tpu_custom_call.1} parent=39 // pred_check
          %p717 = pneg %p239
        $region58: #{tpu_custom_call.1} parent=39 // pred_check_branch
          %719 = sbr.rel (%p717) target = $region60
        $region59: #{tpu_custom_call.1} parent=39 // pred_region
          %s720 = sand.u32 %s31, 1
          %s721 = scalar_lea.sflag [#allocation4], %s720
          %s722 = sand.u32 %s229, 1
          %s723 = smul.addr %s722, 64
          %s724 = scalar_lea.vmem [#allocation11], %s723
          %s726 = ssub.s32 1024, 1024
          %727 = vsyncadd %s721, %s726
          %s728 = smul.addr %s31, 16
          %s729 = smul.addr %s728, 64
          %s730 = scalar_lea.hbm %s8, %s729
          %s731 = sshll.u32 %s724, 4
          %s732 = int_to_ptr.vmem [resolvable:$true] %s731
          %737 = dma.hbm_to_vmem [thread:$0]  %s730, 1024, %s732, %s721, 64, 64, 4
        $region60: #{tpu_custom_call.1} parent=39 // pred_fallthru
          _
        // Predicated region
        $region61: #{tpu_custom_call.1} parent=39 // pred_check
          %p738 = pneg %p265
        $region62: #{tpu_custom_call.1} parent=39 // pred_check_branch
          %740 = sbr.rel (%p738) target = $region64
        $region63: #{tpu_custom_call.1} parent=39 // pred_region
          %p741 = scmp.lt.s32.totalorder %s31, 1
          %s742 = scalar_select %p741, %s31, 1
          %s743 = scalar_lea.vmem %s9, %s742
        $region64: #{tpu_custom_call.1} parent=39 // pred_fallthru
          _
        // Predicated region
        $region65: #{tpu_custom_call.1} parent=39 // pred_check
          %p744 = pneg %p291
        $region66: #{tpu_custom_call.1} parent=39 // pred_check_branch
          %746 = sbr.rel (%p744) target = $region68
        $region67: #{tpu_custom_call.1} parent=39 // pred_region
          %s747 = sand.u32 %s31, 1
          %s748 = scalar_lea.sflag [#allocation4], %s747
          %s749 = sand.u32 %s281, 1
          %s750 = smul.addr %s749, 128
          %s751 = scalar_lea.vmem [#allocation12], %s750
          %s753 = ssub.s32 2048, 2048
          %754 = vsyncadd %s748, %s753
          %s755 = smul.addr %s31, 32
          %s756 = smul.addr %s755, 64
          %s757 = scalar_lea.hbm %s10, %s756
          %s758 = sshll.u32 %s751, 4
          %s759 = int_to_ptr.vmem [resolvable:$true] %s758
          %764 = dma.hbm_to_vmem [thread:$0]  %s757, 2048, %s759, %s748, 128, 128, 8
        $region68: #{tpu_custom_call.1} parent=39 // pred_fallthru
          _
        // Predicated region
        $region69: #{tpu_custom_call.1} parent=39 // pred_check
          %p765 = pneg %p317
        $region70: #{tpu_custom_call.1} parent=39 // pred_check_branch
          %767 = sbr.rel (%p765) target = $region72
        $region71: #{tpu_custom_call.1} parent=39 // pred_region
          %p768 = scmp.lt.s32.totalorder %s31, 1
          %s769 = scalar_select %p768, %s31, 1
          %s770 = smul.addr %s769, 2
          %s771 = scalar_lea.vmem %s11, %s770
        $region72: #{tpu_custom_call.1} parent=39 // pred_fallthru
          _
        // Predicated region
        $region73: #{tpu_custom_call.1} parent=39 // pred_check
          %p772 = pneg %p343
        $region74: #{tpu_custom_call.1} parent=39 // pred_check_branch
          %774 = sbr.rel (%p772) target = $region76
        $region75: #{tpu_custom_call.1} parent=39 // pred_region
          %s775 = sand.u32 %s31, 1
          %s776 = scalar_lea.sflag [#allocation4], %s775
          %s777 = sand.u32 %s333, 1
          %s778 = smul.addr %s777, 64
          %s779 = scalar_lea.vmem [#allocation13], %s778
          %s781 = ssub.s32 1024, 1024
          %782 = vsyncadd %s776, %s781
          %s783 = smul.addr %s31, 16
          %s784 = smul.addr %s783, 64
          %s785 = scalar_lea.hbm %s12, %s784
          %s786 = sshll.u32 %s779, 4
          %s787 = int_to_ptr.vmem [resolvable:$true] %s786
          %792 = dma.hbm_to_vmem [thread:$0]  %s785, 1024, %s787, %s776, 64, 64, 4
        $region76: #{tpu_custom_call.1} parent=39 // pred_fallthru
          _
        // Predicated region
        $region77: #{tpu_custom_call.1} parent=39 // pred_check
          %p793 = pneg %p369
        $region78: #{tpu_custom_call.1} parent=39 // pred_check_branch
          %795 = sbr.rel (%p793) target = $region80
        $region79: #{tpu_custom_call.1} parent=39 // pred_region
          %p796 = scmp.lt.s32.totalorder %s31, 1
          %s797 = scalar_select %p796, %s31, 1
          %s798 = scalar_lea.vmem %s13, %s797
        $region80: #{tpu_custom_call.1} parent=39 // pred_fallthru
          _
        // Predicated region
        $region81: #{tpu_custom_call.1} parent=39 // pred_check
          %p799 = pneg %p395
        $region82: #{tpu_custom_call.1} parent=39 // pred_check_branch
          %801 = sbr.rel (%p799) target = $region84
        $region83: #{tpu_custom_call.1} parent=39 // pred_region
          %s802 = sand.u32 %s31, 1
          %s803 = scalar_lea.sflag [#allocation4], %s802
          %s804 = sand.u32 %s385, 1
          %s805 = smul.addr %s804, 128
          %s806 = scalar_lea.vmem [#allocation14], %s805
          %s808 = ssub.s32 2048, 2048
          %809 = vsyncadd %s803, %s808
          %s810 = smul.addr %s31, 32
          %s811 = smul.addr %s810, 64
          %s812 = scalar_lea.hbm %s14, %s811
          %s813 = sshll.u32 %s806, 4
          %s814 = int_to_ptr.vmem [resolvable:$true] %s813
          %819 = dma.hbm_to_vmem [thread:$0]  %s812, 2048, %s814, %s803, 128, 128, 8
        $region84: #{tpu_custom_call.1} parent=39 // pred_fallthru
          _
        // Predicated region
        $region85: #{tpu_custom_call.1} parent=39 // pred_check
          %p820 = pneg %p421
        $region86: #{tpu_custom_call.1} parent=39 // pred_check_branch
          %822 = sbr.rel (%p820) target = $region88
        $region87: #{tpu_custom_call.1} parent=39 // pred_region
          %p823 = scmp.lt.s32.totalorder %s31, 1
          %s824 = scalar_select %p823, %s31, 1
          %s825 = smul.addr %s824, 2
          %s826 = scalar_lea.vmem %s15, %s825
        $region88: #{tpu_custom_call.1} parent=39 // pred_fallthru
          _
        // Predicated region
        $region89: #{tpu_custom_call.1} parent=39 // pred_check
          %p827 = pneg %p447
        $region90: #{tpu_custom_call.1} parent=39 // pred_check_branch
          %829 = sbr.rel (%p827) target = $region92
        $region91: #{tpu_custom_call.1} parent=39 // pred_region
          %s830 = sand.u32 %s31, 1
          %s831 = scalar_lea.sflag [#allocation4], %s830
          %s832 = sand.u32 %s437, 1
          %s833 = smul.addr %s832, 128
          %s834 = scalar_lea.vmem [#allocation15], %s833
          %s836 = ssub.s32 2048, 2048
          %837 = vsyncadd %s831, %s836
          %s838 = smul.addr %s31, 32
          %s839 = smul.addr %s838, 64
          %s840 = scalar_lea.hbm %s16, %s839
          %s841 = sshll.u32 %s834, 4
          %s842 = int_to_ptr.vmem [resolvable:$true] %s841
          %847 = dma.hbm_to_vmem [thread:$0]  %s840, 2048, %s842, %s831, 64, 64, 4
        $region92: #{tpu_custom_call.1} parent=39 // pred_fallthru
          _
        // Predicated region
        $region93: #{tpu_custom_call.1} parent=39 // pred_check
          %p848 = pneg %p473
        $region94: #{tpu_custom_call.1} parent=39 // pred_check_branch
          %850 = sbr.rel (%p848) target = $region96
        $region95: #{tpu_custom_call.1} parent=39 // pred_region
          %p851 = scmp.lt.s32.totalorder %s31, 1
          %s852 = scalar_select %p851, %s31, 1
          %s853 = scalar_lea.vmem %s17, %s852
        $region96: #{tpu_custom_call.1} parent=39 // pred_fallthru
          _
        // Predicated region
        $region97: #{tpu_custom_call.1} parent=39 // pred_check
          %p854 = pneg %p499
        $region98: #{tpu_custom_call.1} parent=39 // pred_check_branch
          %856 = sbr.rel (%p854) target = $region100
        $region99: #{tpu_custom_call.1} parent=39 // pred_region
          %p857 = scmp.lt.s32.totalorder %s31, 1
          %s858 = scalar_select %p857, %s31, 1
          %s859 = smul.addr %s858, 4
          %s860 = scalar_lea.vmem %s18, %s859
        $region100: #{tpu_custom_call.1} parent=39 // pred_fallthru
          _
        // Predicated region
        $region101: #{tpu_custom_call.1} parent=39 // pred_check
          %p861 = pneg %p525
        $region102: #{tpu_custom_call.1} parent=39 // pred_check_branch
          %863 = sbr.rel (%p861) target = $region104
        $region103: #{tpu_custom_call.1} parent=39 // pred_region
          %p864 = scmp.lt.s32.totalorder %s31, 1
          %s865 = scalar_select %p864, %s31, 1
          %s866 = smul.addr %s865, 4
          %s867 = scalar_lea.vmem %s19, %s866
        $region104: #{tpu_custom_call.1} parent=39 // pred_fallthru
          _
      $region40: #{tpu_custom_call.1} parent=5 // pred_fallthru
        _
      %p868 = scmp.le.s32.totalorder 1, %s31
      %p869 = scmp.lt.s32.totalorder %s31, 3
      %p870 = pnand %p868, %p869
      %p871 = pneg %p870
      // Predicated region
      $region105: #{tpu_custom_call.1} parent=5 // pred_check
        _
      $region106: #{tpu_custom_call.1} parent=5 // pred_check_branch
        %873 = sbr.rel (%p870) target = $region108
      $region107: #{tpu_custom_call.1} parent=5 // pred_region
        %s874 = ssub.s32 %s31, 1
        // Predicated region
        $region109: #{tpu_custom_call.1} parent=107 // pred_check
          %p875 = pneg %p73
        $region110: #{tpu_custom_call.1} parent=107 // pred_check_branch
          %877 = sbr.rel (%p875) target = $region112
        $region111: #{tpu_custom_call.1} parent=107 // pred_region
          %878 = dma.done [#allocation4], 128
        $region112: #{tpu_custom_call.1} parent=107 // pred_fallthru
          _
        // Predicated region
        $region113: #{tpu_custom_call.1} parent=107 // pred_check
          %p879 = pneg %p115
        $region114: #{tpu_custom_call.1} parent=107 // pred_check_branch
          %881 = sbr.rel (%p879) target = $region116
        $region115: #{tpu_custom_call.1} parent=107 // pred_region
          %882 = dma.done [#allocation7], 256
        $region116: #{tpu_custom_call.1} parent=107 // pred_fallthru
          _
        %s883 = sand.u32 %s36, 1
        %s884 = scalar_lea.sflag [#allocation4], %s883
        %s885 = sand.u32 %s128, 1
        %s886 = smul.addr %s885, 192
        %s887 = scalar_lea.vmem [#allocation8], %s886
        // Predicated region
        $region117: #{tpu_custom_call.1} parent=107 // pred_check
          %p888 = pneg %p141
        $region118: #{tpu_custom_call.1} parent=107 // pred_check_branch
          %890 = sbr.rel (%p888) target = $region120
        $region119: #{tpu_custom_call.1} parent=107 // pred_region
          %891 = dma.done %s884, 3072
        $region120: #{tpu_custom_call.1} parent=107 // pred_fallthru
          _
        %s892 = sand.u32 %s36, 1
        %s893 = scalar_lea.sflag [#allocation4], %s892
        %s894 = sand.u32 %s180, 1
        %s895 = smul.addr %s894, 64
        %s896 = scalar_lea.vmem [#allocation9], %s895
        // Predicated region
        $region121: #{tpu_custom_call.1} parent=107 // pred_check
          %p897 = pneg %p193
        $region122: #{tpu_custom_call.1} parent=107 // pred_check_branch
          %899 = sbr.rel (%p897) target = $region124
        $region123: #{tpu_custom_call.1} parent=107 // pred_region
          %900 = dma.done %s893, 1024
        $region124: #{tpu_custom_call.1} parent=107 // pred_fallthru
          _
        %s901 = sand.u32 %s36, 1
        %s902 = scalar_lea.sflag [#allocation4], %s901
        %s903 = sand.u32 %s206, 1
        %s904 = scalar_lea.vmem [#allocation10], %s903
        // Predicated region
        $region125: #{tpu_custom_call.1} parent=107 // pred_check
          %p905 = pneg %p219
        $region126: #{tpu_custom_call.1} parent=107 // pred_check_branch
          %907 = sbr.rel (%p905) target = $region128
        $region127: #{tpu_custom_call.1} parent=107 // pred_region
          %908 = dma.done %s902, 16
        $region128: #{tpu_custom_call.1} parent=107 // pred_fallthru
          _
        %s909 = sand.u32 %s36, 1
        %s910 = scalar_lea.sflag [#allocation4], %s909
        %s911 = sand.u32 %s232, 1
        %s912 = smul.addr %s911, 64
        %s913 = scalar_lea.vmem [#allocation11], %s912
        // Predicated region
        $region129: #{tpu_custom_call.1} parent=107 // pred_check
          %p914 = pneg %p245
        $region130: #{tpu_custom_call.1} parent=107 // pred_check_branch
          %916 = sbr.rel (%p914) target = $region132
        $region131: #{tpu_custom_call.1} parent=107 // pred_region
          %917 = dma.done %s910, 1024
        $region132: #{tpu_custom_call.1} parent=107 // pred_fallthru
          _
        %s918 = sand.u32 %s36, 1
        %s919 = scalar_lea.sflag [#allocation4], %s918
        %s920 = sand.u32 %s284, 1
        %s921 = smul.addr %s920, 128
        %s922 = scalar_lea.vmem [#allocation12], %s921
        // Predicated region
        $region133: #{tpu_custom_call.1} parent=107 // pred_check
          %p923 = pneg %p297
        $region134: #{tpu_custom_call.1} parent=107 // pred_check_branch
          %925 = sbr.rel (%p923) target = $region136
        $region135: #{tpu_custom_call.1} parent=107 // pred_region
          %926 = dma.done %s919, 2048
        $region136: #{tpu_custom_call.1} parent=107 // pred_fallthru
          _
        %s927 = sand.u32 %s36, 1
        %s928 = scalar_lea.sflag [#allocation4], %s927
        %s929 = sand.u32 %s336, 1
        %s930 = smul.addr %s929, 64
        %s931 = scalar_lea.vmem [#allocation13], %s930
        // Predicated region
        $region137: #{tpu_custom_call.1} parent=107 // pred_check
          %p932 = pneg %p349
        $region138: #{tpu_custom_call.1} parent=107 // pred_check_branch
          %934 = sbr.rel (%p932) target = $region140
        $region139: #{tpu_custom_call.1} parent=107 // pred_region
          %935 = dma.done %s928, 1024
        $region140: #{tpu_custom_call.1} parent=107 // pred_fallthru
          _
        %s936 = sand.u32 %s36, 1
        %s937 = scalar_lea.sflag [#allocation4], %s936
        %s938 = sand.u32 %s388, 1
        %s939 = smul.addr %s938, 128
        %s940 = scalar_lea.vmem [#allocation14], %s939
        // Predicated region
        $region141: #{tpu_custom_call.1} parent=107 // pred_check
          %p941 = pneg %p401
        $region142: #{tpu_custom_call.1} parent=107 // pred_check_branch
          %943 = sbr.rel (%p941) target = $region144
        $region143: #{tpu_custom_call.1} parent=107 // pred_region
          %944 = dma.done %s937, 2048
        $region144: #{tpu_custom_call.1} parent=107 // pred_fallthru
          _
        %s945 = sand.u32 %s36, 1
        %s946 = scalar_lea.sflag [#allocation4], %s945
        %s947 = sand.u32 %s440, 1
        %s948 = smul.addr %s947, 128
        %s949 = scalar_lea.vmem [#allocation15], %s948
        // Predicated region
        $region145: #{tpu_custom_call.1} parent=107 // pred_check
          %p950 = pneg %p453
        $region146: #{tpu_custom_call.1} parent=107 // pred_check_branch
          %952 = sbr.rel (%p950) target = $region148
        $region147: #{tpu_custom_call.1} parent=107 // pred_region
          %953 = dma.done %s946, 2048
        $region148: #{tpu_custom_call.1} parent=107 // pred_fallthru
          _
        %p954 = pneg %p52
        %p955 = pneg %p49
        %p956 = pneg %p73
        %p957 = pneg %p70
        %p958 = pneg %p94
        %p959 = pneg %p91
        %p960 = pneg %p115
        %p961 = pneg %p112
        %s962 = sand.u32 %s36, 1
        %s963 = scalar_lea.sflag [#allocation4], %s962
        %s964 = sand.u32 %s128, 1
        %s965 = smul.addr %s964, 192
        %s966 = scalar_lea.vmem [#allocation8], %s965
        %p967 = pneg %p141
        %p968 = pneg %p138
        %p969 = scmp.lt.s32.totalorder %s36, 1
        %s970 = scalar_select %p969, %s36, 1
        %s971 = smul.addr %s970, 3
        %s972 = scalar_lea.vmem %s5, %s971
        %p973 = pneg %p167
        %p974 = pneg %p164
        %s975 = sand.u32 %s36, 1
        %s976 = scalar_lea.sflag [#allocation4], %s975
        %s977 = sand.u32 %s180, 1
        %s978 = smul.addr %s977, 64
        %s979 = scalar_lea.vmem [#allocation9], %s978
        %p980 = pneg %p193
        %p981 = pneg %p190
        %s982 = sand.u32 %s36, 1
        %s983 = scalar_lea.sflag [#allocation4], %s982
        %s984 = sand.u32 %s206, 1
        %s985 = scalar_lea.vmem [#allocation10], %s984
        %p986 = pneg %p219
        %p987 = pneg %p216
        %s988 = sand.u32 %s36, 1
        %s989 = scalar_lea.sflag [#allocation4], %s988
        %s990 = sand.u32 %s232, 1
        %s991 = smul.addr %s990, 64
        %s992 = scalar_lea.vmem [#allocation11], %s991
        %p993 = pneg %p245
        %p994 = pneg %p242
        %p995 = scmp.lt.s32.totalorder %s36, 1
        %s996 = scalar_select %p995, %s36, 1
        %s997 = scalar_lea.vmem %s9, %s996
        %p998 = pneg %p271
        %p999 = pneg %p268
        %s1000 = sand.u32 %s36, 1
        %s1001 = scalar_lea.sflag [#allocation4], %s1000
        %s1002 = sand.u32 %s284, 1
        %s1003 = smul.addr %s1002, 128
        %s1004 = scalar_lea.vmem [#allocation12], %s1003
        %p1005 = pneg %p297
        %p1006 = pneg %p294
        %p1007 = scmp.lt.s32.totalorder %s36, 1
        %s1008 = scalar_select %p1007, %s36, 1
        %s1009 = smul.addr %s1008, 2
        %s1010 = scalar_lea.vmem %s11, %s1009
        %p1011 = pneg %p323
        %p1012 = pneg %p320
        %s1013 = sand.u32 %s36, 1
        %s1014 = scalar_lea.sflag [#allocation4], %s1013
        %s1015 = sand.u32 %s336, 1
        %s1016 = smul.addr %s1015, 64
        %s1017 = scalar_lea.vmem [#allocation13], %s1016
        %p1018 = pneg %p349
        %p1019 = pneg %p346
        %p1020 = scmp.lt.s32.totalorder %s36, 1
        %s1021 = scalar_select %p1020, %s36, 1
        %s1022 = scalar_lea.vmem %s13, %s1021
        %p1023 = pneg %p375
        %p1024 = pneg %p372
        %s1025 = sand.u32 %s36, 1
        %s1026 = scalar_lea.sflag [#allocation4], %s1025
        %s1027 = sand.u32 %s388, 1
        %s1028 = smul.addr %s1027, 128
        %s1029 = scalar_lea.vmem [#allocation14], %s1028
        %p1030 = pneg %p401
        %p1031 = pneg %p398
        %p1032 = scmp.lt.s32.totalorder %s36, 1
        %s1033 = scalar_select %p1032, %s36, 1
        %s1034 = smul.addr %s1033, 2
        %s1035 = scalar_lea.vmem %s15, %s1034
        %p1036 = pneg %p427
        %p1037 = pneg %p424
        %s1038 = sand.u32 %s36, 1
        %s1039 = scalar_lea.sflag [#allocation4], %s1038
        %s1040 = sand.u32 %s440, 1
        %s1041 = smul.addr %s1040, 128
        %s1042 = scalar_lea.vmem [#allocation15], %s1041
        %p1043 = pneg %p453
        %p1044 = pneg %p450
        %p1045 = scmp.lt.s32.totalorder %s36, 1
        %s1046 = scalar_select %p1045, %s36, 1
        %s1047 = scalar_lea.vmem %s17, %s1046
        %p1048 = pneg %p479
        %p1049 = pneg %p476
        %p1050 = scmp.lt.s32.totalorder %s36, 1
        %s1051 = scalar_select %p1050, %s36, 1
        %s1052 = smul.addr %s1051, 4
        %s1053 = scalar_lea.vmem %s18, %s1052
        %p1054 = pneg %p505
        %p1055 = pneg %p502
        %p1056 = scmp.lt.s32.totalorder %s36, 1
        %s1057 = scalar_select %p1056, %s36, 1
        %s1058 = smul.addr %s1057, 4
        %s1059 = scalar_lea.vmem %s19, %s1058
        %p1060 = pneg %p531
        %p1061 = pneg %p528
        %p1062 = pneg %p552
        %p1063 = pneg %p549
        %p1064 = pneg %p573
        %p1065 = pneg %p570
        %p1066 = pneg %p594
        %p1067 = pneg %p591
        %p1068 = scmp.lt.s32.totalorder %s36, 1
        %s1069 = scalar_select %p1068, %s36, 1
        %s1070 = smul.addr %s1069, 3
        %s1071 = scalar_lea.vmem %s5, %s1070
        %p1072 = scmp.lt.s32.totalorder %s36, 1
        %s1073 = scalar_select %p1072, %s36, 1
        %s1074 = scalar_lea.vmem %s9, %s1073
        %p1075 = scmp.lt.s32.totalorder %s36, 1
        %s1076 = scalar_select %p1075, %s36, 1
        %s1077 = smul.addr %s1076, 2
        %s1078 = scalar_lea.vmem %s11, %s1077
        %p1079 = scmp.lt.s32.totalorder %s36, 1
        %s1080 = scalar_select %p1079, %s36, 1
        %s1081 = scalar_lea.vmem %s13, %s1080
        %p1082 = scmp.lt.s32.totalorder %s36, 1
        %s1083 = scalar_select %p1082, %s36, 1
        %s1084 = smul.addr %s1083, 2
        %s1085 = scalar_lea.vmem %s15, %s1084
        %p1086 = scmp.lt.s32.totalorder %s36, 1
        %s1087 = scalar_select %p1086, %s36, 1
        %s1088 = scalar_lea.vmem %s17, %s1087
        %p1089 = scmp.lt.s32.totalorder %s36, 1
        %s1090 = scalar_select %p1089, %s36, 1
        %s1091 = smul.addr %s1090, 4
        %s1092 = scalar_lea.vmem %s18, %s1091
        %p1093 = scmp.lt.s32.totalorder %s36, 1
        %s1094 = scalar_select %p1093, %s36, 1
        %s1095 = smul.addr %s1094, 4
        %s1096 = scalar_lea.vmem %s19, %s1095
        %p1098 = scmp.eq.s32.totalorder %s36, 0
        // Predicated region
        $region149: #{tpu_custom_call.1} parent=107 // pred_check
          %p1099 = pneg %p1098
        $region150: #{tpu_custom_call.1} parent=107 // pred_check_branch
          %1101 = sbr.rel (%p1099) target = $region152
        $region151: #{tpu_custom_call.1} parent=107 // pred_region
          %v1102 = vld [vmem:[%s0] sm:$0xff]
          %v1103 = vld [vmem:[%s0 + $0x8] sm:$0xff]
          %1104 = vst [vmem:[#allocation2] sm:$0xff] %v1102
          %1105 = vst [vmem:[#allocation2 + $0x8] sm:$0xff] %v1103
        $region152: #{tpu_custom_call.1} parent=107 // pred_fallthru
          _
        %v1106 = vld [vmem:[#allocation2] sm:$0xff]
        %v1107 = vld [vmem:[#allocation2 + $0x8] sm:$0xff]
        %v1108 = vld [vmem:[#allocation3] sm:$0xf]
        %v1109 = vld [vmem:[#allocation3 + $0x4] sm:$0xf]
        %v1110 = vld [vmem:[%s1092] sm:$0x7]
        %v1111 = vld [vmem:[%s1096] sm:$0x7]
        %1112 = vadd.xlane.f32.xlu0 %v1106
        %v1113 = vpop.xlane.xlu0 %1112
        %1114 = vadd.xlane.f32.xlu0 %v1107
        %v1115 = vpop.xlane.xlu0 %1114
        %v1116 = vrcp.pop 128.0
        %v1117 = vmul.f32 %v1113, %v1116
        %v1118 = vmul.f32 %v1115, %v1116
        %v1119 = vsub.f32 %v1106, %v1117
        %v1120 = vsub.f32 %v1107, %v1118
        %v1121 = vmul.f32 %v1119, %v1119
        %v1122 = vmul.f32 %v1120, %v1120
        %1123 = vadd.xlane.f32.xlu0 %v1121
        %v1124 = vpop.xlane.xlu0 %1123
        %1125 = vadd.xlane.f32.xlu0 %v1122
        %v1126 = vpop.xlane.xlu0 %1125
        %v1127 = vmul.f32 %v1124, 0.007874016
        %v1128 = vmul.f32 %v1126, 0.007874016
        %v1129 = vrsqrt.pop %v1127
        %v1130 = vmul.f32 %v1127, %v1129
        %vm1131 = vcmp.eq.f32.partialorder %v1127, inf
        %v1132 = vsel %vm1131, %v1127, %v1130
        %vm1133 = vcmp.eq.f32.partialorder %v1127, 0.0
        %v1134 = vand.u32 %v1127, 2147483648
        %v1135 = vsel %vm1133, %v1134, %v1132
        %v1136 = vrsqrt.pop %v1128
        %v1137 = vmul.f32 %v1128, %v1136
        %vm1138 = vcmp.eq.f32.partialorder %v1128, inf
        %v1139 = vsel %vm1138, %v1128, %v1137
        %vm1140 = vcmp.eq.f32.partialorder %v1128, 0.0
        %v1141 = vand.u32 %v1128, 2147483648
        %v1142 = vsel %vm1140, %v1141, %v1139
        %v1143 = vlaneseq
        %v1144 = vshrl.u32 %v1143, 7
        %v1145 = vsub.s32 0, %v1144
        %v1146 = vrot.slane %v1110, %v1145
        %v1147 = vmul.f32 %v1146, %v1119
        %v1148 = vmul.f32 %v1146, %v1120
        %v1149 = vadd.f32 %v1135, 1e-06
        %v1150 = vadd.f32 %v1142, 1e-06
        %v1151 = vrcp.pop %v1149
        %v1152 = vmul.f32 %v1147, %v1151
        %v1153 = vrcp.pop %v1150
        %v1154 = vmul.f32 %v1148, %v1153
        %v1155 = vlaneseq
        %v1156 = vshrl.u32 %v1155, 7
        %v1157 = vsub.s32 0, %v1156
        %v1158 = vrot.slane %v1111, %v1157
        %v1159 = vadd.f32 %v1152, %v1158
        %v1160 = vadd.f32 %v1154, %v1158
        %v1161 = vpack.c.bf16 %v1160, %v1159
        %v1162 = vld [vmem:[%s887] sm:$0xff]
        %v1163 = vld [vmem:[%s887 + $0x8] sm:$0xf]
        %v1164 = vld [vmem:[%s887 + $0xc] sm:$0xff]
        %v1165 = vld [vmem:[%s887 + $0x14] sm:$0xf]
        %v1166 = vld [vmem:[%s887 + $0x18] sm:$0xff]
        %v1167 = vld [vmem:[%s887 + $0x20] sm:$0xf]
        %v1168 = vld [vmem:[%s887 + $0x24] sm:$0xff]
        %v1169 = vld [vmem:[%s887 + $0x2c] sm:$0xf]
        %v1170 = vld [vmem:[%s887 + $0x30] sm:$0xff]
        %v1171 = vld [vmem:[%s887 + $0x38] sm:$0xf]
        %v1172 = vld [vmem:[%s887 + $0x3c] sm:$0xff]
        %v1173 = vld [vmem:[%s887 + $0x44] sm:$0xf]
        %v1174 = vld [vmem:[%s887 + $0x48] sm:$0xff]
        %v1175 = vld [vmem:[%s887 + $0x50] sm:$0xf]
        %v1176 = vld [vmem:[%s887 + $0x54] sm:$0xff]
        %v1177 = vld [vmem:[%s887 + $0x5c] sm:$0xf]
        %v1178 = vld [vmem:[%s887 + $0x60] sm:$0xff]
        %v1179 = vld [vmem:[%s887 + $0x68] sm:$0xf]
        %v1180 = vld [vmem:[%s887 + $0x6c] sm:$0xff]
        %v1181 = vld [vmem:[%s887 + $0x74] sm:$0xf]
        %v1182 = vld [vmem:[%s887 + $0x78] sm:$0xff]
        %v1183 = vld [vmem:[%s887 + $0x80] sm:$0xf]
        %v1184 = vld [vmem:[%s887 + $0x84] sm:$0xff]
        %v1185 = vld [vmem:[%s887 + $0x8c] sm:$0xf]
        %v1186 = vld [vmem:[%s887 + $0x90] sm:$0xff]
        %v1187 = vld [vmem:[%s887 + $0x98] sm:$0xf]
        %v1188 = vld [vmem:[%s887 + $0x9c] sm:$0xff]
        %v1189 = vld [vmem:[%s887 + $0xa4] sm:$0xf]
        %v1190 = vld [vmem:[%s887 + $0xa8] sm:$0xff]
        %v1191 = vld [vmem:[%s887 + $0xb0] sm:$0xf]
        %v1192 = vld [vmem:[%s887 + $0xb4] sm:$0xff]
        %v1193 = vld [vmem:[%s887 + $0xbc] sm:$0xf]
        %v1194 = vld [vmem:[%s1071] sm:$0x7]
        %v1196 = vlaneseq
        %v1197 = vshrl.u32 %v1196, 7
        %v1198 = vsub.s32 0, %v1197
        %v1199 = vrot.slane %v1194, %v1198
        %v1200 = vlaneseq
        %v1201 = vshrl.u32 %v1200, 7
        %v1202 = vsub.s32 1, %v1201
        %v1203 = vrot.slane %v1194, %v1202
        %v1204 = vlaneseq
        %v1205 = vshrl.u32 %v1204, 7
        %v1206 = vsub.s32 2, %v1205
        %v1207 = vrot.slane %v1194, %v1206
        %v1243 = vunpack.c.l.b16 %v1162
        %v1244 = vunpack.c.h.b16 %v1162
        %v1245 = vunpack.c.l.b16 %v1163
        %v1246 = vunpack.c.l.b16 %v1164
        %v1247 = vunpack.c.h.b16 %v1164
        %v1248 = vunpack.c.l.b16 %v1165
        %v1249 = vunpack.c.l.b16 %v1166
        %v1250 = vunpack.c.h.b16 %v1166
        %v1251 = vunpack.c.l.b16 %v1167
        %v1252 = vunpack.c.l.b16 %v1168
        %v1253 = vunpack.c.h.b16 %v1168
        %v1254 = vunpack.c.l.b16 %v1169
        %v1255 = vunpack.c.l.b16 %v1170
        %v1256 = vunpack.c.h.b16 %v1170
        %v1257 = vunpack.c.l.b16 %v1171
        %v1258 = vunpack.c.l.b16 %v1172
        %v1259 = vunpack.c.h.b16 %v1172
        %v1260 = vunpack.c.l.b16 %v1173
        %v1261 = vunpack.c.l.b16 %v1174
        %v1262 = vunpack.c.h.b16 %v1174
        %v1263 = vunpack.c.l.b16 %v1175
        %v1264 = vunpack.c.l.b16 %v1176
        %v1265 = vunpack.c.h.b16 %v1176
        %v1266 = vunpack.c.l.b16 %v1177
        %v1267 = vunpack.c.l.b16 %v1178
        %v1268 = vunpack.c.h.b16 %v1178
        %v1269 = vunpack.c.l.b16 %v1179
        %v1270 = vunpack.c.l.b16 %v1180
        %v1271 = vunpack.c.h.b16 %v1180
        %v1272 = vunpack.c.l.b16 %v1181
        %v1273 = vunpack.c.l.b16 %v1182
        %v1274 = vunpack.c.h.b16 %v1182
        %v1275 = vunpack.c.l.b16 %v1183
        %v1276 = vunpack.c.l.b16 %v1184
        %v1277 = vunpack.c.h.b16 %v1184
        %v1278 = vunpack.c.l.b16 %v1185
        %v1279 = vunpack.c.l.b16 %v1186
        %v1280 = vunpack.c.h.b16 %v1186
        %v1281 = vunpack.c.l.b16 %v1187
        %v1282 = vunpack.c.l.b16 %v1188
        %v1283 = vunpack.c.h.b16 %v1188
        %v1284 = vunpack.c.l.b16 %v1189
        %v1285 = vunpack.c.l.b16 %v1190
        %v1286 = vunpack.c.h.b16 %v1190
        %v1287 = vunpack.c.l.b16 %v1191
        %v1288 = vunpack.c.l.b16 %v1192
        %v1289 = vunpack.c.h.b16 %v1192
        %v1290 = vunpack.c.l.b16 %v1193
        %v1291 = vpack.c.b16 %v1246, %v1243
        %v1292 = vpack.c.b16 %v1247, %v1244
        %v1293 = vpack.c.b16 %v1248, %v1245
        %v1294 = vpack.c.b16 %v1252, %v1249
        %v1295 = vpack.c.b16 %v1253, %v1250
        %v1296 = vpack.c.b16 %v1254, %v1251
        %v1297 = vpack.c.b16 %v1258, %v1255
        %v1298 = vpack.c.b16 %v1259, %v1256
        %v1299 = vpack.c.b16 %v1260, %v1257
        %v1300 = vpack.c.b16 %v1264, %v1261
        %v1301 = vpack.c.b16 %v1265, %v1262
        %v1302 = vpack.c.b16 %v1266, %v1263
        %v1303 = vpack.c.b16 %v1270, %v1267
        %v1304 = vpack.c.b16 %v1271, %v1268
        %v1305 = vpack.c.b16 %v1272, %v1269
        %v1306 = vpack.c.b16 %v1276, %v1273
        %v1307 = vpack.c.b16 %v1277, %v1274
        %v1308 = vpack.c.b16 %v1278, %v1275
        %v1309 = vpack.c.b16 %v1282, %v1279
        %v1310 = vpack.c.b16 %v1283, %v1280
        %v1311 = vpack.c.b16 %v1284, %v1281
        %v1312 = vpack.c.b16 %v1288, %v1285
        %v1313 = vpack.c.b16 %v1289, %v1286
        %v1314 = vpack.c.b16 %v1290, %v1287
        %1339 = vmatprep.subr.bf16.mxu0 %v1292
        %1340 = vmatpush1.bf16.msra.mxu0 %v1291
        %1341 = vmatprep.subr.bf16.mxu0 %v1295
        %1342 = vmatpush1.bf16.msra.mxu0 %v1294
        %1343 = vmatprep.subr.bf16.mxu0 %v1298
        %1344 = vmatpush1.bf16.msra.mxu0 %v1297
        %1345 = vmatprep.subr.bf16.mxu0 %v1301
        %1346 = vmatpush1.bf16.msra.mxu0 %v1300
        %1347 = vmatprep.subr.bf16.mxu0 %v1304
        %1348 = vmatpush1.bf16.msra.mxu0 %v1303
        %1349 = vmatprep.subr.bf16.mxu0 %v1307
        %1350 = vmatpush1.bf16.msra.mxu0 %v1306
        %1351 = vmatprep.subr.bf16.mxu0 %v1310
        %1352 = vmatpush1.bf16.msra.mxu0 %v1309
        %1353 = vmatprep.subr.bf16.mxu0 %v1313
        %1354 = vmatpush1.bf16.msra.mxu0 %v1312
        %1355 = vmatprep.subr.bf16.mxu0 0
        %1356 = vmatpush1.bf16.msra.mxu0 0
        %1357 = vmatprep.subr.bf16.mxu0 0
        %1358 = vmatpush1.bf16.msra.mxu0 0
        %1359 = vmatprep.subr.bf16.mxu0 0
        %1360 = vmatpush1.bf16.msra.mxu0 0
        %1361 = vmatprep.subr.bf16.mxu0 0
        %1362 = vmatpush1.bf16.msra.mxu0 0
        %1363 = vmatprep.subr.bf16.mxu0 0
        %1364 = vmatpush1.bf16.msra.mxu0 0
        %1365 = vmatprep.subr.bf16.mxu0 0
        %1366 = vmatpush1.bf16.msra.mxu0 0
        %1367 = vmatprep.subr.bf16.mxu0 0
        %1368 = vmatpush1.bf16.msra.mxu0 0
        %1369 = vmatprep.subr.bf16.mxu0 0
        %1370 = vmatpush1.bf16.msra.mxu0 0
        %1371 = vmatprep.mubr.bf16.mxu0 0
        %1372 = vmatmul.mubr.bf16.gmra.mrb[0].mxu0 %v1161
        %v1373 = vpop.f32.mrb[0].mxu0
        %v1374 = vadd.f32 %v1199, %v1373
        %v1375 = vpop.f32.mrb[0].mxu0
        %v1376 = vadd.f32 %v1203, %v1375
        %v1377 = vpop.f32.mrb[0].mxu0
        %v1378 = vadd.f32 %v1199, %v1377
        %v1379 = vpop.f32.mrb[0].mxu0
        %v1380 = vadd.f32 %v1203, %v1379
        %1381 = vdwg.mxu0
        %1382 = vmatprep.subr.bf16.mxu0 0
        %1383 = vmatpush1.bf16.msra.mxu0 %v1293
        %1384 = vmatprep.subr.bf16.mxu0 0
        %1385 = vmatpush1.bf16.msra.mxu0 %v1296
        %1386 = vmatprep.subr.bf16.mxu0 0
        %1387 = vmatpush1.bf16.msra.mxu0 %v1299
        %1388 = vmatprep.subr.bf16.mxu0 0
        %1389 = vmatpush1.bf16.msra.mxu0 %v1302
        %1390 = vmatprep.subr.bf16.mxu0 0
        %1391 = vmatpush1.bf16.msra.mxu0 %v1305
        %1392 = vmatprep.subr.bf16.mxu0 0
        %1393 = vmatpush1.bf16.msra.mxu0 %v1308
        %1394 = vmatprep.subr.bf16.mxu0 0
        %1395 = vmatpush1.bf16.msra.mxu0 %v1311
        %1396 = vmatprep.subr.bf16.mxu0 0
        %1397 = vmatpush1.bf16.msra.mxu0 %v1314
        %1398 = vmatprep.subr.bf16.mxu0 0
        %1399 = vmatpush1.bf16.msra.mxu0 0
        %1400 = vmatprep.subr.bf16.mxu0 0
        %1401 = vmatpush1.bf16.msra.mxu0 0
        %1402 = vmatprep.subr.bf16.mxu0 0
        %1403 = vmatpush1.bf16.msra.mxu0 0
        %1404 = vmatprep.subr.bf16.mxu0 0
        %1405 = vmatpush1.bf16.msra.mxu0 0
        %1406 = vmatprep.subr.bf16.mxu0 0
        %1407 = vmatpush1.bf16.msra.mxu0 0
        %1408 = vmatprep.subr.bf16.mxu0 0
        %1409 = vmatpush1.bf16.msra.mxu0 0
        %1410 = vmatprep.subr.bf16.mxu0 0
        %1411 = vmatpush1.bf16.msra.mxu0 0
        %1412 = vmatprep.subr.bf16.mxu0 0
        %1413 = vmatpush1.bf16.msra.mxu0 0
        %1414 = vmatprep.mubr.bf16.mxu0 0
        %1415 = vmatmul.mubr.bf16.gmra.mrb[0].mxu0 %v1161
        %v1416 = vpop.f32.mrb[0].mxu0
        %v1417 = vadd.f32 %v1207, %v1416
        %v1418 = vpop.f32.mrb[0].mxu0
        %v1419 = vpop.f32.mrb[0].mxu0
        %v1420 = vadd.f32 %v1207, %v1419
        %v1421 = vpop.f32.mrb[0].mxu0
        %1422 = vdwg.mxu0
        %v1423 = vmul.f32 %v1374, 0.17677669
        %v1424 = vmul.f32 %v1378, 0.17677669
        %v1425 = vpack.c.bf16 %v1423, %v1423
        %v1426 = vpack.c.bf16 %v1376, %v1376
        %v1427 = vpack.c.bf16 %v1417, %v1417
        %1429 = vrot.lane.b32.xlu0 %v1425, 96
        %v1430 = vpop.permute.xlu0 %1429
        %1431 = vrot.lane.b32.xlu0 %v1425, 64
        %v1432 = vpop.permute.xlu0 %1431
        %1433 = vrot.lane.b32.xlu0 %v1425, 32
        %v1434 = vpop.permute.xlu0 %1433
        %1436 = vrot.lane.b32.xlu0 %v1426, 96
        %v1437 = vpop.permute.xlu0 %1436
        %1438 = vrot.lane.b32.xlu0 %v1426, 64
        %v1439 = vpop.permute.xlu0 %1438
        %1440 = vrot.lane.b32.xlu0 %v1426, 32
        %v1441 = vpop.permute.xlu0 %1440
        %1443 = vrot.lane.b32.xlu0 %v1427, 96
        %v1444 = vpop.permute.xlu0 %1443
        %1445 = vrot.lane.b32.xlu0 %v1427, 64
        %v1446 = vpop.permute.xlu0 %1445
        %1447 = vrot.lane.b32.xlu0 %v1427, 32
        %v1448 = vpop.permute.xlu0 %1447
        %v1449 = vld [vmem:[%s2] sm:$0xff]
        %vm1450 = vcmask 261120
        %v1452 = vsel %vm1450, %v1425, 0
        %v1455 = vsel %vm1450, %v1426, 0
        %1457 = vmatprep.subr.bf16.mxu0 0
        %1458 = vmatpush1.bf16.xpose.msra.mxu0 %v1455
        %1459 = vmatprep.subr.bf16.mxu0 0
        %1460 = vmatpush1.bf16.xpose.msra.mxu0 0
        %1461 = vmatprep.subr.bf16.mxu0 0
        %1462 = vmatpush1.bf16.xpose.msra.mxu0 0
        %1463 = vmatprep.subr.bf16.mxu0 0
        %1464 = vmatpush1.bf16.xpose.msra.mxu0 0
        %1465 = vmatprep.subr.bf16.mxu0 0
        %1466 = vmatpush1.bf16.xpose.msra.mxu0 0
        %1467 = vmatprep.subr.bf16.mxu0 0
        %1468 = vmatpush1.bf16.xpose.msra.mxu0 0
        %1469 = vmatprep.subr.bf16.mxu0 0
        %1470 = vmatpush1.bf16.xpose.msra.mxu0 0
        %1471 = vmatprep.subr.bf16.mxu0 0
        %1472 = vmatpush1.bf16.xpose.msra.mxu0 0
        %1473 = vmatprep.subr.bf16.mxu0 0
        %1474 = vmatpush1.bf16.xpose.msra.mxu0 0
        %1475 = vmatprep.subr.bf16.mxu0 0
        %1476 = vmatpush1.bf16.xpose.msra.mxu0 0
        %1477 = vmatprep.subr.bf16.mxu0 0
        %1478 = vmatpush1.bf16.xpose.msra.mxu0 0
        %1479 = vmatprep.subr.bf16.mxu0 0
        %1480 = vmatpush1.bf16.xpose.msra.mxu0 0
        %1481 = vmatprep.subr.bf16.mxu0 0
        %1482 = vmatpush1.bf16.xpose.msra.mxu0 0
        %1483 = vmatprep.subr.bf16.mxu0 0
        %1484 = vmatpush1.bf16.xpose.msra.mxu0 0
        %1485 = vmatprep.subr.bf16.mxu0 0
        %1486 = vmatpush1.bf16.xpose.msra.mxu0 0
        %1487 = vmatprep.subr.bf16.mxu0 0
        %1488 = vmatpush1.bf16.xpose.msra.mxu0 0
        %1489 = vmatprep.mubr.bf16.mxu0 0
        %1490 = vmatmul.mubr.bf16.gmra.mrb[0].mxu0 %v1452
        %v1491 = vpop.f32.mrb[0].mxu0
        %v1492 = vadd.f32 %v1449, %v1491
        %v1493 = vpop.f32.mrb[0].mxu0
        %v1494 = vpop.f32.mrb[0].mxu0
        %v1495 = vpop.f32.mrb[0].mxu0
        %1496 = vdwg.mxu0
        %v1498 = vsel %vm1450, %v1430, 0
        %v1501 = vsel %vm1450, %v1437, 0
        %1503 = vmatprep.subr.bf16.mxu0 0
        %1504 = vmatpush1.bf16.xpose.msra.mxu0 %v1501
        %1505 = vmatprep.subr.bf16.mxu0 0
        %1506 = vmatpush1.bf16.xpose.msra.mxu0 0
        %1507 = vmatprep.subr.bf16.mxu0 0
        %1508 = vmatpush1.bf16.xpose.msra.mxu0 0
        %1509 = vmatprep.subr.bf16.mxu0 0
        %1510 = vmatpush1.bf16.xpose.msra.mxu0 0
        %1511 = vmatprep.subr.bf16.mxu0 0
        %1512 = vmatpush1.bf16.xpose.msra.mxu0 0
        %1513 = vmatprep.subr.bf16.mxu0 0
        %1514 = vmatpush1.bf16.xpose.msra.mxu0 0
        %1515 = vmatprep.subr.bf16.mxu0 0
        %1516 = vmatpush1.bf16.xpose.msra.mxu0 0
        %1517 = vmatprep.subr.bf16.mxu0 0
        %1518 = vmatpush1.bf16.xpose.msra.mxu0 0
        %1519 = vmatprep.subr.bf16.mxu0 0
        %1520 = vmatpush1.bf16.xpose.msra.mxu0 0
        %1521 = vmatprep.subr.bf16.mxu0 0
        %1522 = vmatpush1.bf16.xpose.msra.mxu0 0
        %1523 = vmatprep.subr.bf16.mxu0 0
        %1524 = vmatpush1.bf16.xpose.msra.mxu0 0
        %1525 = vmatprep.subr.bf16.mxu0 0
        %1526 = vmatpush1.bf16.xpose.msra.mxu0 0
        %1527 = vmatprep.subr.bf16.mxu0 0
        %1528 = vmatpush1.bf16.xpose.msra.mxu0 0
        %1529 = vmatprep.subr.bf16.mxu0 0
        %1530 = vmatpush1.bf16.xpose.msra.mxu0 0
        %1531 = vmatprep.subr.bf16.mxu0 0
        %1532 = vmatpush1.bf16.xpose.msra.mxu0 0
        %1533 = vmatprep.subr.bf16.mxu0 0
        %1534 = vmatpush1.bf16.xpose.msra.mxu0 0
        %1535 = vmatprep.mubr.bf16.mxu0 0
        %1536 = vmatmul.mubr.bf16.gmra.mrb[0].mxu0 %v1498
        %v1537 = vpop.f32.mrb[0].mxu0
        %v1538 = vadd.f32 %v1449, %v1537
        %v1539 = vpop.f32.mrb[0].mxu0
        %v1540 = vpop.f32.mrb[0].mxu0
        %v1541 = vpop.f32.mrb[0].mxu0
        %1542 = vdwg.mxu0
        %v1544 = vsel %vm1450, %v1432, 0
        %v1547 = vsel %vm1450, %v1439, 0
        %1549 = vmatprep.subr.bf16.mxu0 0
        %1550 = vmatpush1.bf16.xpose.msra.mxu0 %v1547
        %1551 = vmatprep.subr.bf16.mxu0 0
        %1552 = vmatpush1.bf16.xpose.msra.mxu0 0
        %1553 = vmatprep.subr.bf16.mxu0 0
        %1554 = vmatpush1.bf16.xpose.msra.mxu0 0
        %1555 = vmatprep.subr.bf16.mxu0 0
        %1556 = vmatpush1.bf16.xpose.msra.mxu0 0
        %1557 = vmatprep.subr.bf16.mxu0 0
        %1558 = vmatpush1.bf16.xpose.msra.mxu0 0
        %1559 = vmatprep.subr.bf16.mxu0 0
        %1560 = vmatpush1.bf16.xpose.msra.mxu0 0
        %1561 = vmatprep.subr.bf16.mxu0 0
        %1562 = vmatpush1.bf16.xpose.msra.mxu0 0
        %1563 = vmatprep.subr.bf16.mxu0 0
        %1564 = vmatpush1.bf16.xpose.msra.mxu0 0
        %1565 = vmatprep.subr.bf16.mxu0 0
        %1566 = vmatpush1.bf16.xpose.msra.mxu0 0
        %1567 = vmatprep.subr.bf16.mxu0 0
        %1568 = vmatpush1.bf16.xpose.msra.mxu0 0
        %1569 = vmatprep.subr.bf16.mxu0 0
        %1570 = vmatpush1.bf16.xpose.msra.mxu0 0
        %1571 = vmatprep.subr.bf16.mxu0 0
        %1572 = vmatpush1.bf16.xpose.msra.mxu0 0
        %1573 = vmatprep.subr.bf16.mxu0 0
        %1574 = vmatpush1.bf16.xpose.msra.mxu0 0
        %1575 = vmatprep.subr.bf16.mxu0 0
        %1576 = vmatpush1.bf16.xpose.msra.mxu0 0
        %1577 = vmatprep.subr.bf16.mxu0 0
        %1578 = vmatpush1.bf16.xpose.msra.mxu0 0
        %1579 = vmatprep.subr.bf16.mxu0 0
        %1580 = vmatpush1.bf16.xpose.msra.mxu0 0
        %1581 = vmatprep.mubr.bf16.mxu0 0
        %1582 = vmatmul.mubr.bf16.gmra.mrb[0].mxu0 %v1544
        %v1583 = vpop.f32.mrb[0].mxu0
        %v1584 = vadd.f32 %v1449, %v1583
        %v1585 = vpop.f32.mrb[0].mxu0
        %v1586 = vpop.f32.mrb[0].mxu0
        %v1587 = vpop.f32.mrb[0].mxu0
        %1588 = vdwg.mxu0
        %v1590 = vsel %vm1450, %v1434, 0
        %v1593 = vsel %vm1450, %v1441, 0
        %1595 = vmatprep.subr.bf16.mxu0 0
        %1596 = vmatpush1.bf16.xpose.msra.mxu0 %v1593
        %1597 = vmatprep.subr.bf16.mxu0 0
        %1598 = vmatpush1.bf16.xpose.msra.mxu0 0
        %1599 = vmatprep.subr.bf16.mxu0 0
        %1600 = vmatpush1.bf16.xpose.msra.mxu0 0
        %1601 = vmatprep.subr.bf16.mxu0 0
        %1602 = vmatpush1.bf16.xpose.msra.mxu0 0
        %1603 = vmatprep.subr.bf16.mxu0 0
        %1604 = vmatpush1.bf16.xpose.msra.mxu0 0
        %1605 = vmatprep.subr.bf16.mxu0 0
        %1606 = vmatpush1.bf16.xpose.msra.mxu0 0
        %1607 = vmatprep.subr.bf16.mxu0 0
        %1608 = vmatpush1.bf16.xpose.msra.mxu0 0
        %1609 = vmatprep.subr.bf16.mxu0 0
        %1610 = vmatpush1.bf16.xpose.msra.mxu0 0
        %1611 = vmatprep.subr.bf16.mxu0 0
        %1612 = vmatpush1.bf16.xpose.msra.mxu0 0
        %1613 = vmatprep.subr.bf16.mxu0 0
        %1614 = vmatpush1.bf16.xpose.msra.mxu0 0
        %1615 = vmatprep.subr.bf16.mxu0 0
        %1616 = vmatpush1.bf16.xpose.msra.mxu0 0
        %1617 = vmatprep.subr.bf16.mxu0 0
        %1618 = vmatpush1.bf16.xpose.msra.mxu0 0
        %1619 = vmatprep.subr.bf16.mxu0 0
        %1620 = vmatpush1.bf16.xpose.msra.mxu0 0
        %1621 = vmatprep.subr.bf16.mxu0 0
        %1622 = vmatpush1.bf16.xpose.msra.mxu0 0
        %1623 = vmatprep.subr.bf16.mxu0 0
        %1624 = vmatpush1.bf16.xpose.msra.mxu0 0
        %1625 = vmatprep.subr.bf16.mxu0 0
        %1626 = vmatpush1.bf16.xpose.msra.mxu0 0
        %1627 = vmatprep.mubr.bf16.mxu0 0
        %1628 = vmatmul.mubr.bf16.gmra.mrb[0].mxu0 %v1590
        %v1629 = vpop.f32.mrb[0].mxu0
        %v1630 = vadd.f32 %v1449, %v1629
        %v1631 = vpop.f32.mrb[0].mxu0
        %v1632 = vpop.f32.mrb[0].mxu0
        %v1633 = vpop.f32.mrb[0].mxu0
        %1634 = vdwg.mxu0
        %vm1635 = vcmask 64512
        %v1636 = vsel %vm1635, %v1492, -inf
        %1637 = vmax.xlane.f32.xlu0 %v1636
        %v1638 = vpop.xlane.xlu0 %1637
        %v1639 = vsel %vm1635, %v1538, -inf
        %1640 = vmax.xlane.f32.xlu0 %v1639
        %v1641 = vpop.xlane.xlu0 %1640
        %v1642 = vsel %vm1635, %v1584, -inf
        %1643 = vmax.xlane.f32.xlu0 %v1642
        %v1644 = vpop.xlane.xlu0 %1643
        %v1645 = vsel %vm1635, %v1630, -inf
        %1646 = vmax.xlane.f32.xlu0 %v1645
        %v1647 = vpop.xlane.xlu0 %1646
        %v1648 = vsub.f32 %v1492, %v1638
        %v1649 = vsub.f32 %v1538, %v1641
        %v1650 = vsub.f32 %v1584, %v1644
        %v1651 = vsub.f32 %v1630, %v1647
        %v1652 = vmul.f32 %v1648, 1.442695
        %v1653 = vpow.pop %v1652
        %v1654 = vmul.f32 %v1649, 1.442695
        %v1655 = vpow.pop %v1654
        %v1656 = vmul.f32 %v1650, 1.442695
        %v1657 = vpow.pop %v1656
        %v1658 = vmul.f32 %v1651, 1.442695
        %v1659 = vpow.pop %v1658
        %v1660 = vsel %vm1635, %v1653, 0.0
        %1661 = vadd.xlane.f32.xlu0 %v1660
        %v1662 = vpop.xlane.xlu0 %1661
        %v1663 = vsel %vm1635, %v1655, 0.0
        %1664 = vadd.xlane.f32.xlu0 %v1663
        %v1665 = vpop.xlane.xlu0 %1664
        %v1666 = vsel %vm1635, %v1657, 0.0
        %1667 = vadd.xlane.f32.xlu0 %v1666
        %v1668 = vpop.xlane.xlu0 %1667
        %v1669 = vsel %vm1635, %v1659, 0.0
        %1670 = vadd.xlane.f32.xlu0 %v1669
        %v1671 = vpop.xlane.xlu0 %1670
        %v1672 = vrcp.pop %v1662
        %v1673 = vrcp.pop %v1665
        %v1674 = vrcp.pop %v1668
        %v1675 = vrcp.pop %v1671
        %v1676 = vmul.f32 %v1653, %v1672
        %v1677 = vmul.f32 %v1655, %v1673
        %v1678 = vmul.f32 %v1657, %v1674
        %v1679 = vmul.f32 %v1659, %v1675
        %v1680 = vpack.c.bf16 %v1676, %v1676
        %v1681 = vpack.c.bf16 %v1677, %v1677
        %v1682 = vpack.c.bf16 %v1678, %v1678
        %v1683 = vpack.c.bf16 %v1679, %v1679
        %v1685 = vsel %vm1635, %v1680, 0
        %vm1687 = vcmask 1043456
        %v1689 = vsel %vm1687, %v1427, 0
        %1691 = vmatprep.subr.bf16.mxu0 0
        %1692 = vmatpush1.bf16.msra.mxu0 %v1689
        %1693 = vmatprep.subr.bf16.mxu0 0
        %1694 = vmatpush1.bf16.msra.mxu0 0
        %1695 = vmatprep.subr.bf16.mxu0 0
        %1696 = vmatpush1.bf16.msra.mxu0 0
        %1697 = vmatprep.subr.bf16.mxu0 0
        %1698 = vmatpush1.bf16.msra.mxu0 0
        %1699 = vmatprep.subr.bf16.mxu0 0
        %1700 = vmatpush1.bf16.msra.mxu0 0
        %1701 = vmatprep.subr.bf16.mxu0 0
        %1702 = vmatpush1.bf16.msra.mxu0 0
        %1703 = vmatprep.subr.bf16.mxu0 0
        %1704 = vmatpush1.bf16.msra.mxu0 0
        %1705 = vmatprep.subr.bf16.mxu0 0
        %1706 = vmatpush1.bf16.msra.mxu0 0
        %1707 = vmatprep.subr.bf16.mxu0 0
        %1708 = vmatpush1.bf16.msra.mxu0 0
        %1709 = vmatprep.subr.bf16.mxu0 0
        %1710 = vmatpush1.bf16.msra.mxu0 0
        %1711 = vmatprep.subr.bf16.mxu0 0
        %1712 = vmatpush1.bf16.msra.mxu0 0
        %1713 = vmatprep.subr.bf16.mxu0 0
        %1714 = vmatpush1.bf16.msra.mxu0 0
        %1715 = vmatprep.subr.bf16.mxu0 0
        %1716 = vmatpush1.bf16.msra.mxu0 0
        %1717 = vmatprep.subr.bf16.mxu0 0
        %1718 = vmatpush1.bf16.msra.mxu0 0
        %1719 = vmatprep.subr.bf16.mxu0 0
        %1720 = vmatpush1.bf16.msra.mxu0 0
        %1721 = vmatprep.subr.bf16.mxu0 0
        %1722 = vmatpush1.bf16.msra.mxu0 0
        %1723 = vmatprep.mubr.bf16.mxu0 0
        %1724 = vmatmul.mubr.bf16.gmra.mrb[0].mxu0 %v1685
        %v1725 = vpop.f32.mrb[0].mxu0
        %v1726 = vadd.f32 0.0, %v1725
        %v1727 = vpop.f32.mrb[0].mxu0
        %v1728 = vpop.f32.mrb[0].mxu0
        %v1729 = vpop.f32.mrb[0].mxu0
        %1730 = vdwg.mxu0
        %v1732 = vsel %vm1635, %v1681, 0
        %v1735 = vsel %vm1687, %v1444, 0
        %1737 = vmatprep.subr.bf16.mxu0 0
        %1738 = vmatpush1.bf16.msra.mxu0 %v1735
        %1739 = vmatprep.subr.bf16.mxu0 0
        %1740 = vmatpush1.bf16.msra.mxu0 0
        %1741 = vmatprep.subr.bf16.mxu0 0
        %1742 = vmatpush1.bf16.msra.mxu0 0
        %1743 = vmatprep.subr.bf16.mxu0 0
        %1744 = vmatpush1.bf16.msra.mxu0 0
        %1745 = vmatprep.subr.bf16.mxu0 0
        %1746 = vmatpush1.bf16.msra.mxu0 0
        %1747 = vmatprep.subr.bf16.mxu0 0
        %1748 = vmatpush1.bf16.msra.mxu0 0
        %1749 = vmatprep.subr.bf16.mxu0 0
        %1750 = vmatpush1.bf16.msra.mxu0 0
        %1751 = vmatprep.subr.bf16.mxu0 0
        %1752 = vmatpush1.bf16.msra.mxu0 0
        %1753 = vmatprep.subr.bf16.mxu0 0
        %1754 = vmatpush1.bf16.msra.mxu0 0
        %1755 = vmatprep.subr.bf16.mxu0 0
        %1756 = vmatpush1.bf16.msra.mxu0 0
        %1757 = vmatprep.subr.bf16.mxu0 0
        %1758 = vmatpush1.bf16.msra.mxu0 0
        %1759 = vmatprep.subr.bf16.mxu0 0
        %1760 = vmatpush1.bf16.msra.mxu0 0
        %1761 = vmatprep.subr.bf16.mxu0 0
        %1762 = vmatpush1.bf16.msra.mxu0 0
        %1763 = vmatprep.subr.bf16.mxu0 0
        %1764 = vmatpush1.bf16.msra.mxu0 0
        %1765 = vmatprep.subr.bf16.mxu0 0
        %1766 = vmatpush1.bf16.msra.mxu0 0
        %1767 = vmatprep.subr.bf16.mxu0 0
        %1768 = vmatpush1.bf16.msra.mxu0 0
        %1769 = vmatprep.mubr.bf16.mxu0 0
        %1770 = vmatmul.mubr.bf16.gmra.mrb[0].mxu0 %v1732
        %v1771 = vpop.f32.mrb[0].mxu0
        %v1772 = vadd.f32 0.0, %v1771
        %v1773 = vpop.f32.mrb[0].mxu0
        %v1774 = vpop.f32.mrb[0].mxu0
        %v1775 = vpop.f32.mrb[0].mxu0
        %1776 = vdwg.mxu0
        %v1778 = vsel %vm1635, %v1682, 0
        %v1781 = vsel %vm1687, %v1446, 0
        %1783 = vmatprep.subr.bf16.mxu0 0
        %1784 = vmatpush1.bf16.msra.mxu0 %v1781
        %1785 = vmatprep.subr.bf16.mxu0 0
        %1786 = vmatpush1.bf16.msra.mxu0 0
        %1787 = vmatprep.subr.bf16.mxu0 0
        %1788 = vmatpush1.bf16.msra.mxu0 0
        %1789 = vmatprep.subr.bf16.mxu0 0
        %1790 = vmatpush1.bf16.msra.mxu0 0
        %1791 = vmatprep.subr.bf16.mxu0 0
        %1792 = vmatpush1.bf16.msra.mxu0 0
        %1793 = vmatprep.subr.bf16.mxu0 0
        %1794 = vmatpush1.bf16.msra.mxu0 0
        %1795 = vmatprep.subr.bf16.mxu0 0
        %1796 = vmatpush1.bf16.msra.mxu0 0
        %1797 = vmatprep.subr.bf16.mxu0 0
        %1798 = vmatpush1.bf16.msra.mxu0 0
        %1799 = vmatprep.subr.bf16.mxu0 0
        %1800 = vmatpush1.bf16.msra.mxu0 0
        %1801 = vmatprep.subr.bf16.mxu0 0
        %1802 = vmatpush1.bf16.msra.mxu0 0
        %1803 = vmatprep.subr.bf16.mxu0 0
        %1804 = vmatpush1.bf16.msra.mxu0 0
        %1805 = vmatprep.subr.bf16.mxu0 0
        %1806 = vmatpush1.bf16.msra.mxu0 0
        %1807 = vmatprep.subr.bf16.mxu0 0
        %1808 = vmatpush1.bf16.msra.mxu0 0
        %1809 = vmatprep.subr.bf16.mxu0 0
        %1810 = vmatpush1.bf16.msra.mxu0 0
        %1811 = vmatprep.subr.bf16.mxu0 0
        %1812 = vmatpush1.bf16.msra.mxu0 0
        %1813 = vmatprep.subr.bf16.mxu0 0
        %1814 = vmatpush1.bf16.msra.mxu0 0
        %1815 = vmatprep.mubr.bf16.mxu0 0
        %1816 = vmatmul.mubr.bf16.gmra.mrb[0].mxu0 %v1778
        %v1817 = vpop.f32.mrb[0].mxu0
        %v1818 = vadd.f32 0.0, %v1817
        %v1819 = vpop.f32.mrb[0].mxu0
        %v1820 = vpop.f32.mrb[0].mxu0
        %v1821 = vpop.f32.mrb[0].mxu0
        %1822 = vdwg.mxu0
        %v1824 = vsel %vm1635, %v1683, 0
        %v1827 = vsel %vm1687, %v1448, 0
        %1829 = vmatprep.subr.bf16.mxu0 0
        %1830 = vmatpush1.bf16.msra.mxu0 %v1827
        %1831 = vmatprep.subr.bf16.mxu0 0
        %1832 = vmatpush1.bf16.msra.mxu0 0
        %1833 = vmatprep.subr.bf16.mxu0 0
        %1834 = vmatpush1.bf16.msra.mxu0 0
        %1835 = vmatprep.subr.bf16.mxu0 0
        %1836 = vmatpush1.bf16.msra.mxu0 0
        %1837 = vmatprep.subr.bf16.mxu0 0
        %1838 = vmatpush1.bf16.msra.mxu0 0
        %1839 = vmatprep.subr.bf16.mxu0 0
        %1840 = vmatpush1.bf16.msra.mxu0 0
        %1841 = vmatprep.subr.bf16.mxu0 0
        %1842 = vmatpush1.bf16.msra.mxu0 0
        %1843 = vmatprep.subr.bf16.mxu0 0
        %1844 = vmatpush1.bf16.msra.mxu0 0
        %1845 = vmatprep.subr.bf16.mxu0 0
        %1846 = vmatpush1.bf16.msra.mxu0 0
        %1847 = vmatprep.subr.bf16.mxu0 0
        %1848 = vmatpush1.bf16.msra.mxu0 0
        %1849 = vmatprep.subr.bf16.mxu0 0
        %1850 = vmatpush1.bf16.msra.mxu0 0
        %1851 = vmatprep.subr.bf16.mxu0 0
        %1852 = vmatpush1.bf16.msra.mxu0 0
        %1853 = vmatprep.subr.bf16.mxu0 0
        %1854 = vmatpush1.bf16.msra.mxu0 0
        %1855 = vmatprep.subr.bf16.mxu0 0
        %1856 = vmatpush1.bf16.msra.mxu0 0
        %1857 = vmatprep.subr.bf16.mxu0 0
        %1858 = vmatpush1.bf16.msra.mxu0 0
        %1859 = vmatprep.subr.bf16.mxu0 0
        %1860 = vmatpush1.bf16.msra.mxu0 0
        %1861 = vmatprep.mubr.bf16.mxu0 0
        %1862 = vmatmul.mubr.bf16.gmra.mrb[0].mxu0 %v1824
        %v1863 = vpop.f32.mrb[0].mxu0
        %v1864 = vadd.f32 0.0, %v1863
        %v1865 = vpop.f32.mrb[0].mxu0
        %v1866 = vpop.f32.mrb[0].mxu0
        %v1867 = vpop.f32.mrb[0].mxu0
        %1868 = vdwg.mxu0
        %1870 = vrot.lane.b32.xlu0 %v1772, 32
        %v1871 = vpop.permute.xlu0 %1870
        %1874 = vrot.lane.b32.xlu0 %v1818, 64
        %v1875 = vpop.permute.xlu0 %1874
        %1878 = vrot.lane.b32.xlu0 %v1864, 96
        %v1879 = vpop.permute.xlu0 %1878
        %v1881 = vsel %vm1450, %v1726, %v1871
        %vm1882 = vcmask 523264
        %v1883 = vsel %vm1882, %v1881, %v1875
        %vm1884 = vcmask 785408
        %v1885 = vsel %vm1884, %v1883, %v1879
        %v1886 = vpack.c.bf16 %v1424, %v1424
        %v1887 = vpack.c.bf16 %v1380, %v1380
        %v1888 = vpack.c.bf16 %v1420, %v1420
        %1890 = vrot.lane.b32.xlu0 %v1886, 96
        %v1891 = vpop.permute.xlu0 %1890
        %1892 = vrot.lane.b32.xlu0 %v1886, 64
        %v1893 = vpop.permute.xlu0 %1892
        %1894 = vrot.lane.b32.xlu0 %v1886, 32
        %v1895 = vpop.permute.xlu0 %1894
        %1897 = vrot.lane.b32.xlu0 %v1887, 96
        %v1898 = vpop.permute.xlu0 %1897
        %1899 = vrot.lane.b32.xlu0 %v1887, 64
        %v1900 = vpop.permute.xlu0 %1899
        %1901 = vrot.lane.b32.xlu0 %v1887, 32
        %v1902 = vpop.permute.xlu0 %1901
        %1904 = vrot.lane.b32.xlu0 %v1888, 96
        %v1905 = vpop.permute.xlu0 %1904
        %1906 = vrot.lane.b32.xlu0 %v1888, 64
        %v1907 = vpop.permute.xlu0 %1906
        %1908 = vrot.lane.b32.xlu0 %v1888, 32
        %v1909 = vpop.permute.xlu0 %1908
        %s1910 = scalar_lea.vmem %s2, 8
        %v1911 = vld [vmem:[%s1910] sm:$0xff]
        %v1913 = vsel %vm1450, %v1886, 0
        %v1916 = vsel %vm1450, %v1887, 0
        %1918 = vmatprep.subr.bf16.mxu0 0
        %1919 = vmatpush1.bf16.xpose.msra.mxu0 %v1916
        %1920 = vmatprep.subr.bf16.mxu0 0
        %1921 = vmatpush1.bf16.xpose.msra.mxu0 0
        %1922 = vmatprep.subr.bf16.mxu0 0
        %1923 = vmatpush1.bf16.xpose.msra.mxu0 0
        %1924 = vmatprep.subr.bf16.mxu0 0
        %1925 = vmatpush1.bf16.xpose.msra.mxu0 0
        %1926 = vmatprep.subr.bf16.mxu0 0
        %1927 = vmatpush1.bf16.xpose.msra.mxu0 0
        %1928 = vmatprep.subr.bf16.mxu0 0
        %1929 = vmatpush1.bf16.xpose.msra.mxu0 0
        %1930 = vmatprep.subr.bf16.mxu0 0
        %1931 = vmatpush1.bf16.xpose.msra.mxu0 0
        %1932 = vmatprep.subr.bf16.mxu0 0
        %1933 = vmatpush1.bf16.xpose.msra.mxu0 0
        %1934 = vmatprep.subr.bf16.mxu0 0
        %1935 = vmatpush1.bf16.xpose.msra.mxu0 0
        %1936 = vmatprep.subr.bf16.mxu0 0
        %1937 = vmatpush1.bf16.xpose.msra.mxu0 0
        %1938 = vmatprep.subr.bf16.mxu0 0
        %1939 = vmatpush1.bf16.xpose.msra.mxu0 0
        %1940 = vmatprep.subr.bf16.mxu0 0
        %1941 = vmatpush1.bf16.xpose.msra.mxu0 0
        %1942 = vmatprep.subr.bf16.mxu0 0
        %1943 = vmatpush1.bf16.xpose.msra.mxu0 0
        %1944 = vmatprep.subr.bf16.mxu0 0
        %1945 = vmatpush1.bf16.xpose.msra.mxu0 0
        %1946 = vmatprep.subr.bf16.mxu0 0
        %1947 = vmatpush1.bf16.xpose.msra.mxu0 0
        %1948 = vmatprep.subr.bf16.mxu0 0
        %1949 = vmatpush1.bf16.xpose.msra.mxu0 0
        %1950 = vmatprep.mubr.bf16.mxu0 0
        %1951 = vmatmul.mubr.bf16.gmra.mrb[0].mxu0 %v1913
        %v1952 = vpop.f32.mrb[0].mxu0
        %v1953 = vadd.f32 %v1911, %v1952
        %v1954 = vpop.f32.mrb[0].mxu0
        %v1955 = vpop.f32.mrb[0].mxu0
        %v1956 = vpop.f32.mrb[0].mxu0
        %1957 = vdwg.mxu0
        %v1959 = vsel %vm1450, %v1891, 0
        %v1962 = vsel %vm1450, %v1898, 0
        %1964 = vmatprep.subr.bf16.mxu0 0
        %1965 = vmatpush1.bf16.xpose.msra.mxu0 %v1962
        %1966 = vmatprep.subr.bf16.mxu0 0
        %1967 = vmatpush1.bf16.xpose.msra.mxu0 0
        %1968 = vmatprep.subr.bf16.mxu0 0
        %1969 = vmatpush1.bf16.xpose.msra.mxu0 0
        %1970 = vmatprep.subr.bf16.mxu0 0
        %1971 = vmatpush1.bf16.xpose.msra.mxu0 0
        %1972 = vmatprep.subr.bf16.mxu0 0
        %1973 = vmatpush1.bf16.xpose.msra.mxu0 0
        %1974 = vmatprep.subr.bf16.mxu0 0
        %1975 = vmatpush1.bf16.xpose.msra.mxu0 0
        %1976 = vmatprep.subr.bf16.mxu0 0
        %1977 = vmatpush1.bf16.xpose.msra.mxu0 0
        %1978 = vmatprep.subr.bf16.mxu0 0
        %1979 = vmatpush1.bf16.xpose.msra.mxu0 0
        %1980 = vmatprep.subr.bf16.mxu0 0
        %1981 = vmatpush1.bf16.xpose.msra.mxu0 0
        %1982 = vmatprep.subr.bf16.mxu0 0
        %1983 = vmatpush1.bf16.xpose.msra.mxu0 0
        %1984 = vmatprep.subr.bf16.mxu0 0
        %1985 = vmatpush1.bf16.xpose.msra.mxu0 0
        %1986 = vmatprep.subr.bf16.mxu0 0
        %1987 = vmatpush1.bf16.xpose.msra.mxu0 0
        %1988 = vmatprep.subr.bf16.mxu0 0
        %1989 = vmatpush1.bf16.xpose.msra.mxu0 0
        %1990 = vmatprep.subr.bf16.mxu0 0
        %1991 = vmatpush1.bf16.xpose.msra.mxu0 0
        %1992 = vmatprep.subr.bf16.mxu0 0
        %1993 = vmatpush1.bf16.xpose.msra.mxu0 0
        %1994 = vmatprep.subr.bf16.mxu0 0
        %1995 = vmatpush1.bf16.xpose.msra.mxu0 0
        %1996 = vmatprep.mubr.bf16.mxu0 0
        %1997 = vmatmul.mubr.bf16.gmra.mrb[0].mxu0 %v1959
        %v1998 = vpop.f32.mrb[0].mxu0
        %v1999 = vadd.f32 %v1911, %v1998
        %v2000 = vpop.f32.mrb[0].mxu0
        %v2001 = vpop.f32.mrb[0].mxu0
        %v2002 = vpop.f32.mrb[0].mxu0
        %2003 = vdwg.mxu0
        %v2005 = vsel %vm1450, %v1893, 0
        %v2008 = vsel %vm1450, %v1900, 0
        %2010 = vmatprep.subr.bf16.mxu0 0
        %2011 = vmatpush1.bf16.xpose.msra.mxu0 %v2008
        %2012 = vmatprep.subr.bf16.mxu0 0
        %2013 = vmatpush1.bf16.xpose.msra.mxu0 0
        %2014 = vmatprep.subr.bf16.mxu0 0
        %2015 = vmatpush1.bf16.xpose.msra.mxu0 0
        %2016 = vmatprep.subr.bf16.mxu0 0
        %2017 = vmatpush1.bf16.xpose.msra.mxu0 0
        %2018 = vmatprep.subr.bf16.mxu0 0
        %2019 = vmatpush1.bf16.xpose.msra.mxu0 0
        %2020 = vmatprep.subr.bf16.mxu0 0
        %2021 = vmatpush1.bf16.xpose.msra.mxu0 0
        %2022 = vmatprep.subr.bf16.mxu0 0
        %2023 = vmatpush1.bf16.xpose.msra.mxu0 0
        %2024 = vmatprep.subr.bf16.mxu0 0
        %2025 = vmatpush1.bf16.xpose.msra.mxu0 0
        %2026 = vmatprep.subr.bf16.mxu0 0
        %2027 = vmatpush1.bf16.xpose.msra.mxu0 0
        %2028 = vmatprep.subr.bf16.mxu0 0
        %2029 = vmatpush1.bf16.xpose.msra.mxu0 0
        %2030 = vmatprep.subr.bf16.mxu0 0
        %2031 = vmatpush1.bf16.xpose.msra.mxu0 0
        %2032 = vmatprep.subr.bf16.mxu0 0
        %2033 = vmatpush1.bf16.xpose.msra.mxu0 0
        %2034 = vmatprep.subr.bf16.mxu0 0
        %2035 = vmatpush1.bf16.xpose.msra.mxu0 0
        %2036 = vmatprep.subr.bf16.mxu0 0
        %2037 = vmatpush1.bf16.xpose.msra.mxu0 0
        %2038 = vmatprep.subr.bf16.mxu0 0
        %2039 = vmatpush1.bf16.xpose.msra.mxu0 0
        %2040 = vmatprep.subr.bf16.mxu0 0
        %2041 = vmatpush1.bf16.xpose.msra.mxu0 0
        %2042 = vmatprep.mubr.bf16.mxu0 0
        %2043 = vmatmul.mubr.bf16.gmra.mrb[0].mxu0 %v2005
        %v2044 = vpop.f32.mrb[0].mxu0
        %v2045 = vadd.f32 %v1911, %v2044
        %v2046 = vpop.f32.mrb[0].mxu0
        %v2047 = vpop.f32.mrb[0].mxu0
        %v2048 = vpop.f32.mrb[0].mxu0
        %2049 = vdwg.mxu0
        %v2051 = vsel %vm1450, %v1895, 0
        %v2054 = vsel %vm1450, %v1902, 0
        %2056 = vmatprep.subr.bf16.mxu0 0
        %2057 = vmatpush1.bf16.xpose.msra.mxu0 %v2054
        %2058 = vmatprep.subr.bf16.mxu0 0
        %2059 = vmatpush1.bf16.xpose.msra.mxu0 0
        %2060 = vmatprep.subr.bf16.mxu0 0
        %2061 = vmatpush1.bf16.xpose.msra.mxu0 0
        %2062 = vmatprep.subr.bf16.mxu0 0
        %2063 = vmatpush1.bf16.xpose.msra.mxu0 0
        %2064 = vmatprep.subr.bf16.mxu0 0
        %2065 = vmatpush1.bf16.xpose.msra.mxu0 0
        %2066 = vmatprep.subr.bf16.mxu0 0
        %2067 = vmatpush1.bf16.xpose.msra.mxu0 0
        %2068 = vmatprep.subr.bf16.mxu0 0
        %2069 = vmatpush1.bf16.xpose.msra.mxu0 0
        %2070 = vmatprep.subr.bf16.mxu0 0
        %2071 = vmatpush1.bf16.xpose.msra.mxu0 0
        %2072 = vmatprep.subr.bf16.mxu0 0
        %2073 = vmatpush1.bf16.xpose.msra.mxu0 0
        %2074 = vmatprep.subr.bf16.mxu0 0
        %2075 = vmatpush1.bf16.xpose.msra.mxu0 0
        %2076 = vmatprep.subr.bf16.mxu0 0
        %2077 = vmatpush1.bf16.xpose.msra.mxu0 0
        %2078 = vmatprep.subr.bf16.mxu0 0
        %2079 = vmatpush1.bf16.xpose.msra.mxu0 0
        %2080 = vmatprep.subr.bf16.mxu0 0
        %2081 = vmatpush1.bf16.xpose.msra.mxu0 0
        %2082 = vmatprep.subr.bf16.mxu0 0
        %2083 = vmatpush1.bf16.xpose.msra.mxu0 0
        %2084 = vmatprep.subr.bf16.mxu0 0
        %2085 = vmatpush1.bf16.xpose.msra.mxu0 0
        %2086 = vmatprep.subr.bf16.mxu0 0
        %2087 = vmatpush1.bf16.xpose.msra.mxu0 0
        %2088 = vmatprep.mubr.bf16.mxu0 0
        %2089 = vmatmul.mubr.bf16.gmra.mrb[0].mxu0 %v2051
        %v2090 = vpop.f32.mrb[0].mxu0
        %v2091 = vadd.f32 %v1911, %v2090
        %v2092 = vpop.f32.mrb[0].mxu0
        %v2093 = vpop.f32.mrb[0].mxu0
        %v2094 = vpop.f32.mrb[0].mxu0
        %2095 = vdwg.mxu0
        %v2096 = vsel %vm1635, %v1953, -inf
        %2097 = vmax.xlane.f32.xlu0 %v2096
        %v2098 = vpop.xlane.xlu0 %2097
        %v2099 = vsel %vm1635, %v1999, -inf
        %2100 = vmax.xlane.f32.xlu0 %v2099
        %v2101 = vpop.xlane.xlu0 %2100
        %v2102 = vsel %vm1635, %v2045, -inf
        %2103 = vmax.xlane.f32.xlu0 %v2102
        %v2104 = vpop.xlane.xlu0 %2103
        %v2105 = vsel %vm1635, %v2091, -inf
        %2106 = vmax.xlane.f32.xlu0 %v2105
        %v2107 = vpop.xlane.xlu0 %2106
        %v2108 = vsub.f32 %v1953, %v2098
        %v2109 = vsub.f32 %v1999, %v2101
        %v2110 = vsub.f32 %v2045, %v2104
        %v2111 = vsub.f32 %v2091, %v2107
        %v2112 = vmul.f32 %v2108, 1.442695
        %v2113 = vpow.pop %v2112
        %v2114 = vmul.f32 %v2109, 1.442695
        %v2115 = vpow.pop %v2114
        %v2116 = vmul.f32 %v2110, 1.442695
        %v2117 = vpow.pop %v2116
        %v2118 = vmul.f32 %v2111, 1.442695
        %v2119 = vpow.pop %v2118
        %v2120 = vsel %vm1635, %v2113, 0.0
        %2121 = vadd.xlane.f32.xlu0 %v2120
        %v2122 = vpop.xlane.xlu0 %2121
        %v2123 = vsel %vm1635, %v2115, 0.0
        %2124 = vadd.xlane.f32.xlu0 %v2123
        %v2125 = vpop.xlane.xlu0 %2124
        %v2126 = vsel %vm1635, %v2117, 0.0
        %2127 = vadd.xlane.f32.xlu0 %v2126
        %v2128 = vpop.xlane.xlu0 %2127
        %v2129 = vsel %vm1635, %v2119, 0.0
        %2130 = vadd.xlane.f32.xlu0 %v2129
        %v2131 = vpop.xlane.xlu0 %2130
        %v2132 = vrcp.pop %v2122
        %v2133 = vrcp.pop %v2125
        %v2134 = vrcp.pop %v2128
        %v2135 = vrcp.pop %v2131
        %v2136 = vmul.f32 %v2113, %v2132
        %v2137 = vmul.f32 %v2115, %v2133
        %v2138 = vmul.f32 %v2117, %v2134
        %v2139 = vmul.f32 %v2119, %v2135
        %v2140 = vpack.c.bf16 %v2136, %v2136
        %v2141 = vpack.c.bf16 %v2137, %v2137
        %v2142 = vpack.c.bf16 %v2138, %v2138
        %v2143 = vpack.c.bf16 %v2139, %v2139
        %v2145 = vsel %vm1635, %v2140, 0
        %v2148 = vsel %vm1687, %v1888, 0
        %2150 = vmatprep.subr.bf16.mxu0 0
        %2151 = vmatpush1.bf16.msra.mxu0 %v2148
        %2152 = vmatprep.subr.bf16.mxu0 0
        %2153 = vmatpush1.bf16.msra.mxu0 0
        %2154 = vmatprep.subr.bf16.mxu0 0
        %2155 = vmatpush1.bf16.msra.mxu0 0
        %2156 = vmatprep.subr.bf16.mxu0 0
        %2157 = vmatpush1.bf16.msra.mxu0 0
        %2158 = vmatprep.subr.bf16.mxu0 0
        %2159 = vmatpush1.bf16.msra.mxu0 0
        %2160 = vmatprep.subr.bf16.mxu0 0
        %2161 = vmatpush1.bf16.msra.mxu0 0
        %2162 = vmatprep.subr.bf16.mxu0 0
        %2163 = vmatpush1.bf16.msra.mxu0 0
        %2164 = vmatprep.subr.bf16.mxu0 0
        %2165 = vmatpush1.bf16.msra.mxu0 0
        %2166 = vmatprep.subr.bf16.mxu0 0
        %2167 = vmatpush1.bf16.msra.mxu0 0
        %2168 = vmatprep.subr.bf16.mxu0 0
        %2169 = vmatpush1.bf16.msra.mxu0 0
        %2170 = vmatprep.subr.bf16.mxu0 0
        %2171 = vmatpush1.bf16.msra.mxu0 0
        %2172 = vmatprep.subr.bf16.mxu0 0
        %2173 = vmatpush1.bf16.msra.mxu0 0
        %2174 = vmatprep.subr.bf16.mxu0 0
        %2175 = vmatpush1.bf16.msra.mxu0 0
        %2176 = vmatprep.subr.bf16.mxu0 0
        %2177 = vmatpush1.bf16.msra.mxu0 0
        %2178 = vmatprep.subr.bf16.mxu0 0
        %2179 = vmatpush1.bf16.msra.mxu0 0
        %2180 = vmatprep.subr.bf16.mxu0 0
        %2181 = vmatpush1.bf16.msra.mxu0 0
        %2182 = vmatprep.mubr.bf16.mxu0 0
        %2183 = vmatmul.mubr.bf16.gmra.mrb[0].mxu0 %v2145
        %v2184 = vpop.f32.mrb[0].mxu0
        %v2185 = vadd.f32 0.0, %v2184
        %v2186 = vpop.f32.mrb[0].mxu0
        %v2187 = vpop.f32.mrb[0].mxu0
        %v2188 = vpop.f32.mrb[0].mxu0
        %2189 = vdwg.mxu0
        %v2191 = vsel %vm1635, %v2141, 0
        %v2194 = vsel %vm1687, %v1905, 0
        %2196 = vmatprep.subr.bf16.mxu0 0
        %2197 = vmatpush1.bf16.msra.mxu0 %v2194
        %2198 = vmatprep.subr.bf16.mxu0 0
        %2199 = vmatpush1.bf16.msra.mxu0 0
        %2200 = vmatprep.subr.bf16.mxu0 0
        %2201 = vmatpush1.bf16.msra.mxu0 0
        %2202 = vmatprep.subr.bf16.mxu0 0
        %2203 = vmatpush1.bf16.msra.mxu0 0
        %2204 = vmatprep.subr.bf16.mxu0 0
        %2205 = vmatpush1.bf16.msra.mxu0 0
        %2206 = vmatprep.subr.bf16.mxu0 0
        %2207 = vmatpush1.bf16.msra.mxu0 0
        %2208 = vmatprep.subr.bf16.mxu0 0
        %2209 = vmatpush1.bf16.msra.mxu0 0
        %2210 = vmatprep.subr.bf16.mxu0 0
        %2211 = vmatpush1.bf16.msra.mxu0 0
        %2212 = vmatprep.subr.bf16.mxu0 0
        %2213 = vmatpush1.bf16.msra.mxu0 0
        %2214 = vmatprep.subr.bf16.mxu0 0
        %2215 = vmatpush1.bf16.msra.mxu0 0
        %2216 = vmatprep.subr.bf16.mxu0 0
        %2217 = vmatpush1.bf16.msra.mxu0 0
        %2218 = vmatprep.subr.bf16.mxu0 0
        %2219 = vmatpush1.bf16.msra.mxu0 0
        %2220 = vmatprep.subr.bf16.mxu0 0
        %2221 = vmatpush1.bf16.msra.mxu0 0
        %2222 = vmatprep.subr.bf16.mxu0 0
        %2223 = vmatpush1.bf16.msra.mxu0 0
        %2224 = vmatprep.subr.bf16.mxu0 0
        %2225 = vmatpush1.bf16.msra.mxu0 0
        %2226 = vmatprep.subr.bf16.mxu0 0
        %2227 = vmatpush1.bf16.msra.mxu0 0
        %2228 = vmatprep.mubr.bf16.mxu0 0
        %2229 = vmatmul.mubr.bf16.gmra.mrb[0].mxu0 %v2191
        %v2230 = vpop.f32.mrb[0].mxu0
        %v2231 = vadd.f32 0.0, %v2230
        %v2232 = vpop.f32.mrb[0].mxu0
        %v2233 = vpop.f32.mrb[0].mxu0
        %v2234 = vpop.f32.mrb[0].mxu0
        %2235 = vdwg.mxu0
        %v2237 = vsel %vm1635, %v2142, 0
        %v2240 = vsel %vm1687, %v1907, 0
        %2242 = vmatprep.subr.bf16.mxu0 0
        %2243 = vmatpush1.bf16.msra.mxu0 %v2240
        %2244 = vmatprep.subr.bf16.mxu0 0
        %2245 = vmatpush1.bf16.msra.mxu0 0
        %2246 = vmatprep.subr.bf16.mxu0 0
        %2247 = vmatpush1.bf16.msra.mxu0 0
        %2248 = vmatprep.subr.bf16.mxu0 0
        %2249 = vmatpush1.bf16.msra.mxu0 0
        %2250 = vmatprep.subr.bf16.mxu0 0
        %2251 = vmatpush1.bf16.msra.mxu0 0
        %2252 = vmatprep.subr.bf16.mxu0 0
        %2253 = vmatpush1.bf16.msra.mxu0 0
        %2254 = vmatprep.subr.bf16.mxu0 0
        %2255 = vmatpush1.bf16.msra.mxu0 0
        %2256 = vmatprep.subr.bf16.mxu0 0
        %2257 = vmatpush1.bf16.msra.mxu0 0
        %2258 = vmatprep.subr.bf16.mxu0 0
        %2259 = vmatpush1.bf16.msra.mxu0 0
        %2260 = vmatprep.subr.bf16.mxu0 0
        %2261 = vmatpush1.bf16.msra.mxu0 0
        %2262 = vmatprep.subr.bf16.mxu0 0
        %2263 = vmatpush1.bf16.msra.mxu0 0
        %2264 = vmatprep.subr.bf16.mxu0 0
        %2265 = vmatpush1.bf16.msra.mxu0 0
        %2266 = vmatprep.subr.bf16.mxu0 0
        %2267 = vmatpush1.bf16.msra.mxu0 0
        %2268 = vmatprep.subr.bf16.mxu0 0
        %2269 = vmatpush1.bf16.msra.mxu0 0
        %2270 = vmatprep.subr.bf16.mxu0 0
        %2271 = vmatpush1.bf16.msra.mxu0 0
        %2272 = vmatprep.subr.bf16.mxu0 0
        %2273 = vmatpush1.bf16.msra.mxu0 0
        %2274 = vmatprep.mubr.bf16.mxu0 0
        %2275 = vmatmul.mubr.bf16.gmra.mrb[0].mxu0 %v2237
        %v2276 = vpop.f32.mrb[0].mxu0
        %v2277 = vadd.f32 0.0, %v2276
        %v2278 = vpop.f32.mrb[0].mxu0
        %v2279 = vpop.f32.mrb[0].mxu0
        %v2280 = vpop.f32.mrb[0].mxu0
        %2281 = vdwg.mxu0
        %v2283 = vsel %vm1635, %v2143, 0
        %v2286 = vsel %vm1687, %v1909, 0
        %2288 = vmatprep.subr.bf16.mxu0 0
        %2289 = vmatpush1.bf16.msra.mxu0 %v2286
        %2290 = vmatprep.subr.bf16.mxu0 0
        %2291 = vmatpush1.bf16.msra.mxu0 0
        %2292 = vmatprep.subr.bf16.mxu0 0
        %2293 = vmatpush1.bf16.msra.mxu0 0
        %2294 = vmatprep.subr.bf16.mxu0 0
        %2295 = vmatpush1.bf16.msra.mxu0 0
        %2296 = vmatprep.subr.bf16.mxu0 0
        %2297 = vmatpush1.bf16.msra.mxu0 0
        %2298 = vmatprep.subr.bf16.mxu0 0
        %2299 = vmatpush1.bf16.msra.mxu0 0
        %2300 = vmatprep.subr.bf16.mxu0 0
        %2301 = vmatpush1.bf16.msra.mxu0 0
        %2302 = vmatprep.subr.bf16.mxu0 0
        %2303 = vmatpush1.bf16.msra.mxu0 0
        %2304 = vmatprep.subr.bf16.mxu0 0
        %2305 = vmatpush1.bf16.msra.mxu0 0
        %2306 = vmatprep.subr.bf16.mxu0 0
        %2307 = vmatpush1.bf16.msra.mxu0 0
        %2308 = vmatprep.subr.bf16.mxu0 0
        %2309 = vmatpush1.bf16.msra.mxu0 0
        %2310 = vmatprep.subr.bf16.mxu0 0
        %2311 = vmatpush1.bf16.msra.mxu0 0
        %2312 = vmatprep.subr.bf16.mxu0 0
        %2313 = vmatpush1.bf16.msra.mxu0 0
        %2314 = vmatprep.subr.bf16.mxu0 0
        %2315 = vmatpush1.bf16.msra.mxu0 0
        %2316 = vmatprep.subr.bf16.mxu0 0
        %2317 = vmatpush1.bf16.msra.mxu0 0
        %2318 = vmatprep.subr.bf16.mxu0 0
        %2319 = vmatpush1.bf16.msra.mxu0 0
        %2320 = vmatprep.mubr.bf16.mxu0 0
        %2321 = vmatmul.mubr.bf16.gmra.mrb[0].mxu0 %v2283
        %v2322 = vpop.f32.mrb[0].mxu0
        %v2323 = vadd.f32 0.0, %v2322
        %v2324 = vpop.f32.mrb[0].mxu0
        %v2325 = vpop.f32.mrb[0].mxu0
        %v2326 = vpop.f32.mrb[0].mxu0
        %2327 = vdwg.mxu0
        %2329 = vrot.lane.b32.xlu0 %v2231, 32
        %v2330 = vpop.permute.xlu0 %2329
        %2333 = vrot.lane.b32.xlu0 %v2277, 64
        %v2334 = vpop.permute.xlu0 %2333
        %2337 = vrot.lane.b32.xlu0 %v2323, 96
        %v2338 = vpop.permute.xlu0 %2337
        %v2340 = vsel %vm1450, %v2185, %v2330
        %v2341 = vsel %vm1882, %v2340, %v2334
        %v2342 = vsel %vm1884, %v2341, %v2338
        %v2343 = vpack.c.bf16 %v2342, %v1885
        %v2344 = vld [vmem:[%s896] sm:$0xf]
        %v2345 = vld [vmem:[%s896 + $0x4] sm:$0xf]
        %v2346 = vld [vmem:[%s896 + $0x8] sm:$0xf]
        %v2347 = vld [vmem:[%s896 + $0xc] sm:$0xf]
        %v2348 = vld [vmem:[%s896 + $0x10] sm:$0xf]
        %v2349 = vld [vmem:[%s896 + $0x14] sm:$0xf]
        %v2350 = vld [vmem:[%s896 + $0x18] sm:$0xf]
        %v2351 = vld [vmem:[%s896 + $0x1c] sm:$0xf]
        %v2352 = vld [vmem:[%s896 + $0x20] sm:$0xf]
        %v2353 = vld [vmem:[%s896 + $0x24] sm:$0xf]
        %v2354 = vld [vmem:[%s896 + $0x28] sm:$0xf]
        %v2355 = vld [vmem:[%s896 + $0x2c] sm:$0xf]
        %v2356 = vld [vmem:[%s896 + $0x30] sm:$0xf]
        %v2357 = vld [vmem:[%s896 + $0x34] sm:$0xf]
        %v2358 = vld [vmem:[%s896 + $0x38] sm:$0xf]
        %v2359 = vld [vmem:[%s896 + $0x3c] sm:$0xf]
        %v2376 = vunpack.c.l.b16 %v2344
        %v2377 = vunpack.c.l.b16 %v2345
        %v2378 = vunpack.c.l.b16 %v2346
        %v2379 = vunpack.c.l.b16 %v2347
        %v2380 = vunpack.c.l.b16 %v2348
        %v2381 = vunpack.c.l.b16 %v2349
        %v2382 = vunpack.c.l.b16 %v2350
        %v2383 = vunpack.c.l.b16 %v2351
        %v2384 = vunpack.c.l.b16 %v2352
        %v2385 = vunpack.c.l.b16 %v2353
        %v2386 = vunpack.c.l.b16 %v2354
        %v2387 = vunpack.c.l.b16 %v2355
        %v2388 = vunpack.c.l.b16 %v2356
        %v2389 = vunpack.c.l.b16 %v2357
        %v2390 = vunpack.c.l.b16 %v2358
        %v2391 = vunpack.c.l.b16 %v2359
        %v2392 = vpack.c.b16 %v2377, %v2376
        %v2393 = vpack.c.b16 %v2379, %v2378
        %v2394 = vpack.c.b16 %v2381, %v2380
        %v2395 = vpack.c.b16 %v2383, %v2382
        %v2396 = vpack.c.b16 %v2385, %v2384
        %v2397 = vpack.c.b16 %v2387, %v2386
        %v2398 = vpack.c.b16 %v2389, %v2388
        %v2399 = vpack.c.b16 %v2391, %v2390
        %2408 = vmatprep.subr.bf16.mxu0 0
        %2409 = vmatpush1.bf16.msra.mxu0 %v2392
        %2410 = vmatprep.subr.bf16.mxu0 0
        %2411 = vmatpush1.bf16.msra.mxu0 %v2393
        %2412 = vmatprep.subr.bf16.mxu0 0
        %2413 = vmatpush1.bf16.msra.mxu0 %v2394
        %2414 = vmatprep.subr.bf16.mxu0 0
        %2415 = vmatpush1.bf16.msra.mxu0 %v2395
        %2416 = vmatprep.subr.bf16.mxu0 0
        %2417 = vmatpush1.bf16.msra.mxu0 %v2396
        %2418 = vmatprep.subr.bf16.mxu0 0
        %2419 = vmatpush1.bf16.msra.mxu0 %v2397
        %2420 = vmatprep.subr.bf16.mxu0 0
        %2421 = vmatpush1.bf16.msra.mxu0 %v2398
        %2422 = vmatprep.subr.bf16.mxu0 0
        %2423 = vmatpush1.bf16.msra.mxu0 %v2399
        %2424 = vmatprep.subr.bf16.mxu0 0
        %2425 = vmatpush1.bf16.msra.mxu0 0
        %2426 = vmatprep.subr.bf16.mxu0 0
        %2427 = vmatpush1.bf16.msra.mxu0 0
        %2428 = vmatprep.subr.bf16.mxu0 0
        %2429 = vmatpush1.bf16.msra.mxu0 0
        %2430 = vmatprep.subr.bf16.mxu0 0
        %2431 = vmatpush1.bf16.msra.mxu0 0
        %2432 = vmatprep.subr.bf16.mxu0 0
        %2433 = vmatpush1.bf16.msra.mxu0 0
        %2434 = vmatprep.subr.bf16.mxu0 0
        %2435 = vmatpush1.bf16.msra.mxu0 0
        %2436 = vmatprep.subr.bf16.mxu0 0
        %2437 = vmatpush1.bf16.msra.mxu0 0
        %2438 = vmatprep.subr.bf16.mxu0 0
        %2439 = vmatpush1.bf16.msra.mxu0 0
        %2440 = vmatprep.mubr.bf16.mxu0 0
        %2441 = vmatmul.mubr.bf16.gmra.mrb[0].mxu0 %v2343
        %v2442 = vpop.f32.mrb[0].mxu0
        %v2443 = vadd.f32 0.0, %v2442
        %v2444 = vpop.f32.mrb[0].mxu0
        %v2445 = vpop.f32.mrb[0].mxu0
        %v2446 = vadd.f32 0.0, %v2445
        %v2447 = vpop.f32.mrb[0].mxu0
        %2448 = vdwg.mxu0
        %v2449 = vadd.f32 %v1106, %v2443
        %v2450 = vadd.f32 %v1107, %v2446
        %v2451 = vld [vmem:[%s904] sm:$0x1]
        %v2453 = vlaneseq
        %v2454 = vshrl.u32 %v2453, 7
        %v2455 = vsub.s32 0, %v2454
        %v2456 = vrot.slane %v2451, %v2455
        %v2458 = vadd.f32 %v2449, %v2456
        %v2459 = vadd.f32 %v2450, %v2456
        %2460 = vadd.xlane.f32.xlu0 %v2458
        %v2461 = vpop.xlane.xlu0 %2460
        %2462 = vadd.xlane.f32.xlu0 %v2459
        %v2463 = vpop.xlane.xlu0 %2462
        %v2464 = vmul.f32 %v2461, %v1116
        %v2465 = vmul.f32 %v2463, %v1116
        %v2466 = vsub.f32 %v2458, %v2464
        %v2467 = vsub.f32 %v2459, %v2465
        %v2468 = vmul.f32 %v2466, %v2466
        %v2469 = vmul.f32 %v2467, %v2467
        %2470 = vadd.xlane.f32.xlu0 %v2468
        %v2471 = vpop.xlane.xlu0 %2470
        %2472 = vadd.xlane.f32.xlu0 %v2469
        %v2473 = vpop.xlane.xlu0 %2472
        %v2474 = vmul.f32 %v2471, 0.007874016
        %v2475 = vmul.f32 %v2473, 0.007874016
        %v2476 = vrsqrt.pop %v2474
        %v2477 = vmul.f32 %v2474, %v2476
        %vm2478 = vcmp.eq.f32.partialorder %v2474, inf
        %v2479 = vsel %vm2478, %v2474, %v2477
        %vm2480 = vcmp.eq.f32.partialorder %v2474, 0.0
        %v2481 = vand.u32 %v2474, 2147483648
        %v2482 = vsel %vm2480, %v2481, %v2479
        %v2483 = vrsqrt.pop %v2475
        %v2484 = vmul.f32 %v2475, %v2483
        %vm2485 = vcmp.eq.f32.partialorder %v2475, inf
        %v2486 = vsel %vm2485, %v2475, %v2484
        %vm2487 = vcmp.eq.f32.partialorder %v2475, 0.0
        %v2488 = vand.u32 %v2475, 2147483648
        %v2489 = vsel %vm2487, %v2488, %v2486
        %v2490 = vlaneseq
        %v2491 = vshrl.u32 %v2490, 7
        %v2492 = vsub.s32 1, %v2491
        %v2493 = vrot.slane %v1110, %v2492
        %v2494 = vmul.f32 %v2493, %v2466
        %v2495 = vmul.f32 %v2493, %v2467
        %v2496 = vadd.f32 %v2482, 1e-06
        %v2497 = vadd.f32 %v2489, 1e-06
        %v2498 = vrcp.pop %v2496
        %v2499 = vmul.f32 %v2494, %v2498
        %v2500 = vrcp.pop %v2497
        %v2501 = vmul.f32 %v2495, %v2500
        %v2502 = vlaneseq
        %v2503 = vshrl.u32 %v2502, 7
        %v2504 = vsub.s32 1, %v2503
        %v2505 = vrot.slane %v1111, %v2504
        %v2506 = vadd.f32 %v2499, %v2505
        %v2507 = vadd.f32 %v2501, %v2505
        %v2508 = vpack.c.bf16 %v2507, %v2506
        %v2509 = vld [vmem:[%s913] sm:$0xf]
        %v2510 = vld [vmem:[%s913 + $0x4] sm:$0xf]
        %v2511 = vld [vmem:[%s913 + $0x8] sm:$0xf]
        %v2512 = vld [vmem:[%s913 + $0xc] sm:$0xf]
        %v2513 = vld [vmem:[%s913 + $0x10] sm:$0xf]
        %v2514 = vld [vmem:[%s913 + $0x14] sm:$0xf]
        %v2515 = vld [vmem:[%s913 + $0x18] sm:$0xf]
        %v2516 = vld [vmem:[%s913 + $0x1c] sm:$0xf]
        %v2517 = vld [vmem:[%s913 + $0x20] sm:$0xf]
        %v2518 = vld [vmem:[%s913 + $0x24] sm:$0xf]
        %v2519 = vld [vmem:[%s913 + $0x28] sm:$0xf]
        %v2520 = vld [vmem:[%s913 + $0x2c] sm:$0xf]
        %v2521 = vld [vmem:[%s913 + $0x30] sm:$0xf]
        %v2522 = vld [vmem:[%s913 + $0x34] sm:$0xf]
        %v2523 = vld [vmem:[%s913 + $0x38] sm:$0xf]
        %v2524 = vld [vmem:[%s913 + $0x3c] sm:$0xf]
        %v2525 = vld [vmem:[%s1074] sm:$0x1]
        %v2527 = vlaneseq
        %v2528 = vshrl.u32 %v2527, 7
        %v2529 = vsub.s32 0, %v2528
        %v2530 = vrot.slane %v2525, %v2529
        %v2548 = vunpack.c.l.b16 %v2509
        %v2549 = vunpack.c.l.b16 %v2510
        %v2550 = vunpack.c.l.b16 %v2511
        %v2551 = vunpack.c.l.b16 %v2512
        %v2552 = vunpack.c.l.b16 %v2513
        %v2553 = vunpack.c.l.b16 %v2514
        %v2554 = vunpack.c.l.b16 %v2515
        %v2555 = vunpack.c.l.b16 %v2516
        %v2556 = vunpack.c.l.b16 %v2517
        %v2557 = vunpack.c.l.b16 %v2518
        %v2558 = vunpack.c.l.b16 %v2519
        %v2559 = vunpack.c.l.b16 %v2520
        %v2560 = vunpack.c.l.b16 %v2521
        %v2561 = vunpack.c.l.b16 %v2522
        %v2562 = vunpack.c.l.b16 %v2523
        %v2563 = vunpack.c.l.b16 %v2524
        %v2564 = vpack.c.b16 %v2549, %v2548
        %v2565 = vpack.c.b16 %v2551, %v2550
        %v2566 = vpack.c.b16 %v2553, %v2552
        %v2567 = vpack.c.b16 %v2555, %v2554
        %v2568 = vpack.c.b16 %v2557, %v2556
        %v2569 = vpack.c.b16 %v2559, %v2558
        %v2570 = vpack.c.b16 %v2561, %v2560
        %v2571 = vpack.c.b16 %v2563, %v2562
        %2580 = vmatprep.subr.bf16.mxu0 0
        %2581 = vmatpush1.bf16.msra.mxu0 %v2564
        %2582 = vmatprep.subr.bf16.mxu0 0
        %2583 = vmatpush1.bf16.msra.mxu0 %v2565
        %2584 = vmatprep.subr.bf16.mxu0 0
        %2585 = vmatpush1.bf16.msra.mxu0 %v2566
        %2586 = vmatprep.subr.bf16.mxu0 0
        %2587 = vmatpush1.bf16.msra.mxu0 %v2567
        %2588 = vmatprep.subr.bf16.mxu0 0
        %2589 = vmatpush1.bf16.msra.mxu0 %v2568
        %2590 = vmatprep.subr.bf16.mxu0 0
        %2591 = vmatpush1.bf16.msra.mxu0 %v2569
        %2592 = vmatprep.subr.bf16.mxu0 0
        %2593 = vmatpush1.bf16.msra.mxu0 %v2570
        %2594 = vmatprep.subr.bf16.mxu0 0
        %2595 = vmatpush1.bf16.msra.mxu0 %v2571
        %2596 = vmatprep.subr.bf16.mxu0 0
        %2597 = vmatpush1.bf16.msra.mxu0 0
        %2598 = vmatprep.subr.bf16.mxu0 0
        %2599 = vmatpush1.bf16.msra.mxu0 0
        %2600 = vmatprep.subr.bf16.mxu0 0
        %2601 = vmatpush1.bf16.msra.mxu0 0
        %2602 = vmatprep.subr.bf16.mxu0 0
        %2603 = vmatpush1.bf16.msra.mxu0 0
        %2604 = vmatprep.subr.bf16.mxu0 0
        %2605 = vmatpush1.bf16.msra.mxu0 0
        %2606 = vmatprep.subr.bf16.mxu0 0
        %2607 = vmatpush1.bf16.msra.mxu0 0
        %2608 = vmatprep.subr.bf16.mxu0 0
        %2609 = vmatpush1.bf16.msra.mxu0 0
        %2610 = vmatprep.subr.bf16.mxu0 0
        %2611 = vmatpush1.bf16.msra.mxu0 0
        %2612 = vmatprep.mubr.bf16.mxu0 0
        %2613 = vmatmul.mubr.bf16.gmra.mrb[0].mxu0 %v2508
        %v2614 = vpop.f32.mrb[0].mxu0
        %v2615 = vadd.f32 %v2530, %v2614
        %v2616 = vpop.f32.mrb[0].mxu0
        %v2617 = vpop.f32.mrb[0].mxu0
        %v2618 = vadd.f32 %v2530, %v2617
        %v2619 = vpop.f32.mrb[0].mxu0
        %2620 = vdwg.mxu0
        %v2621 = vmul.f32 %v2615, 0.17677669
        %v2622 = vmul.f32 %v2618, 0.17677669
        %v2623 = vld [vmem:[%s922] sm:$0xff]
        %v2624 = vld [vmem:[%s922 + $0x8] sm:$0xff]
        %v2625 = vld [vmem:[%s922 + $0x10] sm:$0xff]
        %v2626 = vld [vmem:[%s922 + $0x18] sm:$0xff]
        %v2627 = vld [vmem:[%s922 + $0x20] sm:$0xff]
        %v2628 = vld [vmem:[%s922 + $0x28] sm:$0xff]
        %v2629 = vld [vmem:[%s922 + $0x30] sm:$0xff]
        %v2630 = vld [vmem:[%s922 + $0x38] sm:$0xff]
        %v2631 = vld [vmem:[%s922 + $0x40] sm:$0xff]
        %v2632 = vld [vmem:[%s922 + $0x48] sm:$0xff]
        %v2633 = vld [vmem:[%s922 + $0x50] sm:$0xff]
        %v2634 = vld [vmem:[%s922 + $0x58] sm:$0xff]
        %v2635 = vld [vmem:[%s922 + $0x60] sm:$0xff]
        %v2636 = vld [vmem:[%s922 + $0x68] sm:$0xff]
        %v2637 = vld [vmem:[%s922 + $0x70] sm:$0xff]
        %v2638 = vld [vmem:[%s922 + $0x78] sm:$0xff]
        %v2639 = vld [vmem:[%s1078] sm:$0x3]
        %v2641 = vlaneseq
        %v2642 = vshrl.u32 %v2641, 7
        %v2643 = vsub.s32 0, %v2642
        %v2644 = vrot.slane %v2639, %v2643
        %v2645 = vlaneseq
        %v2646 = vshrl.u32 %v2645, 7
        %v2647 = vsub.s32 1, %v2646
        %v2648 = vrot.slane %v2639, %v2647
        %v2653 = vunpack.c.l.b16 %v1108
        %v2654 = vunpack.c.l.b16 %v1109
        %v2655 = vpack.c.b16 %v2654, %v2653
        %v2673 = vunpack.c.l.b16 %v2623
        %v2674 = vunpack.c.h.b16 %v2623
        %v2675 = vunpack.c.l.b16 %v2624
        %v2676 = vunpack.c.h.b16 %v2624
        %v2677 = vunpack.c.l.b16 %v2625
        %v2678 = vunpack.c.h.b16 %v2625
        %v2679 = vunpack.c.l.b16 %v2626
        %v2680 = vunpack.c.h.b16 %v2626
        %v2681 = vunpack.c.l.b16 %v2627
        %v2682 = vunpack.c.h.b16 %v2627
        %v2683 = vunpack.c.l.b16 %v2628
        %v2684 = vunpack.c.h.b16 %v2628
        %v2685 = vunpack.c.l.b16 %v2629
        %v2686 = vunpack.c.h.b16 %v2629
        %v2687 = vunpack.c.l.b16 %v2630
        %v2688 = vunpack.c.h.b16 %v2630
        %v2689 = vunpack.c.l.b16 %v2631
        %v2690 = vunpack.c.h.b16 %v2631
        %v2691 = vunpack.c.l.b16 %v2632
        %v2692 = vunpack.c.h.b16 %v2632
        %v2693 = vunpack.c.l.b16 %v2633
        %v2694 = vunpack.c.h.b16 %v2633
        %v2695 = vunpack.c.l.b16 %v2634
        %v2696 = vunpack.c.h.b16 %v2634
        %v2697 = vunpack.c.l.b16 %v2635
        %v2698 = vunpack.c.h.b16 %v2635
        %v2699 = vunpack.c.l.b16 %v2636
        %v2700 = vunpack.c.h.b16 %v2636
        %v2701 = vunpack.c.l.b16 %v2637
        %v2702 = vunpack.c.h.b16 %v2637
        %v2703 = vunpack.c.l.b16 %v2638
        %v2704 = vunpack.c.h.b16 %v2638
        %v2705 = vpack.c.b16 %v2675, %v2673
        %v2706 = vpack.c.b16 %v2676, %v2674
        %v2707 = vpack.c.b16 %v2679, %v2677
        %v2708 = vpack.c.b16 %v2680, %v2678
        %v2709 = vpack.c.b16 %v2683, %v2681
        %v2710 = vpack.c.b16 %v2684, %v2682
        %v2711 = vpack.c.b16 %v2687, %v2685
        %v2712 = vpack.c.b16 %v2688, %v2686
        %v2713 = vpack.c.b16 %v2691, %v2689
        %v2714 = vpack.c.b16 %v2692, %v2690
        %v2715 = vpack.c.b16 %v2695, %v2693
        %v2716 = vpack.c.b16 %v2696, %v2694
        %v2717 = vpack.c.b16 %v2699, %v2697
        %v2718 = vpack.c.b16 %v2700, %v2698
        %v2719 = vpack.c.b16 %v2703, %v2701
        %v2720 = vpack.c.b16 %v2704, %v2702
        %2737 = vmatprep.subr.bf16.mxu0 %v2706
        %2738 = vmatpush1.bf16.msra.mxu0 %v2705
        %2739 = vmatprep.subr.bf16.mxu0 %v2708
        %2740 = vmatpush1.bf16.msra.mxu0 %v2707
        %2741 = vmatprep.subr.bf16.mxu0 %v2710
        %2742 = vmatpush1.bf16.msra.mxu0 %v2709
        %2743 = vmatprep.subr.bf16.mxu0 %v2712
        %2744 = vmatpush1.bf16.msra.mxu0 %v2711
        %2745 = vmatprep.subr.bf16.mxu0 %v2714
        %2746 = vmatpush1.bf16.msra.mxu0 %v2713
        %2747 = vmatprep.subr.bf16.mxu0 %v2716
        %2748 = vmatpush1.bf16.msra.mxu0 %v2715
        %2749 = vmatprep.subr.bf16.mxu0 %v2718
        %2750 = vmatpush1.bf16.msra.mxu0 %v2717
        %2751 = vmatprep.subr.bf16.mxu0 %v2720
        %2752 = vmatpush1.bf16.msra.mxu0 %v2719
        %2753 = vmatprep.subr.bf16.mxu0 0
        %2754 = vmatpush1.bf16.msra.mxu0 0
        %2755 = vmatprep.subr.bf16.mxu0 0
        %2756 = vmatpush1.bf16.msra.mxu0 0
        %2757 = vmatprep.subr.bf16.mxu0 0
        %2758 = vmatpush1.bf16.msra.mxu0 0
        %2759 = vmatprep.subr.bf16.mxu0 0
        %2760 = vmatpush1.bf16.msra.mxu0 0
        %2761 = vmatprep.subr.bf16.mxu0 0
        %2762 = vmatpush1.bf16.msra.mxu0 0
        %2763 = vmatprep.subr.bf16.mxu0 0
        %2764 = vmatpush1.bf16.msra.mxu0 0
        %2765 = vmatprep.subr.bf16.mxu0 0
        %2766 = vmatpush1.bf16.msra.mxu0 0
        %2767 = vmatprep.subr.bf16.mxu0 0
        %2768 = vmatpush1.bf16.msra.mxu0 0
        %2769 = vmatprep.mubr.bf16.mxu0 0
        %2770 = vmatmul.mubr.bf16.gmra.mrb[0].mxu0 %v2655
        %v2771 = vpop.f32.mrb[0].mxu0
        %v2772 = vadd.f32 %v2644, %v2771
        %v2773 = vpop.f32.mrb[0].mxu0
        %v2774 = vadd.f32 %v2648, %v2773
        %v2775 = vpop.f32.mrb[0].mxu0
        %v2776 = vadd.f32 %v2644, %v2775
        %v2777 = vpop.f32.mrb[0].mxu0
        %v2778 = vadd.f32 %v2648, %v2777
        %2779 = vdwg.mxu0
        %v2780 = vpack.c.bf16 %v2621, %v2621
        %v2781 = vpack.c.bf16 %v2772, %v2772
        %v2782 = vpack.c.bf16 %v2774, %v2774
        %2784 = vrot.lane.b32.xlu0 %v2780, 96
        %v2785 = vpop.permute.xlu0 %2784
        %2786 = vrot.lane.b32.xlu0 %v2780, 64
        %v2787 = vpop.permute.xlu0 %2786
        %2788 = vrot.lane.b32.xlu0 %v2780, 32
        %v2789 = vpop.permute.xlu0 %2788
        %2791 = vrot.lane.b32.xlu0 %v2781, 96
        %v2792 = vpop.permute.xlu0 %2791
        %2793 = vrot.lane.b32.xlu0 %v2781, 64
        %v2794 = vpop.permute.xlu0 %2793
        %2795 = vrot.lane.b32.xlu0 %v2781, 32
        %v2796 = vpop.permute.xlu0 %2795
        %2798 = vrot.lane.b32.xlu0 %v2782, 96
        %v2799 = vpop.permute.xlu0 %2798
        %2800 = vrot.lane.b32.xlu0 %v2782, 64
        %v2801 = vpop.permute.xlu0 %2800
        %2802 = vrot.lane.b32.xlu0 %v2782, 32
        %v2803 = vpop.permute.xlu0 %2802
        %v2804 = vld [vmem:[#allocation6] sm:$0xff]
        %v2806 = vsel %vm1450, %v2780, 0
        %v2809 = vsel %vm1450, %v2781, 0
        %2811 = vmatprep.subr.bf16.mxu0 0
        %2812 = vmatpush1.bf16.xpose.msra.mxu0 %v2809
        %2813 = vmatprep.subr.bf16.mxu0 0
        %2814 = vmatpush1.bf16.xpose.msra.mxu0 0
        %2815 = vmatprep.subr.bf16.mxu0 0
        %2816 = vmatpush1.bf16.xpose.msra.mxu0 0
        %2817 = vmatprep.subr.bf16.mxu0 0
        %2818 = vmatpush1.bf16.xpose.msra.mxu0 0
        %2819 = vmatprep.subr.bf16.mxu0 0
        %2820 = vmatpush1.bf16.xpose.msra.mxu0 0
        %2821 = vmatprep.subr.bf16.mxu0 0
        %2822 = vmatpush1.bf16.xpose.msra.mxu0 0
        %2823 = vmatprep.subr.bf16.mxu0 0
        %2824 = vmatpush1.bf16.xpose.msra.mxu0 0
        %2825 = vmatprep.subr.bf16.mxu0 0
        %2826 = vmatpush1.bf16.xpose.msra.mxu0 0
        %2827 = vmatprep.subr.bf16.mxu0 0
        %2828 = vmatpush1.bf16.xpose.msra.mxu0 0
        %2829 = vmatprep.subr.bf16.mxu0 0
        %2830 = vmatpush1.bf16.xpose.msra.mxu0 0
        %2831 = vmatprep.subr.bf16.mxu0 0
        %2832 = vmatpush1.bf16.xpose.msra.mxu0 0
        %2833 = vmatprep.subr.bf16.mxu0 0
        %2834 = vmatpush1.bf16.xpose.msra.mxu0 0
        %2835 = vmatprep.subr.bf16.mxu0 0
        %2836 = vmatpush1.bf16.xpose.msra.mxu0 0
        %2837 = vmatprep.subr.bf16.mxu0 0
        %2838 = vmatpush1.bf16.xpose.msra.mxu0 0
        %2839 = vmatprep.subr.bf16.mxu0 0
        %2840 = vmatpush1.bf16.xpose.msra.mxu0 0
        %2841 = vmatprep.subr.bf16.mxu0 0
        %2842 = vmatpush1.bf16.xpose.msra.mxu0 0
        %2843 = vmatprep.mubr.bf16.mxu0 0
        %2844 = vmatmul.mubr.bf16.gmra.mrb[0].mxu0 %v2806
        %v2845 = vpop.f32.mrb[0].mxu0
        %v2846 = vadd.f32 %v2804, %v2845
        %v2847 = vpop.f32.mrb[0].mxu0
        %v2848 = vpop.f32.mrb[0].mxu0
        %v2849 = vpop.f32.mrb[0].mxu0
        %2850 = vdwg.mxu0
        %v2852 = vsel %vm1450, %v2785, 0
        %v2855 = vsel %vm1450, %v2792, 0
        %2857 = vmatprep.subr.bf16.mxu0 0
        %2858 = vmatpush1.bf16.xpose.msra.mxu0 %v2855
        %2859 = vmatprep.subr.bf16.mxu0 0
        %2860 = vmatpush1.bf16.xpose.msra.mxu0 0
        %2861 = vmatprep.subr.bf16.mxu0 0
        %2862 = vmatpush1.bf16.xpose.msra.mxu0 0
        %2863 = vmatprep.subr.bf16.mxu0 0
        %2864 = vmatpush1.bf16.xpose.msra.mxu0 0
        %2865 = vmatprep.subr.bf16.mxu0 0
        %2866 = vmatpush1.bf16.xpose.msra.mxu0 0
        %2867 = vmatprep.subr.bf16.mxu0 0
        %2868 = vmatpush1.bf16.xpose.msra.mxu0 0
        %2869 = vmatprep.subr.bf16.mxu0 0
        %2870 = vmatpush1.bf16.xpose.msra.mxu0 0
        %2871 = vmatprep.subr.bf16.mxu0 0
        %2872 = vmatpush1.bf16.xpose.msra.mxu0 0
        %2873 = vmatprep.subr.bf16.mxu0 0
        %2874 = vmatpush1.bf16.xpose.msra.mxu0 0
        %2875 = vmatprep.subr.bf16.mxu0 0
        %2876 = vmatpush1.bf16.xpose.msra.mxu0 0
        %2877 = vmatprep.subr.bf16.mxu0 0
        %2878 = vmatpush1.bf16.xpose.msra.mxu0 0
        %2879 = vmatprep.subr.bf16.mxu0 0
        %2880 = vmatpush1.bf16.xpose.msra.mxu0 0
        %2881 = vmatprep.subr.bf16.mxu0 0
        %2882 = vmatpush1.bf16.xpose.msra.mxu0 0
        %2883 = vmatprep.subr.bf16.mxu0 0
        %2884 = vmatpush1.bf16.xpose.msra.mxu0 0
        %2885 = vmatprep.subr.bf16.mxu0 0
        %2886 = vmatpush1.bf16.xpose.msra.mxu0 0
        %2887 = vmatprep.subr.bf16.mxu0 0
        %2888 = vmatpush1.bf16.xpose.msra.mxu0 0
        %2889 = vmatprep.mubr.bf16.mxu0 0
        %2890 = vmatmul.mubr.bf16.gmra.mrb[0].mxu0 %v2852
        %v2891 = vpop.f32.mrb[0].mxu0
        %v2892 = vadd.f32 %v2804, %v2891
        %v2893 = vpop.f32.mrb[0].mxu0
        %v2894 = vpop.f32.mrb[0].mxu0
        %v2895 = vpop.f32.mrb[0].mxu0
        %2896 = vdwg.mxu0
        %v2898 = vsel %vm1450, %v2787, 0
        %v2901 = vsel %vm1450, %v2794, 0
        %2903 = vmatprep.subr.bf16.mxu0 0
        %2904 = vmatpush1.bf16.xpose.msra.mxu0 %v2901
        %2905 = vmatprep.subr.bf16.mxu0 0
        %2906 = vmatpush1.bf16.xpose.msra.mxu0 0
        %2907 = vmatprep.subr.bf16.mxu0 0
        %2908 = vmatpush1.bf16.xpose.msra.mxu0 0
        %2909 = vmatprep.subr.bf16.mxu0 0
        %2910 = vmatpush1.bf16.xpose.msra.mxu0 0
        %2911 = vmatprep.subr.bf16.mxu0 0
        %2912 = vmatpush1.bf16.xpose.msra.mxu0 0
        %2913 = vmatprep.subr.bf16.mxu0 0
        %2914 = vmatpush1.bf16.xpose.msra.mxu0 0
        %2915 = vmatprep.subr.bf16.mxu0 0
        %2916 = vmatpush1.bf16.xpose.msra.mxu0 0
        %2917 = vmatprep.subr.bf16.mxu0 0
        %2918 = vmatpush1.bf16.xpose.msra.mxu0 0
        %2919 = vmatprep.subr.bf16.mxu0 0
        %2920 = vmatpush1.bf16.xpose.msra.mxu0 0
        %2921 = vmatprep.subr.bf16.mxu0 0
        %2922 = vmatpush1.bf16.xpose.msra.mxu0 0
        %2923 = vmatprep.subr.bf16.mxu0 0
        %2924 = vmatpush1.bf16.xpose.msra.mxu0 0
        %2925 = vmatprep.subr.bf16.mxu0 0
        %2926 = vmatpush1.bf16.xpose.msra.mxu0 0
        %2927 = vmatprep.subr.bf16.mxu0 0
        %2928 = vmatpush1.bf16.xpose.msra.mxu0 0
        %2929 = vmatprep.subr.bf16.mxu0 0
        %2930 = vmatpush1.bf16.xpose.msra.mxu0 0
        %2931 = vmatprep.subr.bf16.mxu0 0
        %2932 = vmatpush1.bf16.xpose.msra.mxu0 0
        %2933 = vmatprep.subr.bf16.mxu0 0
        %2934 = vmatpush1.bf16.xpose.msra.mxu0 0
        %2935 = vmatprep.mubr.bf16.mxu0 0
        %2936 = vmatmul.mubr.bf16.gmra.mrb[0].mxu0 %v2898
        %v2937 = vpop.f32.mrb[0].mxu0
        %v2938 = vadd.f32 %v2804, %v2937
        %v2939 = vpop.f32.mrb[0].mxu0
        %v2940 = vpop.f32.mrb[0].mxu0
        %v2941 = vpop.f32.mrb[0].mxu0
        %2942 = vdwg.mxu0
        %v2944 = vsel %vm1450, %v2789, 0
        %v2947 = vsel %vm1450, %v2796, 0
        %2949 = vmatprep.subr.bf16.mxu0 0
        %2950 = vmatpush1.bf16.xpose.msra.mxu0 %v2947
        %2951 = vmatprep.subr.bf16.mxu0 0
        %2952 = vmatpush1.bf16.xpose.msra.mxu0 0
        %2953 = vmatprep.subr.bf16.mxu0 0
        %2954 = vmatpush1.bf16.xpose.msra.mxu0 0
        %2955 = vmatprep.subr.bf16.mxu0 0
        %2956 = vmatpush1.bf16.xpose.msra.mxu0 0
        %2957 = vmatprep.subr.bf16.mxu0 0
        %2958 = vmatpush1.bf16.xpose.msra.mxu0 0
        %2959 = vmatprep.subr.bf16.mxu0 0
        %2960 = vmatpush1.bf16.xpose.msra.mxu0 0
        %2961 = vmatprep.subr.bf16.mxu0 0
        %2962 = vmatpush1.bf16.xpose.msra.mxu0 0
        %2963 = vmatprep.subr.bf16.mxu0 0
        %2964 = vmatpush1.bf16.xpose.msra.mxu0 0
        %2965 = vmatprep.subr.bf16.mxu0 0
        %2966 = vmatpush1.bf16.xpose.msra.mxu0 0
        %2967 = vmatprep.subr.bf16.mxu0 0
        %2968 = vmatpush1.bf16.xpose.msra.mxu0 0
        %2969 = vmatprep.subr.bf16.mxu0 0
        %2970 = vmatpush1.bf16.xpose.msra.mxu0 0
        %2971 = vmatprep.subr.bf16.mxu0 0
        %2972 = vmatpush1.bf16.xpose.msra.mxu0 0
        %2973 = vmatprep.subr.bf16.mxu0 0
        %2974 = vmatpush1.bf16.xpose.msra.mxu0 0
        %2975 = vmatprep.subr.bf16.mxu0 0
        %2976 = vmatpush1.bf16.xpose.msra.mxu0 0
        %2977 = vmatprep.subr.bf16.mxu0 0
        %2978 = vmatpush1.bf16.xpose.msra.mxu0 0
        %2979 = vmatprep.subr.bf16.mxu0 0
        %2980 = vmatpush1.bf16.xpose.msra.mxu0 0
        %2981 = vmatprep.mubr.bf16.mxu0 0
        %2982 = vmatmul.mubr.bf16.gmra.mrb[0].mxu0 %v2944
        %v2983 = vpop.f32.mrb[0].mxu0
        %v2984 = vadd.f32 %v2804, %v2983
        %v2985 = vpop.f32.mrb[0].mxu0
        %v2986 = vpop.f32.mrb[0].mxu0
        %v2987 = vpop.f32.mrb[0].mxu0
        %2988 = vdwg.mxu0
        %v2989 = vsel %vm1635, %v2846, -inf
        %2990 = vmax.xlane.f32.xlu0 %v2989
        %v2991 = vpop.xlane.xlu0 %2990
        %v2992 = vsel %vm1635, %v2892, -inf
        %2993 = vmax.xlane.f32.xlu0 %v2992
        %v2994 = vpop.xlane.xlu0 %2993
        %v2995 = vsel %vm1635, %v2938, -inf
        %2996 = vmax.xlane.f32.xlu0 %v2995
        %v2997 = vpop.xlane.xlu0 %2996
        %v2998 = vsel %vm1635, %v2984, -inf
        %2999 = vmax.xlane.f32.xlu0 %v2998
        %v3000 = vpop.xlane.xlu0 %2999
        %v3001 = vsub.f32 %v2846, %v2991
        %v3002 = vsub.f32 %v2892, %v2994
        %v3003 = vsub.f32 %v2938, %v2997
        %v3004 = vsub.f32 %v2984, %v3000
        %v3005 = vmul.f32 %v3001, 1.442695
        %v3006 = vpow.pop %v3005
        %v3007 = vmul.f32 %v3002, 1.442695
        %v3008 = vpow.pop %v3007
        %v3009 = vmul.f32 %v3003, 1.442695
        %v3010 = vpow.pop %v3009
        %v3011 = vmul.f32 %v3004, 1.442695
        %v3012 = vpow.pop %v3011
        %v3013 = vsel %vm1635, %v3006, 0.0
        %3014 = vadd.xlane.f32.xlu0 %v3013
        %v3015 = vpop.xlane.xlu0 %3014
        %v3016 = vsel %vm1635, %v3008, 0.0
        %3017 = vadd.xlane.f32.xlu0 %v3016
        %v3018 = vpop.xlane.xlu0 %3017
        %v3019 = vsel %vm1635, %v3010, 0.0
        %3020 = vadd.xlane.f32.xlu0 %v3019
        %v3021 = vpop.xlane.xlu0 %3020
        %v3022 = vsel %vm1635, %v3012, 0.0
        %3023 = vadd.xlane.f32.xlu0 %v3022
        %v3024 = vpop.xlane.xlu0 %3023
        %v3025 = vrcp.pop %v3015
        %v3026 = vrcp.pop %v3018
        %v3027 = vrcp.pop %v3021
        %v3028 = vrcp.pop %v3024
        %v3029 = vmul.f32 %v3006, %v3025
        %v3030 = vmul.f32 %v3008, %v3026
        %v3031 = vmul.f32 %v3010, %v3027
        %v3032 = vmul.f32 %v3012, %v3028
        %v3033 = vpack.c.bf16 %v3029, %v3029
        %v3034 = vpack.c.bf16 %v3030, %v3030
        %v3035 = vpack.c.bf16 %v3031, %v3031
        %v3036 = vpack.c.bf16 %v3032, %v3032
        %v3038 = vsel %vm1635, %v3033, 0
        %v3041 = vsel %vm1687, %v2782, 0
        %3043 = vmatprep.subr.bf16.mxu0 0
        %3044 = vmatpush1.bf16.msra.mxu0 %v3041
        %3045 = vmatprep.subr.bf16.mxu0 0
        %3046 = vmatpush1.bf16.msra.mxu0 0
        %3047 = vmatprep.subr.bf16.mxu0 0
        %3048 = vmatpush1.bf16.msra.mxu0 0
        %3049 = vmatprep.subr.bf16.mxu0 0
        %3050 = vmatpush1.bf16.msra.mxu0 0
        %3051 = vmatprep.subr.bf16.mxu0 0
        %3052 = vmatpush1.bf16.msra.mxu0 0
        %3053 = vmatprep.subr.bf16.mxu0 0
        %3054 = vmatpush1.bf16.msra.mxu0 0
        %3055 = vmatprep.subr.bf16.mxu0 0
        %3056 = vmatpush1.bf16.msra.mxu0 0
        %3057 = vmatprep.subr.bf16.mxu0 0
        %3058 = vmatpush1.bf16.msra.mxu0 0
        %3059 = vmatprep.subr.bf16.mxu0 0
        %3060 = vmatpush1.bf16.msra.mxu0 0
        %3061 = vmatprep.subr.bf16.mxu0 0
        %3062 = vmatpush1.bf16.msra.mxu0 0
        %3063 = vmatprep.subr.bf16.mxu0 0
        %3064 = vmatpush1.bf16.msra.mxu0 0
        %3065 = vmatprep.subr.bf16.mxu0 0
        %3066 = vmatpush1.bf16.msra.mxu0 0
        %3067 = vmatprep.subr.bf16.mxu0 0
        %3068 = vmatpush1.bf16.msra.mxu0 0
        %3069 = vmatprep.subr.bf16.mxu0 0
        %3070 = vmatpush1.bf16.msra.mxu0 0
        %3071 = vmatprep.subr.bf16.mxu0 0
        %3072 = vmatpush1.bf16.msra.mxu0 0
        %3073 = vmatprep.subr.bf16.mxu0 0
        %3074 = vmatpush1.bf16.msra.mxu0 0
        %3075 = vmatprep.mubr.bf16.mxu0 0
        %3076 = vmatmul.mubr.bf16.gmra.mrb[0].mxu0 %v3038
        %v3077 = vpop.f32.mrb[0].mxu0
        %v3078 = vadd.f32 0.0, %v3077
        %v3079 = vpop.f32.mrb[0].mxu0
        %v3080 = vpop.f32.mrb[0].mxu0
        %v3081 = vpop.f32.mrb[0].mxu0
        %3082 = vdwg.mxu0
        %v3084 = vsel %vm1635, %v3034, 0
        %v3087 = vsel %vm1687, %v2799, 0
        %3089 = vmatprep.subr.bf16.mxu0 0
        %3090 = vmatpush1.bf16.msra.mxu0 %v3087
        %3091 = vmatprep.subr.bf16.mxu0 0
        %3092 = vmatpush1.bf16.msra.mxu0 0
        %3093 = vmatprep.subr.bf16.mxu0 0
        %3094 = vmatpush1.bf16.msra.mxu0 0
        %3095 = vmatprep.subr.bf16.mxu0 0
        %3096 = vmatpush1.bf16.msra.mxu0 0
        %3097 = vmatprep.subr.bf16.mxu0 0
        %3098 = vmatpush1.bf16.msra.mxu0 0
        %3099 = vmatprep.subr.bf16.mxu0 0
        %3100 = vmatpush1.bf16.msra.mxu0 0
        %3101 = vmatprep.subr.bf16.mxu0 0
        %3102 = vmatpush1.bf16.msra.mxu0 0
        %3103 = vmatprep.subr.bf16.mxu0 0
        %3104 = vmatpush1.bf16.msra.mxu0 0
        %3105 = vmatprep.subr.bf16.mxu0 0
        %3106 = vmatpush1.bf16.msra.mxu0 0
        %3107 = vmatprep.subr.bf16.mxu0 0
        %3108 = vmatpush1.bf16.msra.mxu0 0
        %3109 = vmatprep.subr.bf16.mxu0 0
        %3110 = vmatpush1.bf16.msra.mxu0 0
        %3111 = vmatprep.subr.bf16.mxu0 0
        %3112 = vmatpush1.bf16.msra.mxu0 0
        %3113 = vmatprep.subr.bf16.mxu0 0
        %3114 = vmatpush1.bf16.msra.mxu0 0
        %3115 = vmatprep.subr.bf16.mxu0 0
        %3116 = vmatpush1.bf16.msra.mxu0 0
        %3117 = vmatprep.subr.bf16.mxu0 0
        %3118 = vmatpush1.bf16.msra.mxu0 0
        %3119 = vmatprep.subr.bf16.mxu0 0
        %3120 = vmatpush1.bf16.msra.mxu0 0
        %3121 = vmatprep.mubr.bf16.mxu0 0
        %3122 = vmatmul.mubr.bf16.gmra.mrb[0].mxu0 %v3084
        %v3123 = vpop.f32.mrb[0].mxu0
        %v3124 = vadd.f32 0.0, %v3123
        %v3125 = vpop.f32.mrb[0].mxu0
        %v3126 = vpop.f32.mrb[0].mxu0
        %v3127 = vpop.f32.mrb[0].mxu0
        %3128 = vdwg.mxu0
        %v3130 = vsel %vm1635, %v3035, 0
        %v3133 = vsel %vm1687, %v2801, 0
        %3135 = vmatprep.subr.bf16.mxu0 0
        %3136 = vmatpush1.bf16.msra.mxu0 %v3133
        %3137 = vmatprep.subr.bf16.mxu0 0
        %3138 = vmatpush1.bf16.msra.mxu0 0
        %3139 = vmatprep.subr.bf16.mxu0 0
        %3140 = vmatpush1.bf16.msra.mxu0 0
        %3141 = vmatprep.subr.bf16.mxu0 0
        %3142 = vmatpush1.bf16.msra.mxu0 0
        %3143 = vmatprep.subr.bf16.mxu0 0
        %3144 = vmatpush1.bf16.msra.mxu0 0
        %3145 = vmatprep.subr.bf16.mxu0 0
        %3146 = vmatpush1.bf16.msra.mxu0 0
        %3147 = vmatprep.subr.bf16.mxu0 0
        %3148 = vmatpush1.bf16.msra.mxu0 0
        %3149 = vmatprep.subr.bf16.mxu0 0
        %3150 = vmatpush1.bf16.msra.mxu0 0
        %3151 = vmatprep.subr.bf16.mxu0 0
        %3152 = vmatpush1.bf16.msra.mxu0 0
        %3153 = vmatprep.subr.bf16.mxu0 0
        %3154 = vmatpush1.bf16.msra.mxu0 0
        %3155 = vmatprep.subr.bf16.mxu0 0
        %3156 = vmatpush1.bf16.msra.mxu0 0
        %3157 = vmatprep.subr.bf16.mxu0 0
        %3158 = vmatpush1.bf16.msra.mxu0 0
        %3159 = vmatprep.subr.bf16.mxu0 0
        %3160 = vmatpush1.bf16.msra.mxu0 0
        %3161 = vmatprep.subr.bf16.mxu0 0
        %3162 = vmatpush1.bf16.msra.mxu0 0
        %3163 = vmatprep.subr.bf16.mxu0 0
        %3164 = vmatpush1.bf16.msra.mxu0 0
        %3165 = vmatprep.subr.bf16.mxu0 0
        %3166 = vmatpush1.bf16.msra.mxu0 0
        %3167 = vmatprep.mubr.bf16.mxu0 0
        %3168 = vmatmul.mubr.bf16.gmra.mrb[0].mxu0 %v3130
        %v3169 = vpop.f32.mrb[0].mxu0
        %v3170 = vadd.f32 0.0, %v3169
        %v3171 = vpop.f32.mrb[0].mxu0
        %v3172 = vpop.f32.mrb[0].mxu0
        %v3173 = vpop.f32.mrb[0].mxu0
        %3174 = vdwg.mxu0
        %v3176 = vsel %vm1635, %v3036, 0
        %v3179 = vsel %vm1687, %v2803, 0
        %3181 = vmatprep.subr.bf16.mxu0 0
        %3182 = vmatpush1.bf16.msra.mxu0 %v3179
        %3183 = vmatprep.subr.bf16.mxu0 0
        %3184 = vmatpush1.bf16.msra.mxu0 0
        %3185 = vmatprep.subr.bf16.mxu0 0
        %3186 = vmatpush1.bf16.msra.mxu0 0
        %3187 = vmatprep.subr.bf16.mxu0 0
        %3188 = vmatpush1.bf16.msra.mxu0 0
        %3189 = vmatprep.subr.bf16.mxu0 0
        %3190 = vmatpush1.bf16.msra.mxu0 0
        %3191 = vmatprep.subr.bf16.mxu0 0
        %3192 = vmatpush1.bf16.msra.mxu0 0
        %3193 = vmatprep.subr.bf16.mxu0 0
        %3194 = vmatpush1.bf16.msra.mxu0 0
        %3195 = vmatprep.subr.bf16.mxu0 0
        %3196 = vmatpush1.bf16.msra.mxu0 0
        %3197 = vmatprep.subr.bf16.mxu0 0
        %3198 = vmatpush1.bf16.msra.mxu0 0
        %3199 = vmatprep.subr.bf16.mxu0 0
        %3200 = vmatpush1.bf16.msra.mxu0 0
        %3201 = vmatprep.subr.bf16.mxu0 0
        %3202 = vmatpush1.bf16.msra.mxu0 0
        %3203 = vmatprep.subr.bf16.mxu0 0
        %3204 = vmatpush1.bf16.msra.mxu0 0
        %3205 = vmatprep.subr.bf16.mxu0 0
        %3206 = vmatpush1.bf16.msra.mxu0 0
        %3207 = vmatprep.subr.bf16.mxu0 0
        %3208 = vmatpush1.bf16.msra.mxu0 0
        %3209 = vmatprep.subr.bf16.mxu0 0
        %3210 = vmatpush1.bf16.msra.mxu0 0
        %3211 = vmatprep.subr.bf16.mxu0 0
        %3212 = vmatpush1.bf16.msra.mxu0 0
        %3213 = vmatprep.mubr.bf16.mxu0 0
        %3214 = vmatmul.mubr.bf16.gmra.mrb[0].mxu0 %v3176
        %v3215 = vpop.f32.mrb[0].mxu0
        %v3216 = vadd.f32 0.0, %v3215
        %v3217 = vpop.f32.mrb[0].mxu0
        %v3218 = vpop.f32.mrb[0].mxu0
        %v3219 = vpop.f32.mrb[0].mxu0
        %3220 = vdwg.mxu0
        %3222 = vrot.lane.b32.xlu0 %v3124, 32
        %v3223 = vpop.permute.xlu0 %3222
        %3226 = vrot.lane.b32.xlu0 %v3170, 64
        %v3227 = vpop.permute.xlu0 %3226
        %3230 = vrot.lane.b32.xlu0 %v3216, 96
        %v3231 = vpop.permute.xlu0 %3230
        %v3233 = vsel %vm1450, %v3078, %v3223
        %v3234 = vsel %vm1882, %v3233, %v3227
        %v3235 = vsel %vm1884, %v3234, %v3231
        %v3236 = vpack.c.bf16 %v2622, %v2622
        %v3237 = vpack.c.bf16 %v2776, %v2776
        %v3238 = vpack.c.bf16 %v2778, %v2778
        %3240 = vrot.lane.b32.xlu0 %v3236, 96
        %v3241 = vpop.permute.xlu0 %3240
        %3242 = vrot.lane.b32.xlu0 %v3236, 64
        %v3243 = vpop.permute.xlu0 %3242
        %3244 = vrot.lane.b32.xlu0 %v3236, 32
        %v3245 = vpop.permute.xlu0 %3244
        %3247 = vrot.lane.b32.xlu0 %v3237, 96
        %v3248 = vpop.permute.xlu0 %3247
        %3249 = vrot.lane.b32.xlu0 %v3237, 64
        %v3250 = vpop.permute.xlu0 %3249
        %3251 = vrot.lane.b32.xlu0 %v3237, 32
        %v3252 = vpop.permute.xlu0 %3251
        %3254 = vrot.lane.b32.xlu0 %v3238, 96
        %v3255 = vpop.permute.xlu0 %3254
        %3256 = vrot.lane.b32.xlu0 %v3238, 64
        %v3257 = vpop.permute.xlu0 %3256
        %3258 = vrot.lane.b32.xlu0 %v3238, 32
        %v3259 = vpop.permute.xlu0 %3258
        %s3260 = scalar_lea.vmem [#allocation6], 8
        %v3261 = vld [vmem:[%s3260] sm:$0xff]
        %v3263 = vsel %vm1450, %v3236, 0
        %v3266 = vsel %vm1450, %v3237, 0
        %3268 = vmatprep.subr.bf16.mxu0 0
        %3269 = vmatpush1.bf16.xpose.msra.mxu0 %v3266
        %3270 = vmatprep.subr.bf16.mxu0 0
        %3271 = vmatpush1.bf16.xpose.msra.mxu0 0
        %3272 = vmatprep.subr.bf16.mxu0 0
        %3273 = vmatpush1.bf16.xpose.msra.mxu0 0
        %3274 = vmatprep.subr.bf16.mxu0 0
        %3275 = vmatpush1.bf16.xpose.msra.mxu0 0
        %3276 = vmatprep.subr.bf16.mxu0 0
        %3277 = vmatpush1.bf16.xpose.msra.mxu0 0
        %3278 = vmatprep.subr.bf16.mxu0 0
        %3279 = vmatpush1.bf16.xpose.msra.mxu0 0
        %3280 = vmatprep.subr.bf16.mxu0 0
        %3281 = vmatpush1.bf16.xpose.msra.mxu0 0
        %3282 = vmatprep.subr.bf16.mxu0 0
        %3283 = vmatpush1.bf16.xpose.msra.mxu0 0
        %3284 = vmatprep.subr.bf16.mxu0 0
        %3285 = vmatpush1.bf16.xpose.msra.mxu0 0
        %3286 = vmatprep.subr.bf16.mxu0 0
        %3287 = vmatpush1.bf16.xpose.msra.mxu0 0
        %3288 = vmatprep.subr.bf16.mxu0 0
        %3289 = vmatpush1.bf16.xpose.msra.mxu0 0
        %3290 = vmatprep.subr.bf16.mxu0 0
        %3291 = vmatpush1.bf16.xpose.msra.mxu0 0
        %3292 = vmatprep.subr.bf16.mxu0 0
        %3293 = vmatpush1.bf16.xpose.msra.mxu0 0
        %3294 = vmatprep.subr.bf16.mxu0 0
        %3295 = vmatpush1.bf16.xpose.msra.mxu0 0
        %3296 = vmatprep.subr.bf16.mxu0 0
        %3297 = vmatpush1.bf16.xpose.msra.mxu0 0
        %3298 = vmatprep.subr.bf16.mxu0 0
        %3299 = vmatpush1.bf16.xpose.msra.mxu0 0
        %3300 = vmatprep.mubr.bf16.mxu0 0
        %3301 = vmatmul.mubr.bf16.gmra.mrb[0].mxu0 %v3263
        %v3302 = vpop.f32.mrb[0].mxu0
        %v3303 = vadd.f32 %v3261, %v3302
        %v3304 = vpop.f32.mrb[0].mxu0
        %v3305 = vpop.f32.mrb[0].mxu0
        %v3306 = vpop.f32.mrb[0].mxu0
        %3307 = vdwg.mxu0
        %v3309 = vsel %vm1450, %v3241, 0
        %v3312 = vsel %vm1450, %v3248, 0
        %3314 = vmatprep.subr.bf16.mxu0 0
        %3315 = vmatpush1.bf16.xpose.msra.mxu0 %v3312
        %3316 = vmatprep.subr.bf16.mxu0 0
        %3317 = vmatpush1.bf16.xpose.msra.mxu0 0
        %3318 = vmatprep.subr.bf16.mxu0 0
        %3319 = vmatpush1.bf16.xpose.msra.mxu0 0
        %3320 = vmatprep.subr.bf16.mxu0 0
        %3321 = vmatpush1.bf16.xpose.msra.mxu0 0
        %3322 = vmatprep.subr.bf16.mxu0 0
        %3323 = vmatpush1.bf16.xpose.msra.mxu0 0
        %3324 = vmatprep.subr.bf16.mxu0 0
        %3325 = vmatpush1.bf16.xpose.msra.mxu0 0
        %3326 = vmatprep.subr.bf16.mxu0 0
        %3327 = vmatpush1.bf16.xpose.msra.mxu0 0
        %3328 = vmatprep.subr.bf16.mxu0 0
        %3329 = vmatpush1.bf16.xpose.msra.mxu0 0
        %3330 = vmatprep.subr.bf16.mxu0 0
        %3331 = vmatpush1.bf16.xpose.msra.mxu0 0
        %3332 = vmatprep.subr.bf16.mxu0 0
        %3333 = vmatpush1.bf16.xpose.msra.mxu0 0
        %3334 = vmatprep.subr.bf16.mxu0 0
        %3335 = vmatpush1.bf16.xpose.msra.mxu0 0
        %3336 = vmatprep.subr.bf16.mxu0 0
        %3337 = vmatpush1.bf16.xpose.msra.mxu0 0
        %3338 = vmatprep.subr.bf16.mxu0 0
        %3339 = vmatpush1.bf16.xpose.msra.mxu0 0
        %3340 = vmatprep.subr.bf16.mxu0 0
        %3341 = vmatpush1.bf16.xpose.msra.mxu0 0
        %3342 = vmatprep.subr.bf16.mxu0 0
        %3343 = vmatpush1.bf16.xpose.msra.mxu0 0
        %3344 = vmatprep.subr.bf16.mxu0 0
        %3345 = vmatpush1.bf16.xpose.msra.mxu0 0
        %3346 = vmatprep.mubr.bf16.mxu0 0
        %3347 = vmatmul.mubr.bf16.gmra.mrb[0].mxu0 %v3309
        %v3348 = vpop.f32.mrb[0].mxu0
        %v3349 = vadd.f32 %v3261, %v3348
        %v3350 = vpop.f32.mrb[0].mxu0
        %v3351 = vpop.f32.mrb[0].mxu0
        %v3352 = vpop.f32.mrb[0].mxu0
        %3353 = vdwg.mxu0
        %v3355 = vsel %vm1450, %v3243, 0
        %v3358 = vsel %vm1450, %v3250, 0
        %3360 = vmatprep.subr.bf16.mxu0 0
        %3361 = vmatpush1.bf16.xpose.msra.mxu0 %v3358
        %3362 = vmatprep.subr.bf16.mxu0 0
        %3363 = vmatpush1.bf16.xpose.msra.mxu0 0
        %3364 = vmatprep.subr.bf16.mxu0 0
        %3365 = vmatpush1.bf16.xpose.msra.mxu0 0
        %3366 = vmatprep.subr.bf16.mxu0 0
        %3367 = vmatpush1.bf16.xpose.msra.mxu0 0
        %3368 = vmatprep.subr.bf16.mxu0 0
        %3369 = vmatpush1.bf16.xpose.msra.mxu0 0
        %3370 = vmatprep.subr.bf16.mxu0 0
        %3371 = vmatpush1.bf16.xpose.msra.mxu0 0
        %3372 = vmatprep.subr.bf16.mxu0 0
        %3373 = vmatpush1.bf16.xpose.msra.mxu0 0
        %3374 = vmatprep.subr.bf16.mxu0 0
        %3375 = vmatpush1.bf16.xpose.msra.mxu0 0
        %3376 = vmatprep.subr.bf16.mxu0 0
        %3377 = vmatpush1.bf16.xpose.msra.mxu0 0
        %3378 = vmatprep.subr.bf16.mxu0 0
        %3379 = vmatpush1.bf16.xpose.msra.mxu0 0
        %3380 = vmatprep.subr.bf16.mxu0 0
        %3381 = vmatpush1.bf16.xpose.msra.mxu0 0
        %3382 = vmatprep.subr.bf16.mxu0 0
        %3383 = vmatpush1.bf16.xpose.msra.mxu0 0
        %3384 = vmatprep.subr.bf16.mxu0 0
        %3385 = vmatpush1.bf16.xpose.msra.mxu0 0
        %3386 = vmatprep.subr.bf16.mxu0 0
        %3387 = vmatpush1.bf16.xpose.msra.mxu0 0
        %3388 = vmatprep.subr.bf16.mxu0 0
        %3389 = vmatpush1.bf16.xpose.msra.mxu0 0
        %3390 = vmatprep.subr.bf16.mxu0 0
        %3391 = vmatpush1.bf16.xpose.msra.mxu0 0
        %3392 = vmatprep.mubr.bf16.mxu0 0
        %3393 = vmatmul.mubr.bf16.gmra.mrb[0].mxu0 %v3355
        %v3394 = vpop.f32.mrb[0].mxu0
        %v3395 = vadd.f32 %v3261, %v3394
        %v3396 = vpop.f32.mrb[0].mxu0
        %v3397 = vpop.f32.mrb[0].mxu0
        %v3398 = vpop.f32.mrb[0].mxu0
        %3399 = vdwg.mxu0
        %v3401 = vsel %vm1450, %v3245, 0
        %v3404 = vsel %vm1450, %v3252, 0
        %3406 = vmatprep.subr.bf16.mxu0 0
        %3407 = vmatpush1.bf16.xpose.msra.mxu0 %v3404
        %3408 = vmatprep.subr.bf16.mxu0 0
        %3409 = vmatpush1.bf16.xpose.msra.mxu0 0
        %3410 = vmatprep.subr.bf16.mxu0 0
        %3411 = vmatpush1.bf16.xpose.msra.mxu0 0
        %3412 = vmatprep.subr.bf16.mxu0 0
        %3413 = vmatpush1.bf16.xpose.msra.mxu0 0
        %3414 = vmatprep.subr.bf16.mxu0 0
        %3415 = vmatpush1.bf16.xpose.msra.mxu0 0
        %3416 = vmatprep.subr.bf16.mxu0 0
        %3417 = vmatpush1.bf16.xpose.msra.mxu0 0
        %3418 = vmatprep.subr.bf16.mxu0 0
        %3419 = vmatpush1.bf16.xpose.msra.mxu0 0
        %3420 = vmatprep.subr.bf16.mxu0 0
        %3421 = vmatpush1.bf16.xpose.msra.mxu0 0
        %3422 = vmatprep.subr.bf16.mxu0 0
        %3423 = vmatpush1.bf16.xpose.msra.mxu0 0
        %3424 = vmatprep.subr.bf16.mxu0 0
        %3425 = vmatpush1.bf16.xpose.msra.mxu0 0
        %3426 = vmatprep.subr.bf16.mxu0 0
        %3427 = vmatpush1.bf16.xpose.msra.mxu0 0
        %3428 = vmatprep.subr.bf16.mxu0 0
        %3429 = vmatpush1.bf16.xpose.msra.mxu0 0
        %3430 = vmatprep.subr.bf16.mxu0 0
        %3431 = vmatpush1.bf16.xpose.msra.mxu0 0
        %3432 = vmatprep.subr.bf16.mxu0 0
        %3433 = vmatpush1.bf16.xpose.msra.mxu0 0
        %3434 = vmatprep.subr.bf16.mxu0 0
        %3435 = vmatpush1.bf16.xpose.msra.mxu0 0
        %3436 = vmatprep.subr.bf16.mxu0 0
        %3437 = vmatpush1.bf16.xpose.msra.mxu0 0
        %3438 = vmatprep.mubr.bf16.mxu0 0
        %3439 = vmatmul.mubr.bf16.gmra.mrb[0].mxu0 %v3401
        %v3440 = vpop.f32.mrb[0].mxu0
        %v3441 = vadd.f32 %v3261, %v3440
        %v3442 = vpop.f32.mrb[0].mxu0
        %v3443 = vpop.f32.mrb[0].mxu0
        %v3444 = vpop.f32.mrb[0].mxu0
        %3445 = vdwg.mxu0
        %v3446 = vsel %vm1635, %v3303, -inf
        %3447 = vmax.xlane.f32.xlu0 %v3446
        %v3448 = vpop.xlane.xlu0 %3447
        %v3449 = vsel %vm1635, %v3349, -inf
        %3450 = vmax.xlane.f32.xlu0 %v3449
        %v3451 = vpop.xlane.xlu0 %3450
        %v3452 = vsel %vm1635, %v3395, -inf
        %3453 = vmax.xlane.f32.xlu0 %v3452
        %v3454 = vpop.xlane.xlu0 %3453
        %v3455 = vsel %vm1635, %v3441, -inf
        %3456 = vmax.xlane.f32.xlu0 %v3455
        %v3457 = vpop.xlane.xlu0 %3456
        %v3458 = vsub.f32 %v3303, %v3448
        %v3459 = vsub.f32 %v3349, %v3451
        %v3460 = vsub.f32 %v3395, %v3454
        %v3461 = vsub.f32 %v3441, %v3457
        %v3462 = vmul.f32 %v3458, 1.442695
        %v3463 = vpow.pop %v3462
        %v3464 = vmul.f32 %v3459, 1.442695
        %v3465 = vpow.pop %v3464
        %v3466 = vmul.f32 %v3460, 1.442695
        %v3467 = vpow.pop %v3466
        %v3468 = vmul.f32 %v3461, 1.442695
        %v3469 = vpow.pop %v3468
        %v3470 = vsel %vm1635, %v3463, 0.0
        %3471 = vadd.xlane.f32.xlu0 %v3470
        %v3472 = vpop.xlane.xlu0 %3471
        %v3473 = vsel %vm1635, %v3465, 0.0
        %3474 = vadd.xlane.f32.xlu0 %v3473
        %v3475 = vpop.xlane.xlu0 %3474
        %v3476 = vsel %vm1635, %v3467, 0.0
        %3477 = vadd.xlane.f32.xlu0 %v3476
        %v3478 = vpop.xlane.xlu0 %3477
        %v3479 = vsel %vm1635, %v3469, 0.0
        %3480 = vadd.xlane.f32.xlu0 %v3479
        %v3481 = vpop.xlane.xlu0 %3480
        %v3482 = vrcp.pop %v3472
        %v3483 = vrcp.pop %v3475
        %v3484 = vrcp.pop %v3478
        %v3485 = vrcp.pop %v3481
        %v3486 = vmul.f32 %v3463, %v3482
        %v3487 = vmul.f32 %v3465, %v3483
        %v3488 = vmul.f32 %v3467, %v3484
        %v3489 = vmul.f32 %v3469, %v3485
        %v3490 = vpack.c.bf16 %v3486, %v3486
        %v3491 = vpack.c.bf16 %v3487, %v3487
        %v3492 = vpack.c.bf16 %v3488, %v3488
        %v3493 = vpack.c.bf16 %v3489, %v3489
        %v3495 = vsel %vm1635, %v3490, 0
        %v3498 = vsel %vm1687, %v3238, 0
        %3500 = vmatprep.subr.bf16.mxu0 0
        %3501 = vmatpush1.bf16.msra.mxu0 %v3498
        %3502 = vmatprep.subr.bf16.mxu0 0
        %3503 = vmatpush1.bf16.msra.mxu0 0
        %3504 = vmatprep.subr.bf16.mxu0 0
        %3505 = vmatpush1.bf16.msra.mxu0 0
        %3506 = vmatprep.subr.bf16.mxu0 0
        %3507 = vmatpush1.bf16.msra.mxu0 0
        %3508 = vmatprep.subr.bf16.mxu0 0
        %3509 = vmatpush1.bf16.msra.mxu0 0
        %3510 = vmatprep.subr.bf16.mxu0 0
        %3511 = vmatpush1.bf16.msra.mxu0 0
        %3512 = vmatprep.subr.bf16.mxu0 0
        %3513 = vmatpush1.bf16.msra.mxu0 0
        %3514 = vmatprep.subr.bf16.mxu0 0
        %3515 = vmatpush1.bf16.msra.mxu0 0
        %3516 = vmatprep.subr.bf16.mxu0 0
        %3517 = vmatpush1.bf16.msra.mxu0 0
        %3518 = vmatprep.subr.bf16.mxu0 0
        %3519 = vmatpush1.bf16.msra.mxu0 0
        %3520 = vmatprep.subr.bf16.mxu0 0
        %3521 = vmatpush1.bf16.msra.mxu0 0
        %3522 = vmatprep.subr.bf16.mxu0 0
        %3523 = vmatpush1.bf16.msra.mxu0 0
        %3524 = vmatprep.subr.bf16.mxu0 0
        %3525 = vmatpush1.bf16.msra.mxu0 0
        %3526 = vmatprep.subr.bf16.mxu0 0
        %3527 = vmatpush1.bf16.msra.mxu0 0
        %3528 = vmatprep.subr.bf16.mxu0 0
        %3529 = vmatpush1.bf16.msra.mxu0 0
        %3530 = vmatprep.subr.bf16.mxu0 0
        %3531 = vmatpush1.bf16.msra.mxu0 0
        %3532 = vmatprep.mubr.bf16.mxu0 0
        %3533 = vmatmul.mubr.bf16.gmra.mrb[0].mxu0 %v3495
        %v3534 = vpop.f32.mrb[0].mxu0
        %v3535 = vadd.f32 0.0, %v3534
        %v3536 = vpop.f32.mrb[0].mxu0
        %v3537 = vpop.f32.mrb[0].mxu0
        %v3538 = vpop.f32.mrb[0].mxu0
        %3539 = vdwg.mxu0
        %v3541 = vsel %vm1635, %v3491, 0
        %v3544 = vsel %vm1687, %v3255, 0
        %3546 = vmatprep.subr.bf16.mxu0 0
        %3547 = vmatpush1.bf16.msra.mxu0 %v3544
        %3548 = vmatprep.subr.bf16.mxu0 0
        %3549 = vmatpush1.bf16.msra.mxu0 0
        %3550 = vmatprep.subr.bf16.mxu0 0
        %3551 = vmatpush1.bf16.msra.mxu0 0
        %3552 = vmatprep.subr.bf16.mxu0 0
        %3553 = vmatpush1.bf16.msra.mxu0 0
        %3554 = vmatprep.subr.bf16.mxu0 0
        %3555 = vmatpush1.bf16.msra.mxu0 0
        %3556 = vmatprep.subr.bf16.mxu0 0
        %3557 = vmatpush1.bf16.msra.mxu0 0
        %3558 = vmatprep.subr.bf16.mxu0 0
        %3559 = vmatpush1.bf16.msra.mxu0 0
        %3560 = vmatprep.subr.bf16.mxu0 0
        %3561 = vmatpush1.bf16.msra.mxu0 0
        %3562 = vmatprep.subr.bf16.mxu0 0
        %3563 = vmatpush1.bf16.msra.mxu0 0
        %3564 = vmatprep.subr.bf16.mxu0 0
        %3565 = vmatpush1.bf16.msra.mxu0 0
        %3566 = vmatprep.subr.bf16.mxu0 0
        %3567 = vmatpush1.bf16.msra.mxu0 0
        %3568 = vmatprep.subr.bf16.mxu0 0
        %3569 = vmatpush1.bf16.msra.mxu0 0
        %3570 = vmatprep.subr.bf16.mxu0 0
        %3571 = vmatpush1.bf16.msra.mxu0 0
        %3572 = vmatprep.subr.bf16.mxu0 0
        %3573 = vmatpush1.bf16.msra.mxu0 0
        %3574 = vmatprep.subr.bf16.mxu0 0
        %3575 = vmatpush1.bf16.msra.mxu0 0
        %3576 = vmatprep.subr.bf16.mxu0 0
        %3577 = vmatpush1.bf16.msra.mxu0 0
        %3578 = vmatprep.mubr.bf16.mxu0 0
        %3579 = vmatmul.mubr.bf16.gmra.mrb[0].mxu0 %v3541
        %v3580 = vpop.f32.mrb[0].mxu0
        %v3581 = vadd.f32 0.0, %v3580
        %v3582 = vpop.f32.mrb[0].mxu0
        %v3583 = vpop.f32.mrb[0].mxu0
        %v3584 = vpop.f32.mrb[0].mxu0
        %3585 = vdwg.mxu0
        %v3587 = vsel %vm1635, %v3492, 0
        %v3590 = vsel %vm1687, %v3257, 0
        %3592 = vmatprep.subr.bf16.mxu0 0
        %3593 = vmatpush1.bf16.msra.mxu0 %v3590
        %3594 = vmatprep.subr.bf16.mxu0 0
        %3595 = vmatpush1.bf16.msra.mxu0 0
        %3596 = vmatprep.subr.bf16.mxu0 0
        %3597 = vmatpush1.bf16.msra.mxu0 0
        %3598 = vmatprep.subr.bf16.mxu0 0
        %3599 = vmatpush1.bf16.msra.mxu0 0
        %3600 = vmatprep.subr.bf16.mxu0 0
        %3601 = vmatpush1.bf16.msra.mxu0 0
        %3602 = vmatprep.subr.bf16.mxu0 0
        %3603 = vmatpush1.bf16.msra.mxu0 0
        %3604 = vmatprep.subr.bf16.mxu0 0
        %3605 = vmatpush1.bf16.msra.mxu0 0
        %3606 = vmatprep.subr.bf16.mxu0 0
        %3607 = vmatpush1.bf16.msra.mxu0 0
        %3608 = vmatprep.subr.bf16.mxu0 0
        %3609 = vmatpush1.bf16.msra.mxu0 0
        %3610 = vmatprep.subr.bf16.mxu0 0
        %3611 = vmatpush1.bf16.msra.mxu0 0
        %3612 = vmatprep.subr.bf16.mxu0 0
        %3613 = vmatpush1.bf16.msra.mxu0 0
        %3614 = vmatprep.subr.bf16.mxu0 0
        %3615 = vmatpush1.bf16.msra.mxu0 0
        %3616 = vmatprep.subr.bf16.mxu0 0
        %3617 = vmatpush1.bf16.msra.mxu0 0
        %3618 = vmatprep.subr.bf16.mxu0 0
        %3619 = vmatpush1.bf16.msra.mxu0 0
        %3620 = vmatprep.subr.bf16.mxu0 0
        %3621 = vmatpush1.bf16.msra.mxu0 0
        %3622 = vmatprep.subr.bf16.mxu0 0
        %3623 = vmatpush1.bf16.msra.mxu0 0
        %3624 = vmatprep.mubr.bf16.mxu0 0
        %3625 = vmatmul.mubr.bf16.gmra.mrb[0].mxu0 %v3587
        %v3626 = vpop.f32.mrb[0].mxu0
        %v3627 = vadd.f32 0.0, %v3626
        %v3628 = vpop.f32.mrb[0].mxu0
        %v3629 = vpop.f32.mrb[0].mxu0
        %v3630 = vpop.f32.mrb[0].mxu0
        %3631 = vdwg.mxu0
        %v3633 = vsel %vm1635, %v3493, 0
        %v3636 = vsel %vm1687, %v3259, 0
        %3638 = vmatprep.subr.bf16.mxu0 0
        %3639 = vmatpush1.bf16.msra.mxu0 %v3636
        %3640 = vmatprep.subr.bf16.mxu0 0
        %3641 = vmatpush1.bf16.msra.mxu0 0
        %3642 = vmatprep.subr.bf16.mxu0 0
        %3643 = vmatpush1.bf16.msra.mxu0 0
        %3644 = vmatprep.subr.bf16.mxu0 0
        %3645 = vmatpush1.bf16.msra.mxu0 0
        %3646 = vmatprep.subr.bf16.mxu0 0
        %3647 = vmatpush1.bf16.msra.mxu0 0
        %3648 = vmatprep.subr.bf16.mxu0 0
        %3649 = vmatpush1.bf16.msra.mxu0 0
        %3650 = vmatprep.subr.bf16.mxu0 0
        %3651 = vmatpush1.bf16.msra.mxu0 0
        %3652 = vmatprep.subr.bf16.mxu0 0
        %3653 = vmatpush1.bf16.msra.mxu0 0
        %3654 = vmatprep.subr.bf16.mxu0 0
        %3655 = vmatpush1.bf16.msra.mxu0 0
        %3656 = vmatprep.subr.bf16.mxu0 0
        %3657 = vmatpush1.bf16.msra.mxu0 0
        %3658 = vmatprep.subr.bf16.mxu0 0
        %3659 = vmatpush1.bf16.msra.mxu0 0
        %3660 = vmatprep.subr.bf16.mxu0 0
        %3661 = vmatpush1.bf16.msra.mxu0 0
        %3662 = vmatprep.subr.bf16.mxu0 0
        %3663 = vmatpush1.bf16.msra.mxu0 0
        %3664 = vmatprep.subr.bf16.mxu0 0
        %3665 = vmatpush1.bf16.msra.mxu0 0
        %3666 = vmatprep.subr.bf16.mxu0 0
        %3667 = vmatpush1.bf16.msra.mxu0 0
        %3668 = vmatprep.subr.bf16.mxu0 0
        %3669 = vmatpush1.bf16.msra.mxu0 0
        %3670 = vmatprep.mubr.bf16.mxu0 0
        %3671 = vmatmul.mubr.bf16.gmra.mrb[0].mxu0 %v3633
        %v3672 = vpop.f32.mrb[0].mxu0
        %v3673 = vadd.f32 0.0, %v3672
        %v3674 = vpop.f32.mrb[0].mxu0
        %v3675 = vpop.f32.mrb[0].mxu0
        %v3676 = vpop.f32.mrb[0].mxu0
        %3677 = vdwg.mxu0
        %3679 = vrot.lane.b32.xlu0 %v3581, 32
        %v3680 = vpop.permute.xlu0 %3679
        %3683 = vrot.lane.b32.xlu0 %v3627, 64
        %v3684 = vpop.permute.xlu0 %3683
        %3687 = vrot.lane.b32.xlu0 %v3673, 96
        %v3688 = vpop.permute.xlu0 %3687
        %v3690 = vsel %vm1450, %v3535, %v3680
        %v3691 = vsel %vm1882, %v3690, %v3684
        %v3692 = vsel %vm1884, %v3691, %v3688
        %v3693 = vpack.c.bf16 %v3692, %v3235
        %v3694 = vld [vmem:[%s931] sm:$0xf]
        %v3695 = vld [vmem:[%s931 + $0x4] sm:$0xf]
        %v3696 = vld [vmem:[%s931 + $0x8] sm:$0xf]
        %v3697 = vld [vmem:[%s931 + $0xc] sm:$0xf]
        %v3698 = vld [vmem:[%s931 + $0x10] sm:$0xf]
        %v3699 = vld [vmem:[%s931 + $0x14] sm:$0xf]
        %v3700 = vld [vmem:[%s931 + $0x18] sm:$0xf]
        %v3701 = vld [vmem:[%s931 + $0x1c] sm:$0xf]
        %v3702 = vld [vmem:[%s931 + $0x20] sm:$0xf]
        %v3703 = vld [vmem:[%s931 + $0x24] sm:$0xf]
        %v3704 = vld [vmem:[%s931 + $0x28] sm:$0xf]
        %v3705 = vld [vmem:[%s931 + $0x2c] sm:$0xf]
        %v3706 = vld [vmem:[%s931 + $0x30] sm:$0xf]
        %v3707 = vld [vmem:[%s931 + $0x34] sm:$0xf]
        %v3708 = vld [vmem:[%s931 + $0x38] sm:$0xf]
        %v3709 = vld [vmem:[%s931 + $0x3c] sm:$0xf]
        %v3726 = vunpack.c.l.b16 %v3694
        %v3727 = vunpack.c.l.b16 %v3695
        %v3728 = vunpack.c.l.b16 %v3696
        %v3729 = vunpack.c.l.b16 %v3697
        %v3730 = vunpack.c.l.b16 %v3698
        %v3731 = vunpack.c.l.b16 %v3699
        %v3732 = vunpack.c.l.b16 %v3700
        %v3733 = vunpack.c.l.b16 %v3701
        %v3734 = vunpack.c.l.b16 %v3702
        %v3735 = vunpack.c.l.b16 %v3703
        %v3736 = vunpack.c.l.b16 %v3704
        %v3737 = vunpack.c.l.b16 %v3705
        %v3738 = vunpack.c.l.b16 %v3706
        %v3739 = vunpack.c.l.b16 %v3707
        %v3740 = vunpack.c.l.b16 %v3708
        %v3741 = vunpack.c.l.b16 %v3709
        %v3742 = vpack.c.b16 %v3727, %v3726
        %v3743 = vpack.c.b16 %v3729, %v3728
        %v3744 = vpack.c.b16 %v3731, %v3730
        %v3745 = vpack.c.b16 %v3733, %v3732
        %v3746 = vpack.c.b16 %v3735, %v3734
        %v3747 = vpack.c.b16 %v3737, %v3736
        %v3748 = vpack.c.b16 %v3739, %v3738
        %v3749 = vpack.c.b16 %v3741, %v3740
        %3758 = vmatprep.subr.bf16.mxu0 0
        %3759 = vmatpush1.bf16.msra.mxu0 %v3742
        %3760 = vmatprep.subr.bf16.mxu0 0
        %3761 = vmatpush1.bf16.msra.mxu0 %v3743
        %3762 = vmatprep.subr.bf16.mxu0 0
        %3763 = vmatpush1.bf16.msra.mxu0 %v3744
        %3764 = vmatprep.subr.bf16.mxu0 0
        %3765 = vmatpush1.bf16.msra.mxu0 %v3745
        %3766 = vmatprep.subr.bf16.mxu0 0
        %3767 = vmatpush1.bf16.msra.mxu0 %v3746
        %3768 = vmatprep.subr.bf16.mxu0 0
        %3769 = vmatpush1.bf16.msra.mxu0 %v3747
        %3770 = vmatprep.subr.bf16.mxu0 0
        %3771 = vmatpush1.bf16.msra.mxu0 %v3748
        %3772 = vmatprep.subr.bf16.mxu0 0
        %3773 = vmatpush1.bf16.msra.mxu0 %v3749
        %3774 = vmatprep.subr.bf16.mxu0 0
        %3775 = vmatpush1.bf16.msra.mxu0 0
        %3776 = vmatprep.subr.bf16.mxu0 0
        %3777 = vmatpush1.bf16.msra.mxu0 0
        %3778 = vmatprep.subr.bf16.mxu0 0
        %3779 = vmatpush1.bf16.msra.mxu0 0
        %3780 = vmatprep.subr.bf16.mxu0 0
        %3781 = vmatpush1.bf16.msra.mxu0 0
        %3782 = vmatprep.subr.bf16.mxu0 0
        %3783 = vmatpush1.bf16.msra.mxu0 0
        %3784 = vmatprep.subr.bf16.mxu0 0
        %3785 = vmatpush1.bf16.msra.mxu0 0
        %3786 = vmatprep.subr.bf16.mxu0 0
        %3787 = vmatpush1.bf16.msra.mxu0 0
        %3788 = vmatprep.subr.bf16.mxu0 0
        %3789 = vmatpush1.bf16.msra.mxu0 0
        %3790 = vmatprep.mubr.bf16.mxu0 0
        %3791 = vmatmul.mubr.bf16.gmra.mrb[0].mxu0 %v3693
        %v3792 = vpop.f32.mrb[0].mxu0
        %v3793 = vadd.f32 0.0, %v3792
        %v3794 = vpop.f32.mrb[0].mxu0
        %v3795 = vpop.f32.mrb[0].mxu0
        %v3796 = vadd.f32 0.0, %v3795
        %v3797 = vpop.f32.mrb[0].mxu0
        %3798 = vdwg.mxu0
        %v3799 = vadd.f32 %v2458, %v3793
        %v3800 = vadd.f32 %v2459, %v3796
        %v3801 = vld [vmem:[%s1081] sm:$0x1]
        %v3803 = vlaneseq
        %v3804 = vshrl.u32 %v3803, 7
        %v3805 = vsub.s32 0, %v3804
        %v3806 = vrot.slane %v3801, %v3805
        %v3808 = vadd.f32 %v3799, %v3806
        %v3809 = vadd.f32 %v3800, %v3806
        %3810 = vadd.xlane.f32.xlu0 %v3808
        %v3811 = vpop.xlane.xlu0 %3810
        %3812 = vadd.xlane.f32.xlu0 %v3809
        %v3813 = vpop.xlane.xlu0 %3812
        %v3814 = vmul.f32 %v3811, %v1116
        %v3815 = vmul.f32 %v3813, %v1116
        %v3816 = vsub.f32 %v3808, %v3814
        %v3817 = vsub.f32 %v3809, %v3815
        %v3818 = vmul.f32 %v3816, %v3816
        %v3819 = vmul.f32 %v3817, %v3817
        %3820 = vadd.xlane.f32.xlu0 %v3818
        %v3821 = vpop.xlane.xlu0 %3820
        %3822 = vadd.xlane.f32.xlu0 %v3819
        %v3823 = vpop.xlane.xlu0 %3822
        %v3824 = vmul.f32 %v3821, 0.007874016
        %v3825 = vmul.f32 %v3823, 0.007874016
        %v3826 = vrsqrt.pop %v3824
        %v3827 = vmul.f32 %v3824, %v3826
        %vm3828 = vcmp.eq.f32.partialorder %v3824, inf
        %v3829 = vsel %vm3828, %v3824, %v3827
        %vm3830 = vcmp.eq.f32.partialorder %v3824, 0.0
        %v3831 = vand.u32 %v3824, 2147483648
        %v3832 = vsel %vm3830, %v3831, %v3829
        %v3833 = vrsqrt.pop %v3825
        %v3834 = vmul.f32 %v3825, %v3833
        %vm3835 = vcmp.eq.f32.partialorder %v3825, inf
        %v3836 = vsel %vm3835, %v3825, %v3834
        %vm3837 = vcmp.eq.f32.partialorder %v3825, 0.0
        %v3838 = vand.u32 %v3825, 2147483648
        %v3839 = vsel %vm3837, %v3838, %v3836
        %v3840 = vlaneseq
        %v3841 = vshrl.u32 %v3840, 7
        %v3842 = vsub.s32 2, %v3841
        %v3843 = vrot.slane %v1110, %v3842
        %v3844 = vmul.f32 %v3843, %v3816
        %v3845 = vmul.f32 %v3843, %v3817
        %v3846 = vadd.f32 %v3832, 1e-06
        %v3847 = vadd.f32 %v3839, 1e-06
        %v3848 = vrcp.pop %v3846
        %v3849 = vmul.f32 %v3844, %v3848
        %v3850 = vrcp.pop %v3847
        %v3851 = vmul.f32 %v3845, %v3850
        %v3852 = vlaneseq
        %v3853 = vshrl.u32 %v3852, 7
        %v3854 = vsub.s32 2, %v3853
        %v3855 = vrot.slane %v1111, %v3854
        %v3856 = vadd.f32 %v3849, %v3855
        %v3857 = vadd.f32 %v3851, %v3855
        %v3858 = vpack.c.bf16 %v3857, %v3856
        %v3859 = vld [vmem:[%s940] sm:$0xff]
        %v3860 = vld [vmem:[%s940 + $0x8] sm:$0xff]
        %v3861 = vld [vmem:[%s940 + $0x10] sm:$0xff]
        %v3862 = vld [vmem:[%s940 + $0x18] sm:$0xff]
        %v3863 = vld [vmem:[%s940 + $0x20] sm:$0xff]
        %v3864 = vld [vmem:[%s940 + $0x28] sm:$0xff]
        %v3865 = vld [vmem:[%s940 + $0x30] sm:$0xff]
        %v3866 = vld [vmem:[%s940 + $0x38] sm:$0xff]
        %v3867 = vld [vmem:[%s940 + $0x40] sm:$0xff]
        %v3868 = vld [vmem:[%s940 + $0x48] sm:$0xff]
        %v3869 = vld [vmem:[%s940 + $0x50] sm:$0xff]
        %v3870 = vld [vmem:[%s940 + $0x58] sm:$0xff]
        %v3871 = vld [vmem:[%s940 + $0x60] sm:$0xff]
        %v3872 = vld [vmem:[%s940 + $0x68] sm:$0xff]
        %v3873 = vld [vmem:[%s940 + $0x70] sm:$0xff]
        %v3874 = vld [vmem:[%s940 + $0x78] sm:$0xff]
        %v3875 = vld [vmem:[%s1085] sm:$0x3]
        %v3877 = vlaneseq
        %v3878 = vshrl.u32 %v3877, 7
        %v3879 = vsub.s32 0, %v3878
        %v3880 = vrot.slane %v3875, %v3879
        %v3881 = vlaneseq
        %v3882 = vshrl.u32 %v3881, 7
        %v3883 = vsub.s32 1, %v3882
        %v3884 = vrot.slane %v3875, %v3883
        %v3903 = vunpack.c.l.b16 %v3859
        %v3904 = vunpack.c.h.b16 %v3859
        %v3905 = vunpack.c.l.b16 %v3860
        %v3906 = vunpack.c.h.b16 %v3860
        %v3907 = vunpack.c.l.b16 %v3861
        %v3908 = vunpack.c.h.b16 %v3861
        %v3909 = vunpack.c.l.b16 %v3862
        %v3910 = vunpack.c.h.b16 %v3862
        %v3911 = vunpack.c.l.b16 %v3863
        %v3912 = vunpack.c.h.b16 %v3863
        %v3913 = vunpack.c.l.b16 %v3864
        %v3914 = vunpack.c.h.b16 %v3864
        %v3915 = vunpack.c.l.b16 %v3865
        %v3916 = vunpack.c.h.b16 %v3865
        %v3917 = vunpack.c.l.b16 %v3866
        %v3918 = vunpack.c.h.b16 %v3866
        %v3919 = vunpack.c.l.b16 %v3867
        %v3920 = vunpack.c.h.b16 %v3867
        %v3921 = vunpack.c.l.b16 %v3868
        %v3922 = vunpack.c.h.b16 %v3868
        %v3923 = vunpack.c.l.b16 %v3869
        %v3924 = vunpack.c.h.b16 %v3869
        %v3925 = vunpack.c.l.b16 %v3870
        %v3926 = vunpack.c.h.b16 %v3870
        %v3927 = vunpack.c.l.b16 %v3871
        %v3928 = vunpack.c.h.b16 %v3871
        %v3929 = vunpack.c.l.b16 %v3872
        %v3930 = vunpack.c.h.b16 %v3872
        %v3931 = vunpack.c.l.b16 %v3873
        %v3932 = vunpack.c.h.b16 %v3873
        %v3933 = vunpack.c.l.b16 %v3874
        %v3934 = vunpack.c.h.b16 %v3874
        %v3935 = vpack.c.b16 %v3905, %v3903
        %v3936 = vpack.c.b16 %v3906, %v3904
        %v3937 = vpack.c.b16 %v3909, %v3907
        %v3938 = vpack.c.b16 %v3910, %v3908
        %v3939 = vpack.c.b16 %v3913, %v3911
        %v3940 = vpack.c.b16 %v3914, %v3912
        %v3941 = vpack.c.b16 %v3917, %v3915
        %v3942 = vpack.c.b16 %v3918, %v3916
        %v3943 = vpack.c.b16 %v3921, %v3919
        %v3944 = vpack.c.b16 %v3922, %v3920
        %v3945 = vpack.c.b16 %v3925, %v3923
        %v3946 = vpack.c.b16 %v3926, %v3924
        %v3947 = vpack.c.b16 %v3929, %v3927
        %v3948 = vpack.c.b16 %v3930, %v3928
        %v3949 = vpack.c.b16 %v3933, %v3931
        %v3950 = vpack.c.b16 %v3934, %v3932
        %3967 = vmatprep.subr.bf16.mxu0 %v3936
        %3968 = vmatpush1.bf16.msra.mxu0 %v3935
        %3969 = vmatprep.subr.bf16.mxu0 %v3938
        %3970 = vmatpush1.bf16.msra.mxu0 %v3937
        %3971 = vmatprep.subr.bf16.mxu0 %v3940
        %3972 = vmatpush1.bf16.msra.mxu0 %v3939
        %3973 = vmatprep.subr.bf16.mxu0 %v3942
        %3974 = vmatpush1.bf16.msra.mxu0 %v3941
        %3975 = vmatprep.subr.bf16.mxu0 %v3944
        %3976 = vmatpush1.bf16.msra.mxu0 %v3943
        %3977 = vmatprep.subr.bf16.mxu0 %v3946
        %3978 = vmatpush1.bf16.msra.mxu0 %v3945
        %3979 = vmatprep.subr.bf16.mxu0 %v3948
        %3980 = vmatpush1.bf16.msra.mxu0 %v3947
        %3981 = vmatprep.subr.bf16.mxu0 %v3950
        %3982 = vmatpush1.bf16.msra.mxu0 %v3949
        %3983 = vmatprep.subr.bf16.mxu0 0
        %3984 = vmatpush1.bf16.msra.mxu0 0
        %3985 = vmatprep.subr.bf16.mxu0 0
        %3986 = vmatpush1.bf16.msra.mxu0 0
        %3987 = vmatprep.subr.bf16.mxu0 0
        %3988 = vmatpush1.bf16.msra.mxu0 0
        %3989 = vmatprep.subr.bf16.mxu0 0
        %3990 = vmatpush1.bf16.msra.mxu0 0
        %3991 = vmatprep.subr.bf16.mxu0 0
        %3992 = vmatpush1.bf16.msra.mxu0 0
        %3993 = vmatprep.subr.bf16.mxu0 0
        %3994 = vmatpush1.bf16.msra.mxu0 0
        %3995 = vmatprep.subr.bf16.mxu0 0
        %3996 = vmatpush1.bf16.msra.mxu0 0
        %3997 = vmatprep.subr.bf16.mxu0 0
        %3998 = vmatpush1.bf16.msra.mxu0 0
        %3999 = vmatprep.mubr.bf16.mxu0 0
        %4000 = vmatmul.mubr.bf16.gmra.mrb[0].mxu0 %v3858
        %v4001 = vpop.f32.mrb[0].mxu0
        %v4002 = vadd.f32 %v3880, %v4001
        %v4003 = vpop.f32.mrb[0].mxu0
        %v4004 = vadd.f32 %v3884, %v4003
        %v4005 = vpop.f32.mrb[0].mxu0
        %v4006 = vadd.f32 %v3880, %v4005
        %v4007 = vpop.f32.mrb[0].mxu0
        %v4008 = vadd.f32 %v3884, %v4007
        %4009 = vdwg.mxu0
        %v4010 = vmax.f32 %v4002, 0.0
        %v4011 = vmax.f32 %v4004, 0.0
        %v4012 = vmax.f32 %v4006, 0.0
        %v4013 = vmax.f32 %v4008, 0.0
        %v4014 = vpack.c.bf16 %v4012, %v4010
        %v4015 = vpack.c.bf16 %v4013, %v4011
        %v4016 = vld [vmem:[%s949] sm:$0xf]
        %v4017 = vld [vmem:[%s949 + $0x4] sm:$0xf]
        %v4018 = vld [vmem:[%s949 + $0x8] sm:$0xf]
        %v4019 = vld [vmem:[%s949 + $0xc] sm:$0xf]
        %v4020 = vld [vmem:[%s949 + $0x10] sm:$0xf]
        %v4021 = vld [vmem:[%s949 + $0x14] sm:$0xf]
        %v4022 = vld [vmem:[%s949 + $0x18] sm:$0xf]
        %v4023 = vld [vmem:[%s949 + $0x1c] sm:$0xf]
        %v4024 = vld [vmem:[%s949 + $0x20] sm:$0xf]
        %v4025 = vld [vmem:[%s949 + $0x24] sm:$0xf]
        %v4026 = vld [vmem:[%s949 + $0x28] sm:$0xf]
        %v4027 = vld [vmem:[%s949 + $0x2c] sm:$0xf]
        %v4028 = vld [vmem:[%s949 + $0x30] sm:$0xf]
        %v4029 = vld [vmem:[%s949 + $0x34] sm:$0xf]
        %v4030 = vld [vmem:[%s949 + $0x38] sm:$0xf]
        %v4031 = vld [vmem:[%s949 + $0x3c] sm:$0xf]
        %v4032 = vld [vmem:[%s949 + $0x40] sm:$0xf]
        %v4033 = vld [vmem:[%s949 + $0x44] sm:$0xf]
        %v4034 = vld [vmem:[%s949 + $0x48] sm:$0xf]
        %v4035 = vld [vmem:[%s949 + $0x4c] sm:$0xf]
        %v4036 = vld [vmem:[%s949 + $0x50] sm:$0xf]
        %v4037 = vld [vmem:[%s949 + $0x54] sm:$0xf]
        %v4038 = vld [vmem:[%s949 + $0x58] sm:$0xf]
        %v4039 = vld [vmem:[%s949 + $0x5c] sm:$0xf]
        %v4040 = vld [vmem:[%s949 + $0x60] sm:$0xf]
        %v4041 = vld [vmem:[%s949 + $0x64] sm:$0xf]
        %v4042 = vld [vmem:[%s949 + $0x68] sm:$0xf]
        %v4043 = vld [vmem:[%s949 + $0x6c] sm:$0xf]
        %v4044 = vld [vmem:[%s949 + $0x70] sm:$0xf]
        %v4045 = vld [vmem:[%s949 + $0x74] sm:$0xf]
        %v4046 = vld [vmem:[%s949 + $0x78] sm:$0xf]
        %v4047 = vld [vmem:[%s949 + $0x7c] sm:$0xf]
        %v4048 = vld [vmem:[%s1088] sm:$0x1]
        %v4050 = vlaneseq
        %v4051 = vshrl.u32 %v4050, 7
        %v4052 = vsub.s32 0, %v4051
        %v4053 = vrot.slane %v4048, %v4052
        %v4087 = vunpack.c.l.b16 %v4016
        %v4088 = vunpack.c.l.b16 %v4017
        %v4089 = vunpack.c.l.b16 %v4018
        %v4090 = vunpack.c.l.b16 %v4019
        %v4091 = vunpack.c.l.b16 %v4020
        %v4092 = vunpack.c.l.b16 %v4021
        %v4093 = vunpack.c.l.b16 %v4022
        %v4094 = vunpack.c.l.b16 %v4023
        %v4095 = vunpack.c.l.b16 %v4024
        %v4096 = vunpack.c.l.b16 %v4025
        %v4097 = vunpack.c.l.b16 %v4026
        %v4098 = vunpack.c.l.b16 %v4027
        %v4099 = vunpack.c.l.b16 %v4028
        %v4100 = vunpack.c.l.b16 %v4029
        %v4101 = vunpack.c.l.b16 %v4030
        %v4102 = vunpack.c.l.b16 %v4031
        %v4103 = vunpack.c.l.b16 %v4032
        %v4104 = vunpack.c.l.b16 %v4033
        %v4105 = vunpack.c.l.b16 %v4034
        %v4106 = vunpack.c.l.b16 %v4035
        %v4107 = vunpack.c.l.b16 %v4036
        %v4108 = vunpack.c.l.b16 %v4037
        %v4109 = vunpack.c.l.b16 %v4038
        %v4110 = vunpack.c.l.b16 %v4039
        %v4111 = vunpack.c.l.b16 %v4040
        %v4112 = vunpack.c.l.b16 %v4041
        %v4113 = vunpack.c.l.b16 %v4042
        %v4114 = vunpack.c.l.b16 %v4043
        %v4115 = vunpack.c.l.b16 %v4044
        %v4116 = vunpack.c.l.b16 %v4045
        %v4117 = vunpack.c.l.b16 %v4046
        %v4118 = vunpack.c.l.b16 %v4047
        %v4119 = vpack.c.b16 %v4088, %v4087
        %v4120 = vpack.c.b16 %v4090, %v4089
        %v4121 = vpack.c.b16 %v4092, %v4091
        %v4122 = vpack.c.b16 %v4094, %v4093
        %v4123 = vpack.c.b16 %v4096, %v4095
        %v4124 = vpack.c.b16 %v4098, %v4097
        %v4125 = vpack.c.b16 %v4100, %v4099
        %v4126 = vpack.c.b16 %v4102, %v4101
        %v4127 = vpack.c.b16 %v4104, %v4103
        %v4128 = vpack.c.b16 %v4106, %v4105
        %v4129 = vpack.c.b16 %v4108, %v4107
        %v4130 = vpack.c.b16 %v4110, %v4109
        %v4131 = vpack.c.b16 %v4112, %v4111
        %v4132 = vpack.c.b16 %v4114, %v4113
        %v4133 = vpack.c.b16 %v4116, %v4115
        %v4134 = vpack.c.b16 %v4118, %v4117
        %4151 = vmatprep.subr.bf16.mxu0 0
        %4152 = vmatpush1.bf16.msra.mxu0 %v4119
        %4153 = vmatprep.subr.bf16.mxu0 0
        %4154 = vmatpush1.bf16.msra.mxu0 %v4120
        %4155 = vmatprep.subr.bf16.mxu0 0
        %4156 = vmatpush1.bf16.msra.mxu0 %v4121
        %4157 = vmatprep.subr.bf16.mxu0 0
        %4158 = vmatpush1.bf16.msra.mxu0 %v4122
        %4159 = vmatprep.subr.bf16.mxu0 0
        %4160 = vmatpush1.bf16.msra.mxu0 %v4123
        %4161 = vmatprep.subr.bf16.mxu0 0
        %4162 = vmatpush1.bf16.msra.mxu0 %v4124
        %4163 = vmatprep.subr.bf16.mxu0 0
        %4164 = vmatpush1.bf16.msra.mxu0 %v4125
        %4165 = vmatprep.subr.bf16.mxu0 0
        %4166 = vmatpush1.bf16.msra.mxu0 %v4126
        %4167 = vmatprep.subr.bf16.mxu0 0
        %4168 = vmatpush1.bf16.msra.mxu0 %v4127
        %4169 = vmatprep.subr.bf16.mxu0 0
        %4170 = vmatpush1.bf16.msra.mxu0 %v4128
        %4171 = vmatprep.subr.bf16.mxu0 0
        %4172 = vmatpush1.bf16.msra.mxu0 %v4129
        %4173 = vmatprep.subr.bf16.mxu0 0
        %4174 = vmatpush1.bf16.msra.mxu0 %v4130
        %4175 = vmatprep.subr.bf16.mxu0 0
        %4176 = vmatpush1.bf16.msra.mxu0 %v4131
        %4177 = vmatprep.subr.bf16.mxu0 0
        %4178 = vmatpush1.bf16.msra.mxu0 %v4132
        %4179 = vmatprep.subr.bf16.mxu0 0
        %4180 = vmatpush1.bf16.msra.mxu0 %v4133
        %4181 = vmatprep.subr.bf16.mxu0 0
        %4182 = vmatpush1.bf16.msra.mxu0 %v4134
        %4183 = vmatprep.mubr.bf16.mxu0 %v4015
        %4184 = vmatmul.mubr.bf16.gmra.mrb[0].mxu0 %v4014
        %v4185 = vpop.f32.mrb[0].mxu0
        %v4186 = vadd.f32 %v4053, %v4185
        %v4187 = vpop.f32.mrb[0].mxu0
        %v4188 = vpop.f32.mrb[0].mxu0
        %v4189 = vadd.f32 %v4053, %v4188
        %v4190 = vpop.f32.mrb[0].mxu0
        %4191 = vdwg.mxu0
        %v4192 = vadd.f32 %v3808, %v4186
        %v4193 = vadd.f32 %v3809, %v4189
        %4194 = vst [vmem:[#allocation2] sm:$0xff] %v4192
        %4195 = vst [vmem:[#allocation2 + $0x8] sm:$0xff] %v4193
        %p4196 = scmp.eq.s32.totalorder %s36, 1
        // Predicated region
        $region153: #{tpu_custom_call.1} parent=107 // pred_check
          %p4197 = pneg %p4196
        $region154: #{tpu_custom_call.1} parent=107 // pred_check_branch
          %4199 = sbr.rel (%p4197) target = $region156
        $region155: #{tpu_custom_call.1} parent=107 // pred_region
          %v4200 = vld [vmem:[%s20] sm:$0x1]
          %v4201 = vld [vmem:[%s21] sm:$0x1]
          %4202 = vadd.xlane.f32.xlu0 %v4192
          %v4203 = vpop.xlane.xlu0 %4202
          %4204 = vadd.xlane.f32.xlu0 %v4193
          %v4205 = vpop.xlane.xlu0 %4204
          %v4206 = vmul.f32 %v4203, %v1116
          %v4207 = vmul.f32 %v4205, %v1116
          %v4208 = vsub.f32 %v4192, %v4206
          %v4209 = vsub.f32 %v4193, %v4207
          %v4210 = vmul.f32 %v4208, %v4208
          %v4211 = vmul.f32 %v4209, %v4209
          %4212 = vadd.xlane.f32.xlu0 %v4210
          %v4213 = vpop.xlane.xlu0 %4212
          %4214 = vadd.xlane.f32.xlu0 %v4211
          %v4215 = vpop.xlane.xlu0 %4214
          %v4216 = vmul.f32 %v4213, 0.007874016
          %v4217 = vmul.f32 %v4215, 0.007874016
          %v4218 = vrsqrt.pop %v4216
          %v4219 = vmul.f32 %v4216, %v4218
          %vm4220 = vcmp.eq.f32.partialorder %v4216, inf
          %v4221 = vsel %vm4220, %v4216, %v4219
          %vm4222 = vcmp.eq.f32.partialorder %v4216, 0.0
          %v4223 = vand.u32 %v4216, 2147483648
          %v4224 = vsel %vm4222, %v4223, %v4221
          %v4225 = vrsqrt.pop %v4217
          %v4226 = vmul.f32 %v4217, %v4225
          %vm4227 = vcmp.eq.f32.partialorder %v4217, inf
          %v4228 = vsel %vm4227, %v4217, %v4226
          %vm4229 = vcmp.eq.f32.partialorder %v4217, 0.0
          %v4230 = vand.u32 %v4217, 2147483648
          %v4231 = vsel %vm4229, %v4230, %v4228
          %v4233 = vlaneseq
          %v4234 = vshrl.u32 %v4233, 7
          %v4235 = vsub.s32 0, %v4234
          %v4236 = vrot.slane %v4200, %v4235
          %v4238 = vmul.f32 %v4236, %v4208
          %v4239 = vmul.f32 %v4236, %v4209
          %v4240 = vadd.f32 %v4224, 1e-06
          %v4241 = vadd.f32 %v4231, 1e-06
          %v4242 = vrcp.pop %v4240
          %v4243 = vmul.f32 %v4238, %v4242
          %v4244 = vrcp.pop %v4241
          %v4245 = vmul.f32 %v4239, %v4244
          %v4247 = vlaneseq
          %v4248 = vshrl.u32 %v4247, 7
          %v4249 = vsub.s32 0, %v4248
          %v4250 = vrot.slane %v4201, %v4249
          %v4252 = vadd.f32 %v4243, %v4250
          %v4253 = vadd.f32 %v4245, %v4250
          %4254 = vst [vmem:[#allocation16] sm:$0xff] %v4252
          %4255 = vst [vmem:[#allocation16 + $0x8] sm:$0xff] %v4253
        $region156: #{tpu_custom_call.1} parent=107 // pred_fallthru
          _
        // Predicated region
        $region157: #{tpu_custom_call.1} parent=107 // pred_check
          %p4256 = pneg %p591
        $region158: #{tpu_custom_call.1} parent=107 // pred_check_branch
          %4258 = sbr.rel (%p4256) target = $region160
        $region159: #{tpu_custom_call.1} parent=107 // pred_region
          %s4260 = ssub.s32 256, 256
          %4261 = vsyncadd [#allocation5], %s4260
          %s4262 = sshll.u32 [#allocation16], 4
          %s4263 = int_to_ptr.vmem [resolvable:$true] %s4262
          %4268 = dma.vmem_to_hbm [thread:$0]  %s4263, 256, %s22, [#allocation5], 128, 128, 8
        $region160: #{tpu_custom_call.1} parent=107 // pred_fallthru
          _
        // Predicated region
        $region161: #{tpu_custom_call.1} parent=107 // pred_check
          %p4269 = pneg %p591
        $region162: #{tpu_custom_call.1} parent=107 // pred_check_branch
          %4271 = sbr.rel (%p4269) target = $region164
        $region163: #{tpu_custom_call.1} parent=107 // pred_region
          %4272 = dma.done [#allocation5], 256
        $region164: #{tpu_custom_call.1} parent=107 // pred_fallthru
          _
      $region108: #{tpu_custom_call.1} parent=5 // pred_fallthru
        _
      %p4273 = scmp.le.s32.totalorder 2, %s31
      // Predicated region
      $region165: #{tpu_custom_call.1} parent=5 // pred_check
        %p4274 = pneg %p4273
      $region166: #{tpu_custom_call.1} parent=5 // pred_check_branch
        %4276 = sbr.rel (%p4274) target = $region168
      $region167: #{tpu_custom_call.1} parent=5 // pred_region
        %s4277 = ssub.s32 %s31, 2
      $region168: #{tpu_custom_call.1} parent=5 // pred_fallthru
        _
    $region6: #{tpu_custom_call.1} parent=1 // loop_footer
      %s35 = sadd.s32 1, %s31
    $region7: #{tpu_custom_call.1} parent=1 // loop_footer_branch
      %30 = sbr.rel target = $region3
    $region8: #{tpu_custom_call.1} parent=1 // loop_exit
      _
    %4278 = vsyncpa [#allocation4], 1
    %s4279 = scalar_lea.sflag [#allocation4], 1
    %4280 = vsyncpa %s4279, 1
    %4281 = vsyncpa [#allocation7], 1
    %4282 = vsyncpa [#allocation5], 1
    %s4283 = scalar_lea.sflag [#allocation5], 1
    %4284 = vsyncpa %s4283, 1

</llo_original>
